<compile_context>
chip_gen: v7x
topology: tpu7x:2x2x1
jax: 0.10.0
libtpu: 0.0.40
codegen_flags: <defaults>
</compile_context>

<pallas_src>
import math
import functools
import numpy as np
import jax
import jax.numpy as jnp
from jax.experimental import pallas as pl
from jax.experimental.pallas import tpu as pltpu

NUM_MOTIFS = 100
LANE = 128  # TPU lane width; feature axis is padded to a multiple of this


def motif_graph_kernel(a_ref, x_ref, e_ref, lstrict_ref, rep_ref, jmod_ref,
                       wi_ref, wh_ref, bi_ref, bh_ref, out_ref, *, gb, nodes):
    """GB graphs per grid step, all 2-D tiles (no in-kernel reshapes).

    a_ref    (M, N)       adjacency rows, M = GB*N  (row g*N+i is graph g, node i)
    x_ref    (M, Hp)      node features / GRU hidden state, lane-padded
    e_ref    (M, Hp)      first-N global edge-embedding rows per graph, padded
    lstrict_ref (N, N)    L[k',k] = [k' < k]  (strict prefix -> neighbor rank)
    rep_ref  (N, NN)      rep[k, c] = [c // N == k]  (lane replication)
    jmod_ref (1, NN)      jmod[0, c] = c % N
    wi_ref   (Hp, 3*Hp)   GRU input weights, gates (r,z,n) stacked on lanes
    wh_ref   (Hp, 3*Hp)   GRU hidden weights
    bi_ref   (1, 3*Hp)    GRU input bias
    bh_ref   (1, 3*Hp)    GRU hidden bias
    out_ref  (M, Hp)      updated node features (lane-dense store)
    """
    f32 = jnp.float32
    a = a_ref[...]                                   # (M, N)
    x = x_ref[...]                                   # (M, Hp)
    e = e_ref[...]                                   # (M, Hp)
    Hp = x.shape[1]

    # Degree; rows with exactly one neighbor are skipped (torch .squeeze() quirk).
    deg = jnp.sum(a, axis=1, keepdims=True)          # (M, 1)
    keep = (deg != 1.0).astype(f32)

    # Per-row exclusive neighbor rank (exact integers in f32 for N < 2^24),
    # then lane-replicate adjacency and rank over the c = k*N + j axis.
    rank = jnp.dot(a, lstrict_ref[...], preferred_element_type=f32)       # (M, N)
    a_rep = jnp.dot(a, rep_ref[...], preferred_element_type=f32)          # (M, NN)
    rank_rep = jnp.dot(rank, rep_ref[...], preferred_element_type=f32)    # (M, NN)

    # Selector S[(g,i), k*N+j] = adj_g[i,k] * [rank_g[i,k] == j]
    sel = a_rep * (rank_rep == jmod_ref[...]).astype(f32)                 # (M, NN)

    # Per-graph pair table + aggregation (short unrolled loop, review-sanctioned):
    #   Y_g[k*N+j, :] = x_g[k, :] * e_g[j, :]
    #   agg_g = sel_g @ Y_g        (one MXU matmul per graph)
    # x side: sublane broadcast of each row (no pk constant);
    # e side: sublane concat of N copies (no pj constant).
    aggs = []
    for g in range(gb):
        r0 = g * nodes
        x_g = x[r0:r0 + nodes, :]                    # (N, Hp)
        e_g = e[r0:r0 + nodes, :]                    # (N, Hp)
        sel_g = sel[r0:r0 + nodes, :]                # (N, NN)
        x_rep = jnp.concatenate(
            [jnp.broadcast_to(x_g[k:k + 1, :], (nodes, Hp)) for k in range(nodes)],
            axis=0)                                  # (NN, Hp): row k*N+j = x_g[k]
        e_tile = jnp.concatenate([e_g] * nodes, axis=0)   # (NN, Hp): row k*N+j = e_g[j]
        y_g = x_rep * e_tile
        aggs.append(jnp.dot(sel_g, y_g, preferred_element_type=f32))      # (N, Hp)
    agg = keep * jnp.concatenate(aggs, axis=0)       # (M, Hp); keep folded post-matmul

    # Fused GRUCell(input=agg, hidden=x): 2 matmuls, gates (r,z,n) on lanes.
    gi = jnp.dot(agg, wi_ref[...], preferred_element_type=f32) + bi_ref[...]
    gh = jnp.dot(x, wh_ref[...], preferred_element_type=f32) + bh_ref[...]
    r = jax.nn.sigmoid(gi[:, 0:Hp] + gh[:, 0:Hp])
    z = jax.nn.sigmoid(gi[:, Hp:2 * Hp] + gh[:, Hp:2 * Hp])
    n_gate = jnp.tanh(gi[:, 2 * Hp:3 * Hp] + r * gh[:, 2 * Hp:3 * Hp])
    out_ref[...] = ((1.0 - z) * n_gate + z * x).astype(out_ref.dtype)


def _pad_lanes(v, hp):
    pad = hp - v.shape[-1]
    if pad == 0:
        return v
    widths = [(0, 0)] * (v.ndim - 1) + [(0, pad)]
    return jnp.pad(v, widths)


def motif_interaction_graph_batched(node_features, adjacency, emb_table,
                                    w_ih, w_hh, b_ih, b_hh, *, graphs_per_step=8):
    """node_features (B, N, H), adjacency (B, N, N) -> (B, N, H)."""
    x = node_features.astype(jnp.float32)
    a = adjacency.astype(jnp.float32)
    B, N, H = x.shape
    NN = N * N
    assert NN <= NUM_MOTIFS * NUM_MOTIFS
    Hp = max(LANE, ((H + LANE - 1) // LANE) * LANE)
    GB = int(max(1, min(graphs_per_step, B)))
    Bp = ((B + GB - 1) // GB) * GB
    M = GB * N

    # ---- glue (plain JAX, outside the kernel): global edge-embedding rows ----
    # Sort/gather-free: exclusive cumsum gives each edge its global row-major
    # rank; a one-hot matmul against emb_table[:NN] produces the first N rows.
    a_flat = a.reshape(B, NN)
    grank = jnp.cumsum(a_flat, axis=1) - a_flat                      # exclusive, exact in f32
    sel_e = (grank[:, None, :] == jnp.arange(N, dtype=jnp.float32)[None, :, None])
    sel_e = sel_e.astype(jnp.float32) * a_flat[:, None, :]           # (B, N, NN)
    table = emb_table[:NN].astype(jnp.float32)                       # (NN, H)
    e = jnp.einsum('bnp,ph->bnh', sel_e, table)                      # (B, N, H)

    # Lane-pad features, pad batch to a multiple of GB (dummy graphs are all-zero
    # and their outputs are sliced off), then flatten to 2-D for the kernel.
    x_p = _pad_lanes(x, Hp)
    e_p = _pad_lanes(e, Hp)
    pad_b = Bp - B
    if pad_b:
        x_p = jnp.pad(x_p, ((0, pad_b), (0, 0), (0, 0)))
        e_p = jnp.pad(e_p, ((0, pad_b), (0, 0), (0, 0)))
        a = jnp.pad(a, ((0, pad_b), (0, 0), (0, 0)))
    a2 = a.reshape(Bp * N, N)
    x2 = x_p.reshape(Bp * N, Hp)
    e2 = e_p.reshape(Bp * N, Hp)

    # GRU weights, gate order (r, z, n), stacked on the OUTPUT (lane) axis and
    # zero-padded so padded hidden-state lanes stay exactly zero.
    w_ih3 = w_ih.reshape(3, H, H).astype(jnp.float32)
    w_hh3 = w_hh.reshape(3, H, H).astype(jnp.float32)
    wi = jnp.zeros((Hp, 3 * Hp), jnp.float32)
    wh = jnp.zeros((Hp, 3 * Hp), jnp.float32)
    bi = jnp.zeros((1, 3 * Hp), jnp.float32)
    bh = jnp.zeros((1, 3 * Hp), jnp.float32)
    for g in range(3):
        wi = wi.at[:H, g * Hp:g * Hp + H].set(w_ih3[g].T)
        wh = wh.at[:H, g * Hp:g * Hp + H].set(w_hh3[g].T)
        bi = bi.at[0, g * Hp:g * Hp + H].set(b_ih[g * H:(g + 1) * H].astype(jnp.float32))
        bh = bh.at[0, g * Hp:g * Hp + H].set(b_hh[g * H:(g + 1) * H].astype(jnp.float32))

    # Compile-time 0/1 selector constants (small: O(N^2) not O(N^3)).
    idx = np.arange(N)
    cflat = np.arange(NN)
    lstrict = jnp.asarray((idx[:, None] < idx[None, :]).astype(np.float32))     # (N, N)
    rep = jnp.asarray(((cflat // N)[None, :] == idx[:, None]).astype(np.float32))  # (N, NN)
    jmod = jnp.asarray((cflat % N).astype(np.float32)[None, :])                 # (1, NN)

    const2 = lambda b: (0, 0)
    grid_spec = pl.GridSpec(
        grid=(Bp // GB,),
        in_specs=[
            pl.BlockSpec((M, N), lambda b: (b, 0)),        # a2
            pl.BlockSpec((M, Hp), lambda b: (b, 0)),       # x2 (padded)
            pl.BlockSpec((M, Hp), lambda b: (b, 0)),       # e2 (padded)
            pl.BlockSpec((N, N), const2),                  # L strict
            pl.BlockSpec((N, NN), const2),                 # rep
            pl.BlockSpec((1, NN), const2),                 # jmod
            pl.BlockSpec((Hp, 3 * Hp), const2),            # wi
            pl.BlockSpec((Hp, 3 * Hp), const2),            # wh
            pl.BlockSpec((1, 3 * Hp), const2),             # bi
            pl.BlockSpec((1, 3 * Hp), const2),             # bh
        ],
        out_specs=pl.BlockSpec((M, Hp), lambda b: (b, 0)),
    )
    out2 = pl.pallas_call(
        functools.partial(motif_graph_kernel, gb=GB, nodes=N),
        out_shape=jax.ShapeDtypeStruct((Bp * N, Hp), jnp.float32),
        grid_spec=grid_spec,
        compiler_params=pltpu.CompilerParams(
            dimension_semantics=("parallel",),      # batch axis across TCs on v7x
            vmem_limit_bytes=32 * 1024 * 1024),
    )(a2, x2, e2, lstrict, rep, jmod, wi, wh, bi, bh)
    return out2.reshape(Bp, N, Hp)[:B, :, :H]


def motif_interaction_graph(node_features, adjacency, emb_table, w_ih, w_hh, b_ih, b_hh):
    """Single-graph API matching the PyTorch module's forward signature."""
    out = motif_interaction_graph_batched(node_features[None], adjacency[None],
                                          emb_table, w_ih, w_hh, b_ih, b_hh)
    return out[0]


# ------------------------- pure numpy reference -------------------------
def _sigmoid(v):
    return 1.0 / (1.0 + np.exp(-v))


def reference(x, a, table, w_ih, w_hh, b_ih, b_hh):
    N, H = x.shape
    rows, cols = np.nonzero(a)               # row-major (torch.nonzero order)
    efeat = table[rows * N + cols]           # (E, H)
    agg = np.zeros_like(x)
    for i in range(N):
        nbrs = np.nonzero(a[i])[0]
        d = len(nbrs)
        if d <= 1:
            # d == 1 skipped in the torch code (.squeeze() -> 0-dim); d == 0 sums to zero.
            continue
        nf = x[nbrs]
        ne = efeat[:d]                       # legacy bool-mask => first d global edges
        agg[i] = np.sum(nf * ne, axis=0)
    gi = agg @ w_ih.T + b_ih
    gh = x @ w_hh.T + b_hh
    i_r, i_z, i_n = np.split(gi, 3, axis=1)
    h_r, h_z, h_n = np.split(gh, 3, axis=1)
    r = _sigmoid(i_r + h_r)
    z = _sigmoid(i_z + h_z)
    n = np.tanh(i_n + r * h_n)
    return (1.0 - z) * n + z * x


if __name__ == "__main__":
    B, N, H = 16, 16, 32                     # 2 grid steps of GB=8 graphs (M=128)
    key = jax.random.PRNGKey(0)
    k1, k2, k3, k4, k5, k6, k7 = jax.random.split(key, 7)

    x = jax.random.normal(k1, (B, N, H), dtype=jnp.float32)
    a = (jax.random.uniform(k2, (B, N, N)) < 0.35).astype(jnp.float32)
    a = a.at[:, 2].set(0.0).at[:, 2, 5].set(1.0)   # row with exactly one neighbor (skip quirk)
    a = a.at[:, 3].set(0.0)                        # isolated node

    # deterministic parameter init (shapes from the module's __init__)
    emb_table = jax.random.normal(k3, (NUM_MOTIFS * NUM_MOTIFS, H), dtype=jnp.float32)
    bound = 1.0 / math.sqrt(H)
    w_ih = jax.random.uniform(k4, (3 * H, H), minval=-bound, maxval=bound, dtype=jnp.float32)
    w_hh = jax.random.uniform(k5, (3 * H, H), minval=-bound, maxval=bound, dtype=jnp.float32)
    b_ih = jax.random.uniform(k6, (3 * H,), minval=-bound, maxval=bound, dtype=jnp.float32)
    b_hh = jax.random.uniform(k7, (3 * H,), minval=-bound, maxval=bound, dtype=jnp.float32)

    out = motif_interaction_graph_batched(x, a, emb_table, w_ih, w_hh, b_ih, b_hh)
    out = jax.block_until_ready(out)
    out_np = np.asarray(out)

    for b in range(B):
        ref = reference(np.asarray(x[b]), np.asarray(a[b]), np.asarray(emb_table),
                        np.asarray(w_ih), np.asarray(w_hh),
                        np.asarray(b_ih), np.asarray(b_hh))
        err = np.max(np.abs(out_np[b] - ref))
        assert np.allclose(out_np[b], ref, rtol=1e-4, atol=1e-4), \
            f"graph {b}: max abs err = {err}"
    print("KERNEL_OK")
</pallas_src>

<mosaic_0001>
module attributes {stable_mosaic.version = 11 : i64} {
  func.func @motif_graph_kernel(%arg0: i32, %arg1: memref<128x16xf32, #tpu.memory_space<vmem>>, %arg2: memref<128x128xf32, #tpu.memory_space<vmem>>, %arg3: memref<128x128xf32, #tpu.memory_space<vmem>>, %arg4: memref<16x16xf32, #tpu.memory_space<vmem>>, %arg5: memref<16x256xf32, #tpu.memory_space<vmem>>, %arg6: memref<1x256xf32, #tpu.memory_space<vmem>>, %arg7: memref<128x384xf32, #tpu.memory_space<vmem>>, %arg8: memref<128x384xf32, #tpu.memory_space<vmem>>, %arg9: memref<1x384xf32, #tpu.memory_space<vmem>>, %arg10: memref<1x384xf32, #tpu.memory_space<vmem>>, %arg11: memref<128x128xf32, #tpu.memory_space<vmem>>) attributes {dimension_semantics = [#tpu.dimension_semantics<parallel>], iteration_bounds = array<i64: 2>, scalar_prefetch = 0 : i64, scratch_operands = 0 : i64, tpu.core_type = #tpu.core_type<tc>, window_params = [{transform_indices = @transform_0, window_bounds = array<i64: 128, 16>}, {transform_indices = @transform_1, window_bounds = array<i64: 128, 128>}, {transform_indices = @transform_2, window_bounds = array<i64: 128, 128>}, {pipeline_mode = #tpu.pipeline_mode<synchronous>, transform_indices = @transform_3, window_bounds = array<i64: 16, 16>}, {pipeline_mode = #tpu.pipeline_mode<synchronous>, transform_indices = @transform_4, window_bounds = array<i64: 16, 256>}, {pipeline_mode = #tpu.pipeline_mode<synchronous>, transform_indices = @transform_5, window_bounds = array<i64: 1, 256>}, {pipeline_mode = #tpu.pipeline_mode<synchronous>, transform_indices = @transform_6, window_bounds = array<i64: 128, 384>}, {pipeline_mode = #tpu.pipeline_mode<synchronous>, transform_indices = @transform_7, window_bounds = array<i64: 128, 384>}, {pipeline_mode = #tpu.pipeline_mode<synchronous>, transform_indices = @transform_8, window_bounds = array<i64: 1, 384>}, {pipeline_mode = #tpu.pipeline_mode<synchronous>, transform_indices = @transform_9, window_bounds = array<i64: 1, 384>}, {transform_indices = @transform_10, window_bounds = array<i64: 128, 128>}]} {
    %c0 = arith.constant 0 : index
    %c0_0 = arith.constant 0 : index
    %0 = vector.load %arg1[%c0, %c0_0] : memref<128x16xf32, #tpu.memory_space<vmem>>, vector<128x16xf32>
    %c0_1 = arith.constant 0 : index
    %c0_2 = arith.constant 0 : index
    %1 = vector.load %arg2[%c0_1, %c0_2] : memref<128x128xf32, #tpu.memory_space<vmem>>, vector<128x128xf32>
    %c0_3 = arith.constant 0 : index
    %c0_4 = arith.constant 0 : index
    %2 = vector.load %arg3[%c0_3, %c0_4] : memref<128x128xf32, #tpu.memory_space<vmem>>, vector<128x128xf32>
    %cst = arith.constant dense<0.000000e+00> : vector<128xf32>
    %3 = vector.multi_reduction <add>, %0, %cst [1] : vector<128x16xf32> to vector<128xf32>
    %4 = vector.shape_cast %3 : vector<128xf32> to vector<128x1xf32>
    %cst_5 = arith.constant 1.000000e+00 : f32
    %5 = vector.broadcast %cst_5 : f32 to vector<128x1xf32>
    %6 = arith.cmpf one, %4, %5 : vector<128x1xf32>
    %7 = arith.extui %6 : vector<128x1xi1> to vector<128x1xi32>
    %8 = arith.sitofp %7 : vector<128x1xi32> to vector<128x1xf32>
    %c0_6 = arith.constant 0 : index
    %c0_7 = arith.constant 0 : index
    %9 = vector.load %arg4[%c0_6, %c0_7] : memref<16x16xf32, #tpu.memory_space<vmem>>, vector<16x16xf32>
    %cst_8 = arith.constant dense<0.000000e+00> : vector<128x16xf32>
    %10 = tpu.matmul %0, %9, %cst_8 {dimension_numbers = #tpu.dot_dimension_numbers<[1], [0], [0], [1], [0, 0, 1, 1], [], []>} : vector<128x16xf32>, vector<16x16xf32>, vector<128x16xf32> -> vector<128x16xf32>
    %c0_9 = arith.constant 0 : index
    %c0_10 = arith.constant 0 : index
    %11 = vector.load %arg5[%c0_9, %c0_10] : memref<16x256xf32, #tpu.memory_space<vmem>>, vector<16x256xf32>
    %cst_11 = arith.constant dense<0.000000e+00> : vector<128x256xf32>
    %12 = tpu.matmul %0, %11, %cst_11 {dimension_numbers = #tpu.dot_dimension_numbers<[1], [0], [0], [1], [0, 0, 1, 1], [], []>} : vector<128x16xf32>, vector<16x256xf32>, vector<128x256xf32> -> vector<128x256xf32>
    %c0_12 = arith.constant 0 : index
    %c0_13 = arith.constant 0 : index
    %13 = vector.load %arg5[%c0_12, %c0_13] : memref<16x256xf32, #tpu.memory_space<vmem>>, vector<16x256xf32>
    %cst_14 = arith.constant dense<0.000000e+00> : vector<128x256xf32>
    %14 = tpu.matmul %10, %13, %cst_14 {dimension_numbers = #tpu.dot_dimension_numbers<[1], [0], [0], [1], [0, 0, 1, 1], [], []>} : vector<128x16xf32>, vector<16x256xf32>, vector<128x256xf32> -> vector<128x256xf32>
    %c0_15 = arith.constant 0 : index
    %c0_16 = arith.constant 0 : index
    %15 = vector.load %arg6[%c0_15, %c0_16] : memref<1x256xf32, #tpu.memory_space<vmem>>, vector<1x256xf32>
    %16 = vector.broadcast %15 : vector<1x256xf32> to vector<128x256xf32>
    %17 = arith.cmpf oeq, %14, %16 : vector<128x256xf32>
    %18 = arith.extui %17 : vector<128x256xi1> to vector<128x256xi32>
    %19 = arith.sitofp %18 : vector<128x256xi32> to vector<128x256xf32>
    %20 = arith.mulf %12, %19 : vector<128x256xf32>
    %21 = vector.extract_strided_slice %1 {offsets = [0, 0], sizes = [16, 128], strides = [1, 1]} : vector<128x128xf32> to vector<16x128xf32>
    %22 = vector.extract_strided_slice %2 {offsets = [0, 0], sizes = [16, 128], strides = [1, 1]} : vector<128x128xf32> to vector<16x128xf32>
    %23 = vector.extract_strided_slice %20 {offsets = [0, 0], sizes = [16, 256], strides = [1, 1]} : vector<128x256xf32> to vector<16x256xf32>
    %24 = vector.extract_strided_slice %21 {offsets = [0, 0], sizes = [1, 128], strides = [1, 1]} : vector<16x128xf32> to vector<1x128xf32>
    %25 = vector.shape_cast %24 : vector<1x128xf32> to vector<1x128xf32>
    %26 = vector.broadcast %25 : vector<1x128xf32> to vector<16x128xf32>
    %27 = vector.extract_strided_slice %21 {offsets = [1, 0], sizes = [1, 128], strides = [1, 1]} : vector<16x128xf32> to vector<1x128xf32>
    %28 = vector.shape_cast %27 : vector<1x128xf32> to vector<1x128xf32>
    %29 = vector.broadcast %28 : vector<1x128xf32> to vector<16x128xf32>
    %30 = vector.extract_strided_slice %21 {offsets = [2, 0], sizes = [1, 128], strides = [1, 1]} : vector<16x128xf32> to vector<1x128xf32>
    %31 = vector.shape_cast %30 : vector<1x128xf32> to vector<1x128xf32>
    %32 = vector.broadcast %31 : vector<1x128xf32> to vector<16x128xf32>
    %33 = vector.extract_strided_slice %21 {offsets = [3, 0], sizes = [1, 128], strides = [1, 1]} : vector<16x128xf32> to vector<1x128xf32>
    %34 = vector.shape_cast %33 : vector<1x128xf32> to vector<1x128xf32>
    %35 = vector.broadcast %34 : vector<1x128xf32> to vector<16x128xf32>
    %36 = vector.extract_strided_slice %21 {offsets = [4, 0], sizes = [1, 128], strides = [1, 1]} : vector<16x128xf32> to vector<1x128xf32>
    %37 = vector.shape_cast %36 : vector<1x128xf32> to vector<1x128xf32>
    %38 = vector.broadcast %37 : vector<1x128xf32> to vector<16x128xf32>
    %39 = vector.extract_strided_slice %21 {offsets = [5, 0], sizes = [1, 128], strides = [1, 1]} : vector<16x128xf32> to vector<1x128xf32>
    %40 = vector.shape_cast %39 : vector<1x128xf32> to vector<1x128xf32>
    %41 = vector.broadcast %40 : vector<1x128xf32> to vector<16x128xf32>
    %42 = vector.extract_strided_slice %21 {offsets = [6, 0], sizes = [1, 128], strides = [1, 1]} : vector<16x128xf32> to vector<1x128xf32>
    %43 = vector.shape_cast %42 : vector<1x128xf32> to vector<1x128xf32>
    %44 = vector.broadcast %43 : vector<1x128xf32> to vector<16x128xf32>
    %45 = vector.extract_strided_slice %21 {offsets = [7, 0], sizes = [1, 128], strides = [1, 1]} : vector<16x128xf32> to vector<1x128xf32>
    %46 = vector.shape_cast %45 : vector<1x128xf32> to vector<1x128xf32>
    %47 = vector.broadcast %46 : vector<1x128xf32> to vector<16x128xf32>
    %48 = vector.extract_strided_slice %21 {offsets = [8, 0], sizes = [1, 128], strides = [1, 1]} : vector<16x128xf32> to vector<1x128xf32>
    %49 = vector.shape_cast %48 : vector<1x128xf32> to vector<1x128xf32>
    %50 = vector.broadcast %49 : vector<1x128xf32> to vector<16x128xf32>
    %51 = vector.extract_strided_slice %21 {offsets = [9, 0], sizes = [1, 128], strides = [1, 1]} : vector<16x128xf32> to vector<1x128xf32>
    %52 = vector.shape_cast %51 : vector<1x128xf32> to vector<1x128xf32>
    %53 = vector.broadcast %52 : vector<1x128xf32> to vector<16x128xf32>
    %54 = vector.extract_strided_slice %21 {offsets = [10, 0], sizes = [1, 128], strides = [1, 1]} : vector<16x128xf32> to vector<1x128xf32>
    %55 = vector.shape_cast %54 : vector<1x128xf32> to vector<1x128xf32>
    %56 = vector.broadcast %55 : vector<1x128xf32> to vector<16x128xf32>
    %57 = vector.extract_strided_slice %21 {offsets = [11, 0], sizes = [1, 128], strides = [1, 1]} : vector<16x128xf32> to vector<1x128xf32>
    %58 = vector.shape_cast %57 : vector<1x128xf32> to vector<1x128xf32>
    %59 = vector.broadcast %58 : vector<1x128xf32> to vector<16x128xf32>
    %60 = vector.extract_strided_slice %21 {offsets = [12, 0], sizes = [1, 128], strides = [1, 1]} : vector<16x128xf32> to vector<1x128xf32>
    %61 = vector.shape_cast %60 : vector<1x128xf32> to vector<1x128xf32>
    %62 = vector.broadcast %61 : vector<1x128xf32> to vector<16x128xf32>
    %63 = vector.extract_strided_slice %21 {offsets = [13, 0], sizes = [1, 128], strides = [1, 1]} : vector<16x128xf32> to vector<1x128xf32>
    %64 = vector.shape_cast %63 : vector<1x128xf32> to vector<1x128xf32>
    %65 = vector.broadcast %64 : vector<1x128xf32> to vector<16x128xf32>
    %66 = vector.extract_strided_slice %21 {offsets = [14, 0], sizes = [1, 128], strides = [1, 1]} : vector<16x128xf32> to vector<1x128xf32>
    %67 = vector.shape_cast %66 : vector<1x128xf32> to vector<1x128xf32>
    %68 = vector.broadcast %67 : vector<1x128xf32> to vector<16x128xf32>
    %69 = vector.extract_strided_slice %21 {offsets = [15, 0], sizes = [1, 128], strides = [1, 1]} : vector<16x128xf32> to vector<1x128xf32>
    %70 = vector.shape_cast %69 : vector<1x128xf32> to vector<1x128xf32>
    %71 = vector.broadcast %70 : vector<1x128xf32> to vector<16x128xf32>
    %72 = tpu.concatenate %26, %29, %32, %35, %38, %41, %44, %47, %50, %53, %56, %59, %62, %65, %68, %71 in 0 : vector<16x128xf32>, vector<16x128xf32>, vector<16x128xf32>, vector<16x128xf32>, vector<16x128xf32>, vector<16x128xf32>, vector<16x128xf32>, vector<16x128xf32>, vector<16x128xf32>, vector<16x128xf32>, vector<16x128xf32>, vector<16x128xf32>, vector<16x128xf32>, vector<16x128xf32>, vector<16x128xf32>, vector<16x128xf32> -> vector<256x128xf32>
    %73 = tpu.concatenate %22, %22, %22, %22, %22, %22, %22, %22, %22, %22, %22, %22, %22, %22, %22, %22 in 0 : vector<16x128xf32>, vector<16x128xf32>, vector<16x128xf32>, vector<16x128xf32>, vector<16x128xf32>, vector<16x128xf32>, vector<16x128xf32>, vector<16x128xf32>, vector<16x128xf32>, vector<16x128xf32>, vector<16x128xf32>, vector<16x128xf32>, vector<16x128xf32>, vector<16x128xf32>, vector<16x128xf32>, vector<16x128xf32> -> vector<256x128xf32>
    %74 = arith.mulf %72, %73 : vector<256x128xf32>
    %cst_17 = arith.constant dense<0.000000e+00> : vector<16x128xf32>
    %75 = tpu.matmul %23, %74, %cst_17 {dimension_numbers = #tpu.dot_dimension_numbers<[1], [0], [0], [1], [0, 0, 1, 1], [], []>} : vector<16x256xf32>, vector<256x128xf32>, vector<16x128xf32> -> vector<16x128xf32>
    %76 = vector.extract_strided_slice %1 {offsets = [16, 0], sizes = [16, 128], strides = [1, 1]} : vector<128x128xf32> to vector<16x128xf32>
    %77 = vector.extract_strided_slice %2 {offsets = [16, 0], sizes = [16, 128], strides = [1, 1]} : vector<128x128xf32> to vector<16x128xf32>
    %78 = vector.extract_strided_slice %20 {offsets = [16, 0], sizes = [16, 256], strides = [1, 1]} : vector<128x256xf32> to vector<16x256xf32>
    %79 = vector.extract_strided_slice %76 {offsets = [0, 0], sizes = [1, 128], strides = [1, 1]} : vector<16x128xf32> to vector<1x128xf32>
    %80 = vector.shape_cast %79 : vector<1x128xf32> to vector<1x128xf32>
    %81 = vector.broadcast %80 : vector<1x128xf32> to vector<16x128xf32>
    %82 = vector.extract_strided_slice %76 {offsets = [1, 0], sizes = [1, 128], strides = [1, 1]} : vector<16x128xf32> to vector<1x128xf32>
    %83 = vector.shape_cast %82 : vector<1x128xf32> to vector<1x128xf32>
    %84 = vector.broadcast %83 : vector<1x128xf32> to vector<16x128xf32>
    %85 = vector.extract_strided_slice %76 {offsets = [2, 0], sizes = [1, 128], strides = [1, 1]} : vector<16x128xf32> to vector<1x128xf32>
    %86 = vector.shape_cast %85 : vector<1x128xf32> to vector<1x128xf32>
    %87 = vector.broadcast %86 : vector<1x128xf32> to vector<16x128xf32>
    %88 = vector.extract_strided_slice %76 {offsets = [3, 0], sizes = [1, 128], strides = [1, 1]} : vector<16x128xf32> to vector<1x128xf32>
    %89 = vector.shape_cast %88 : vector<1x128xf32> to vector<1x128xf32>
    %90 = vector.broadcast %89 : vector<1x128xf32> to vector<16x128xf32>
    %91 = vector.extract_strided_slice %76 {offsets = [4, 0], sizes = [1, 128], strides = [1, 1]} : vector<16x128xf32> to vector<1x128xf32>
    %92 = vector.shape_cast %91 : vector<1x128xf32> to vector<1x128xf32>
    %93 = vector.broadcast %92 : vector<1x128xf32> to vector<16x128xf32>
    %94 = vector.extract_strided_slice %76 {offsets = [5, 0], sizes = [1, 128], strides = [1, 1]} : vector<16x128xf32> to vector<1x128xf32>
    %95 = vector.shape_cast %94 : vector<1x128xf32> to vector<1x128xf32>
    %96 = vector.broadcast %95 : vector<1x128xf32> to vector<16x128xf32>
    %97 = vector.extract_strided_slice %76 {offsets = [6, 0], sizes = [1, 128], strides = [1, 1]} : vector<16x128xf32> to vector<1x128xf32>
    %98 = vector.shape_cast %97 : vector<1x128xf32> to vector<1x128xf32>
    %99 = vector.broadcast %98 : vector<1x128xf32> to vector<16x128xf32>
    %100 = vector.extract_strided_slice %76 {offsets = [7, 0], sizes = [1, 128], strides = [1, 1]} : vector<16x128xf32> to vector<1x128xf32>
    %101 = vector.shape_cast %100 : vector<1x128xf32> to vector<1x128xf32>
    %102 = vector.broadcast %101 : vector<1x128xf32> to vector<16x128xf32>
    %103 = vector.extract_strided_slice %76 {offsets = [8, 0], sizes = [1, 128], strides = [1, 1]} : vector<16x128xf32> to vector<1x128xf32>
    %104 = vector.shape_cast %103 : vector<1x128xf32> to vector<1x128xf32>
    %105 = vector.broadcast %104 : vector<1x128xf32> to vector<16x128xf32>
    %106 = vector.extract_strided_slice %76 {offsets = [9, 0], sizes = [1, 128], strides = [1, 1]} : vector<16x128xf32> to vector<1x128xf32>
    %107 = vector.shape_cast %106 : vector<1x128xf32> to vector<1x128xf32>
    %108 = vector.broadcast %107 : vector<1x128xf32> to vector<16x128xf32>
    %109 = vector.extract_strided_slice %76 {offsets = [10, 0], sizes = [1, 128], strides = [1, 1]} : vector<16x128xf32> to vector<1x128xf32>
    %110 = vector.shape_cast %109 : vector<1x128xf32> to vector<1x128xf32>
    %111 = vector.broadcast %110 : vector<1x128xf32> to vector<16x128xf32>
    %112 = vector.extract_strided_slice %76 {offsets = [11, 0], sizes = [1, 128], strides = [1, 1]} : vector<16x128xf32> to vector<1x128xf32>
    %113 = vector.shape_cast %112 : vector<1x128xf32> to vector<1x128xf32>
    %114 = vector.broadcast %113 : vector<1x128xf32> to vector<16x128xf32>
    %115 = vector.extract_strided_slice %76 {offsets = [12, 0], sizes = [1, 128], strides = [1, 1]} : vector<16x128xf32> to vector<1x128xf32>
    %116 = vector.shape_cast %115 : vector<1x128xf32> to vector<1x128xf32>
    %117 = vector.broadcast %116 : vector<1x128xf32> to vector<16x128xf32>
    %118 = vector.extract_strided_slice %76 {offsets = [13, 0], sizes = [1, 128], strides = [1, 1]} : vector<16x128xf32> to vector<1x128xf32>
    %119 = vector.shape_cast %118 : vector<1x128xf32> to vector<1x128xf32>
    %120 = vector.broadcast %119 : vector<1x128xf32> to vector<16x128xf32>
    %121 = vector.extract_strided_slice %76 {offsets = [14, 0], sizes = [1, 128], strides = [1, 1]} : vector<16x128xf32> to vector<1x128xf32>
    %122 = vector.shape_cast %121 : vector<1x128xf32> to vector<1x128xf32>
    %123 = vector.broadcast %122 : vector<1x128xf32> to vector<16x128xf32>
    %124 = vector.extract_strided_slice %76 {offsets = [15, 0], sizes = [1, 128], strides = [1, 1]} : vector<16x128xf32> to vector<1x128xf32>
    %125 = vector.shape_cast %124 : vector<1x128xf32> to vector<1x128xf32>
    %126 = vector.broadcast %125 : vector<1x128xf32> to vector<16x128xf32>
    %127 = tpu.concatenate %81, %84, %87, %90, %93, %96, %99, %102, %105, %108, %111, %114, %117, %120, %123, %126 in 0 : vector<16x128xf32>, vector<16x128xf32>, vector<16x128xf32>, vector<16x128xf32>, vector<16x128xf32>, vector<16x128xf32>, vector<16x128xf32>, vector<16x128xf32>, vector<16x128xf32>, vector<16x128xf32>, vector<16x128xf32>, vector<16x128xf32>, vector<16x128xf32>, vector<16x128xf32>, vector<16x128xf32>, vector<16x128xf32> -> vector<256x128xf32>
    %128 = tpu.concatenate %77, %77, %77, %77, %77, %77, %77, %77, %77, %77, %77, %77, %77, %77, %77, %77 in 0 : vector<16x128xf32>, vector<16x128xf32>, vector<16x128xf32>, vector<16x128xf32>, vector<16x128xf32>, vector<16x128xf32>, vector<16x128xf32>, vector<16x128xf32>, vector<16x128xf32>, vector<16x128xf32>, vector<16x128xf32>, vector<16x128xf32>, vector<16x128xf32>, vector<16x128xf32>, vector<16x128xf32>, vector<16x128xf32> -> vector<256x128xf32>
    %129 = arith.mulf %127, %128 : vector<256x128xf32>
    %cst_18 = arith.constant dense<0.000000e+00> : vector<16x128xf32>
    %130 = tpu.matmul %78, %129, %cst_18 {dimension_numbers = #tpu.dot_dimension_numbers<[1], [0], [0], [1], [0, 0, 1, 1], [], []>} : vector<16x256xf32>, vector<256x128xf32>, vector<16x128xf32> -> vector<16x128xf32>
    %131 = vector.extract_strided_slice %1 {offsets = [32, 0], sizes = [16, 128], strides = [1, 1]} : vector<128x128xf32> to vector<16x128xf32>
    %132 = vector.extract_strided_slice %2 {offsets = [32, 0], sizes = [16, 128], strides = [1, 1]} : vector<128x128xf32> to vector<16x128xf32>
    %133 = vector.extract_strided_slice %20 {offsets = [32, 0], sizes = [16, 256], strides = [1, 1]} : vector<128x256xf32> to vector<16x256xf32>
    %134 = vector.extract_strided_slice %131 {offsets = [0, 0], sizes = [1, 128], strides = [1, 1]} : vector<16x128xf32> to vector<1x128xf32>
    %135 = vector.shape_cast %134 : vector<1x128xf32> to vector<1x128xf32>
    %136 = vector.broadcast %135 : vector<1x128xf32> to vector<16x128xf32>
    %137 = vector.extract_strided_slice %131 {offsets = [1, 0], sizes = [1, 128], strides = [1, 1]} : vector<16x128xf32> to vector<1x128xf32>
    %138 = vector.shape_cast %137 : vector<1x128xf32> to vector<1x128xf32>
    %139 = vector.broadcast %138 : vector<1x128xf32> to vector<16x128xf32>
    %140 = vector.extract_strided_slice %131 {offsets = [2, 0], sizes = [1, 128], strides = [1, 1]} : vector<16x128xf32> to vector<1x128xf32>
    %141 = vector.shape_cast %140 : vector<1x128xf32> to vector<1x128xf32>
    %142 = vector.broadcast %141 : vector<1x128xf32> to vector<16x128xf32>
    %143 = vector.extract_strided_slice %131 {offsets = [3, 0], sizes = [1, 128], strides = [1, 1]} : vector<16x128xf32> to vector<1x128xf32>
    %144 = vector.shape_cast %143 : vector<1x128xf32> to vector<1x128xf32>
    %145 = vector.broadcast %144 : vector<1x128xf32> to vector<16x128xf32>
    %146 = vector.extract_strided_slice %131 {offsets = [4, 0], sizes = [1, 128], strides = [1, 1]} : vector<16x128xf32> to vector<1x128xf32>
    %147 = vector.shape_cast %146 : vector<1x128xf32> to vector<1x128xf32>
    %148 = vector.broadcast %147 : vector<1x128xf32> to vector<16x128xf32>
    %149 = vector.extract_strided_slice %131 {offsets = [5, 0], sizes = [1, 128], strides = [1, 1]} : vector<16x128xf32> to vector<1x128xf32>
    %150 = vector.shape_cast %149 : vector<1x128xf32> to vector<1x128xf32>
    %151 = vector.broadcast %150 : vector<1x128xf32> to vector<16x128xf32>
    %152 = vector.extract_strided_slice %131 {offsets = [6, 0], sizes = [1, 128], strides = [1, 1]} : vector<16x128xf32> to vector<1x128xf32>
    %153 = vector.shape_cast %152 : vector<1x128xf32> to vector<1x128xf32>
    %154 = vector.broadcast %153 : vector<1x128xf32> to vector<16x128xf32>
    %155 = vector.extract_strided_slice %131 {offsets = [7, 0], sizes = [1, 128], strides = [1, 1]} : vector<16x128xf32> to vector<1x128xf32>
    %156 = vector.shape_cast %155 : vector<1x128xf32> to vector<1x128xf32>
    %157 = vector.broadcast %156 : vector<1x128xf32> to vector<16x128xf32>
    %158 = vector.extract_strided_slice %131 {offsets = [8, 0], sizes = [1, 128], strides = [1, 1]} : vector<16x128xf32> to vector<1x128xf32>
    %159 = vector.shape_cast %158 : vector<1x128xf32> to vector<1x128xf32>
    %160 = vector.broadcast %159 : vector<1x128xf32> to vector<16x128xf32>
    %161 = vector.extract_strided_slice %131 {offsets = [9, 0], sizes = [1, 128], strides = [1, 1]} : vector<16x128xf32> to vector<1x128xf32>
    %162 = vector.shape_cast %161 : vector<1x128xf32> to vector<1x128xf32>
    %163 = vector.broadcast %162 : vector<1x128xf32> to vector<16x128xf32>
    %164 = vector.extract_strided_slice %131 {offsets = [10, 0], sizes = [1, 128], strides = [1, 1]} : vector<16x128xf32> to vector<1x128xf32>
    %165 = vector.shape_cast %164 : vector<1x128xf32> to vector<1x128xf32>
    %166 = vector.broadcast %165 : vector<1x128xf32> to vector<16x128xf32>
    %167 = vector.extract_strided_slice %131 {offsets = [11, 0], sizes = [1, 128], strides = [1, 1]} : vector<16x128xf32> to vector<1x128xf32>
    %168 = vector.shape_cast %167 : vector<1x128xf32> to vector<1x128xf32>
    %169 = vector.broadcast %168 : vector<1x128xf32> to vector<16x128xf32>
    %170 = vector.extract_strided_slice %131 {offsets = [12, 0], sizes = [1, 128], strides = [1, 1]} : vector<16x128xf32> to vector<1x128xf32>
    %171 = vector.shape_cast %170 : vector<1x128xf32> to vector<1x128xf32>
    %172 = vector.broadcast %171 : vector<1x128xf32> to vector<16x128xf32>
    %173 = vector.extract_strided_slice %131 {offsets = [13, 0], sizes = [1, 128], strides = [1, 1]} : vector<16x128xf32> to vector<1x128xf32>
    %174 = vector.shape_cast %173 : vector<1x128xf32> to vector<1x128xf32>
    %175 = vector.broadcast %174 : vector<1x128xf32> to vector<16x128xf32>
    %176 = vector.extract_strided_slice %131 {offsets = [14, 0], sizes = [1, 128], strides = [1, 1]} : vector<16x128xf32> to vector<1x128xf32>
    %177 = vector.shape_cast %176 : vector<1x128xf32> to vector<1x128xf32>
    %178 = vector.broadcast %177 : vector<1x128xf32> to vector<16x128xf32>
    %179 = vector.extract_strided_slice %131 {offsets = [15, 0], sizes = [1, 128], strides = [1, 1]} : vector<16x128xf32> to vector<1x128xf32>
    %180 = vector.shape_cast %179 : vector<1x128xf32> to vector<1x128xf32>
    %181 = vector.broadcast %180 : vector<1x128xf32> to vector<16x128xf32>
    %182 = tpu.concatenate %136, %139, %142, %145, %148, %151, %154, %157, %160, %163, %166, %169, %172, %175, %178, %181 in 0 : vector<16x128xf32>, vector<16x128xf32>, vector<16x128xf32>, vector<16x128xf32>, vector<16x128xf32>, vector<16x128xf32>, vector<16x128xf32>, vector<16x128xf32>, vector<16x128xf32>, vector<16x128xf32>, vector<16x128xf32>, vector<16x128xf32>, vector<16x128xf32>, vector<16x128xf32>, vector<16x128xf32>, vector<16x128xf32> -> vector<256x128xf32>
    %183 = tpu.concatenate %132, %132, %132, %132, %132, %132, %132, %132, %132, %132, %132, %132, %132, %132, %132, %132 in 0 : vector<16x128xf32>, vector<16x128xf32>, vector<16x128xf32>, vector<16x128xf32>, vector<16x128xf32>, vector<16x128xf32>, vector<16x128xf32>, vector<16x128xf32>, vector<16x128xf32>, vector<16x128xf32>, vector<16x128xf32>, vector<16x128xf32>, vector<16x128xf32>, vector<16x128xf32>, vector<16x128xf32>, vector<16x128xf32> -> vector<256x128xf32>
    %184 = arith.mulf %182, %183 : vector<256x128xf32>
    %cst_19 = arith.constant dense<0.000000e+00> : vector<16x128xf32>
    %185 = tpu.matmul %133, %184, %cst_19 {dimension_numbers = #tpu.dot_dimension_numbers<[1], [0], [0], [1], [0, 0, 1, 1], [], []>} : vector<16x256xf32>, vector<256x128xf32>, vector<16x128xf32> -> vector<16x128xf32>
    %186 = vector.extract_strided_slice %1 {offsets = [48, 0], sizes = [16, 128], strides = [1, 1]} : vector<128x128xf32> to vector<16x128xf32>
    %187 = vector.extract_strided_slice %2 {offsets = [48, 0], sizes = [16, 128], strides = [1, 1]} : vector<128x128xf32> to vector<16x128xf32>
    %188 = vector.extract_strided_slice %20 {offsets = [48, 0], sizes = [16, 256], strides = [1, 1]} : vector<128x256xf32> to vector<16x256xf32>
    %189 = vector.extract_strided_slice %186 {offsets = [0, 0], sizes = [1, 128], strides = [1, 1]} : vector<16x128xf32> to vector<1x128xf32>
    %190 = vector.shape_cast %189 : vector<1x128xf32> to vector<1x128xf32>
    %191 = vector.broadcast %190 : vector<1x128xf32> to vector<16x128xf32>
    %192 = vector.extract_strided_slice %186 {offsets = [1, 0], sizes = [1, 128], strides = [1, 1]} : vector<16x128xf32> to vector<1x128xf32>
    %193 = vector.shape_cast %192 : vector<1x128xf32> to vector<1x128xf32>
    %194 = vector.broadcast %193 : vector<1x128xf32> to vector<16x128xf32>
    %195 = vector.extract_strided_slice %186 {offsets = [2, 0], sizes = [1, 128], strides = [1, 1]} : vector<16x128xf32> to vector<1x128xf32>
    %196 = vector.shape_cast %195 : vector<1x128xf32> to vector<1x128xf32>
    %197 = vector.broadcast %196 : vector<1x128xf32> to vector<16x128xf32>
    %198 = vector.extract_strided_slice %186 {offsets = [3, 0], sizes = [1, 128], strides = [1, 1]} : vector<16x128xf32> to vector<1x128xf32>
    %199 = vector.shape_cast %198 : vector<1x128xf32> to vector<1x128xf32>
    %200 = vector.broadcast %199 : vector<1x128xf32> to vector<16x128xf32>
    %201 = vector.extract_strided_slice %186 {offsets = [4, 0], sizes = [1, 128], strides = [1, 1]} : vector<16x128xf32> to vector<1x128xf32>
    %202 = vector.shape_cast %201 : vector<1x128xf32> to vector<1x128xf32>
    %203 = vector.broadcast %202 : vector<1x128xf32> to vector<16x128xf32>
    %204 = vector.extract_strided_slice %186 {offsets = [5, 0], sizes = [1, 128], strides = [1, 1]} : vector<16x128xf32> to vector<1x128xf32>
    %205 = vector.shape_cast %204 : vector<1x128xf32> to vector<1x128xf32>
    %206 = vector.broadcast %205 : vector<1x128xf32> to vector<16x128xf32>
    %207 = vector.extract_strided_slice %186 {offsets = [6, 0], sizes = [1, 128], strides = [1, 1]} : vector<16x128xf32> to vector<1x128xf32>
    %208 = vector.shape_cast %207 : vector<1x128xf32> to vector<1x128xf32>
    %209 = vector.broadcast %208 : vector<1x128xf32> to vector<16x128xf32>
    %210 = vector.extract_strided_slice %186 {offsets = [7, 0], sizes = [1, 128], strides = [1, 1]} : vector<16x128xf32> to vector<1x128xf32>
    %211 = vector.shape_cast %210 : vector<1x128xf32> to vector<1x128xf32>
    %212 = vector.broadcast %211 : vector<1x128xf32> to vector<16x128xf32>
    %213 = vector.extract_strided_slice %186 {offsets = [8, 0], sizes = [1, 128], strides = [1, 1]} : vector<16x128xf32> to vector<1x128xf32>
    %214 = vector.shape_cast %213 : vector<1x128xf32> to vector<1x128xf32>
    %215 = vector.broadcast %214 : vector<1x128xf32> to vector<16x128xf32>
    %216 = vector.extract_strided_slice %186 {offsets = [9, 0], sizes = [1, 128], strides = [1, 1]} : vector<16x128xf32> to vector<1x128xf32>
    %217 = vector.shape_cast %216 : vector<1x128xf32> to vector<1x128xf32>
    %218 = vector.broadcast %217 : vector<1x128xf32> to vector<16x128xf32>
    %219 = vector.extract_strided_slice %186 {offsets = [10, 0], sizes = [1, 128], strides = [1, 1]} : vector<16x128xf32> to vector<1x128xf32>
    %220 = vector.shape_cast %219 : vector<1x128xf32> to vector<1x128xf32>
    %221 = vector.broadcast %220 : vector<1x128xf32> to vector<16x128xf32>
    %222 = vector.extract_strided_slice %186 {offsets = [11, 0], sizes = [1, 128], strides = [1, 1]} : vector<16x128xf32> to vector<1x128xf32>
    %223 = vector.shape_cast %222 : vector<1x128xf32> to vector<1x128xf32>
    %224 = vector.broadcast %223 : vector<1x128xf32> to vector<16x128xf32>
    %225 = vector.extract_strided_slice %186 {offsets = [12, 0], sizes = [1, 128], strides = [1, 1]} : vector<16x128xf32> to vector<1x128xf32>
    %226 = vector.shape_cast %225 : vector<1x128xf32> to vector<1x128xf32>
    %227 = vector.broadcast %226 : vector<1x128xf32> to vector<16x128xf32>
    %228 = vector.extract_strided_slice %186 {offsets = [13, 0], sizes = [1, 128], strides = [1, 1]} : vector<16x128xf32> to vector<1x128xf32>
    %229 = vector.shape_cast %228 : vector<1x128xf32> to vector<1x128xf32>
    %230 = vector.broadcast %229 : vector<1x128xf32> to vector<16x128xf32>
    %231 = vector.extract_strided_slice %186 {offsets = [14, 0], sizes = [1, 128], strides = [1, 1]} : vector<16x128xf32> to vector<1x128xf32>
    %232 = vector.shape_cast %231 : vector<1x128xf32> to vector<1x128xf32>
    %233 = vector.broadcast %232 : vector<1x128xf32> to vector<16x128xf32>
    %234 = vector.extract_strided_slice %186 {offsets = [15, 0], sizes = [1, 128], strides = [1, 1]} : vector<16x128xf32> to vector<1x128xf32>
    %235 = vector.shape_cast %234 : vector<1x128xf32> to vector<1x128xf32>
    %236 = vector.broadcast %235 : vector<1x128xf32> to vector<16x128xf32>
    %237 = tpu.concatenate %191, %194, %197, %200, %203, %206, %209, %212, %215, %218, %221, %224, %227, %230, %233, %236 in 0 : vector<16x128xf32>, vector<16x128xf32>, vector<16x128xf32>, vector<16x128xf32>, vector<16x128xf32>, vector<16x128xf32>, vector<16x128xf32>, vector<16x128xf32>, vector<16x128xf32>, vector<16x128xf32>, vector<16x128xf32>, vector<16x128xf32>, vector<16x128xf32>, vector<16x128xf32>, vector<16x128xf32>, vector<16x128xf32> -> vector<256x128xf32>
    %238 = tpu.concatenate %187, %187, %187, %187, %187, %187, %187, %187, %187, %187, %187, %187, %187, %187, %187, %187 in 0 : vector<16x128xf32>, vector<16x128xf32>, vector<16x128xf32>, vector<16x128xf32>, vector<16x128xf32>, vector<16x128xf32>, vector<16x128xf32>, vector<16x128xf32>, vector<16x128xf32>, vector<16x128xf32>, vector<16x128xf32>, vector<16x128xf32>, vector<16x128xf32>, vector<16x128xf32>, vector<16x128xf32>, vector<16x128xf32> -> vector<256x128xf32>
    %239 = arith.mulf %237, %238 : vector<256x128xf32>
    %cst_20 = arith.constant dense<0.000000e+00> : vector<16x128xf32>
    %240 = tpu.matmul %188, %239, %cst_20 {dimension_numbers = #tpu.dot_dimension_numbers<[1], [0], [0], [1], [0, 0, 1, 1], [], []>} : vector<16x256xf32>, vector<256x128xf32>, vector<16x128xf32> -> vector<16x128xf32>
    %241 = vector.extract_strided_slice %1 {offsets = [64, 0], sizes = [16, 128], strides = [1, 1]} : vector<128x128xf32> to vector<16x128xf32>
    %242 = vector.extract_strided_slice %2 {offsets = [64, 0], sizes = [16, 128], strides = [1, 1]} : vector<128x128xf32> to vector<16x128xf32>
    %243 = vector.extract_strided_slice %20 {offsets = [64, 0], sizes = [16, 256], strides = [1, 1]} : vector<128x256xf32> to vector<16x256xf32>
    %244 = vector.extract_strided_slice %241 {offsets = [0, 0], sizes = [1, 128], strides = [1, 1]} : vector<16x128xf32> to vector<1x128xf32>
    %245 = vector.shape_cast %244 : vector<1x128xf32> to vector<1x128xf32>
    %246 = vector.broadcast %245 : vector<1x128xf32> to vector<16x128xf32>
    %247 = vector.extract_strided_slice %241 {offsets = [1, 0], sizes = [1, 128], strides = [1, 1]} : vector<16x128xf32> to vector<1x128xf32>
    %248 = vector.shape_cast %247 : vector<1x128xf32> to vector<1x128xf32>
    %249 = vector.broadcast %248 : vector<1x128xf32> to vector<16x128xf32>
    %250 = vector.extract_strided_slice %241 {offsets = [2, 0], sizes = [1, 128], strides = [1, 1]} : vector<16x128xf32> to vector<1x128xf32>
    %251 = vector.shape_cast %250 : vector<1x128xf32> to vector<1x128xf32>
    %252 = vector.broadcast %251 : vector<1x128xf32> to vector<16x128xf32>
    %253 = vector.extract_strided_slice %241 {offsets = [3, 0], sizes = [1, 128], strides = [1, 1]} : vector<16x128xf32> to vector<1x128xf32>
    %254 = vector.shape_cast %253 : vector<1x128xf32> to vector<1x128xf32>
    %255 = vector.broadcast %254 : vector<1x128xf32> to vector<16x128xf32>
    %256 = vector.extract_strided_slice %241 {offsets = [4, 0], sizes = [1, 128], strides = [1, 1]} : vector<16x128xf32> to vector<1x128xf32>
    %257 = vector.shape_cast %256 : vector<1x128xf32> to vector<1x128xf32>
    %258 = vector.broadcast %257 : vector<1x128xf32> to vector<16x128xf32>
    %259 = vector.extract_strided_slice %241 {offsets = [5, 0], sizes = [1, 128], strides = [1, 1]} : vector<16x128xf32> to vector<1x128xf32>
    %260 = vector.shape_cast %259 : vector<1x128xf32> to vector<1x128xf32>
    %261 = vector.broadcast %260 : vector<1x128xf32> to vector<16x128xf32>
    %262 = vector.extract_strided_slice %241 {offsets = [6, 0], sizes = [1, 128], strides = [1, 1]} : vector<16x128xf32> to vector<1x128xf32>
    %263 = vector.shape_cast %262 : vector<1x128xf32> to vector<1x128xf32>
    %264 = vector.broadcast %263 : vector<1x128xf32> to vector<16x128xf32>
    %265 = vector.extract_strided_slice %241 {offsets = [7, 0], sizes = [1, 128], strides = [1, 1]} : vector<16x128xf32> to vector<1x128xf32>
    %266 = vector.shape_cast %265 : vector<1x128xf32> to vector<1x128xf32>
    %267 = vector.broadcast %266 : vector<1x128xf32> to vector<16x128xf32>
    %268 = vector.extract_strided_slice %241 {offsets = [8, 0], sizes = [1, 128], strides = [1, 1]} : vector<16x128xf32> to vector<1x128xf32>
    %269 = vector.shape_cast %268 : vector<1x128xf32> to vector<1x128xf32>
    %270 = vector.broadcast %269 : vector<1x128xf32> to vector<16x128xf32>
    %271 = vector.extract_strided_slice %241 {offsets = [9, 0], sizes = [1, 128], strides = [1, 1]} : vector<16x128xf32> to vector<1x128xf32>
    %272 = vector.shape_cast %271 : vector<1x128xf32> to vector<1x128xf32>
    %273 = vector.broadcast %272 : vector<1x128xf32> to vector<16x128xf32>
    %274 = vector.extract_strided_slice %241 {offsets = [10, 0], sizes = [1, 128], strides = [1, 1]} : vector<16x128xf32> to vector<1x128xf32>
    %275 = vector.shape_cast %274 : vector<1x128xf32> to vector<1x128xf32>
    %276 = vector.broadcast %275 : vector<1x128xf32> to vector<16x128xf32>
    %277 = vector.extract_strided_slice %241 {offsets = [11, 0], sizes = [1, 128], strides = [1, 1]} : vector<16x128xf32> to vector<1x128xf32>
    %278 = vector.shape_cast %277 : vector<1x128xf32> to vector<1x128xf32>
    %279 = vector.broadcast %278 : vector<1x128xf32> to vector<16x128xf32>
    %280 = vector.extract_strided_slice %241 {offsets = [12, 0], sizes = [1, 128], strides = [1, 1]} : vector<16x128xf32> to vector<1x128xf32>
    %281 = vector.shape_cast %280 : vector<1x128xf32> to vector<1x128xf32>
    %282 = vector.broadcast %281 : vector<1x128xf32> to vector<16x128xf32>
    %283 = vector.extract_strided_slice %241 {offsets = [13, 0], sizes = [1, 128], strides = [1, 1]} : vector<16x128xf32> to vector<1x128xf32>
    %284 = vector.shape_cast %283 : vector<1x128xf32> to vector<1x128xf32>
    %285 = vector.broadcast %284 : vector<1x128xf32> to vector<16x128xf32>
    %286 = vector.extract_strided_slice %241 {offsets = [14, 0], sizes = [1, 128], strides = [1, 1]} : vector<16x128xf32> to vector<1x128xf32>
    %287 = vector.shape_cast %286 : vector<1x128xf32> to vector<1x128xf32>
    %288 = vector.broadcast %287 : vector<1x128xf32> to vector<16x128xf32>
    %289 = vector.extract_strided_slice %241 {offsets = [15, 0], sizes = [1, 128], strides = [1, 1]} : vector<16x128xf32> to vector<1x128xf32>
    %290 = vector.shape_cast %289 : vector<1x128xf32> to vector<1x128xf32>
    %291 = vector.broadcast %290 : vector<1x128xf32> to vector<16x128xf32>
    %292 = tpu.concatenate %246, %249, %252, %255, %258, %261, %264, %267, %270, %273, %276, %279, %282, %285, %288, %291 in 0 : vector<16x128xf32>, vector<16x128xf32>, vector<16x128xf32>, vector<16x128xf32>, vector<16x128xf32>, vector<16x128xf32>, vector<16x128xf32>, vector<16x128xf32>, vector<16x128xf32>, vector<16x128xf32>, vector<16x128xf32>, vector<16x128xf32>, vector<16x128xf32>, vector<16x128xf32>, vector<16x128xf32>, vector<16x128xf32> -> vector<256x128xf32>
    %293 = tpu.concatenate %242, %242, %242, %242, %242, %242, %242, %242, %242, %242, %242, %242, %242, %242, %242, %242 in 0 : vector<16x128xf32>, vector<16x128xf32>, vector<16x128xf32>, vector<16x128xf32>, vector<16x128xf32>, vector<16x128xf32>, vector<16x128xf32>, vector<16x128xf32>, vector<16x128xf32>, vector<16x128xf32>, vector<16x128xf32>, vector<16x128xf32>, vector<16x128xf32>, vector<16x128xf32>, vector<16x128xf32>, vector<16x128xf32> -> vector<256x128xf32>
    %294 = arith.mulf %292, %293 : vector<256x128xf32>
    %cst_21 = arith.constant dense<0.000000e+00> : vector<16x128xf32>
    %295 = tpu.matmul %243, %294, %cst_21 {dimension_numbers = #tpu.dot_dimension_numbers<[1], [0], [0], [1], [0, 0, 1, 1], [], []>} : vector<16x256xf32>, vector<256x128xf32>, vector<16x128xf32> -> vector<16x128xf32>
    %296 = vector.extract_strided_slice %1 {offsets = [80, 0], sizes = [16, 128], strides = [1, 1]} : vector<128x128xf32> to vector<16x128xf32>
    %297 = vector.extract_strided_slice %2 {offsets = [80, 0], sizes = [16, 128], strides = [1, 1]} : vector<128x128xf32> to vector<16x128xf32>
    %298 = vector.extract_strided_slice %20 {offsets = [80, 0], sizes = [16, 256], strides = [1, 1]} : vector<128x256xf32> to vector<16x256xf32>
    %299 = vector.extract_strided_slice %296 {offsets = [0, 0], sizes = [1, 128], strides = [1, 1]} : vector<16x128xf32> to vector<1x128xf32>
    %300 = vector.shape_cast %299 : vector<1x128xf32> to vector<1x128xf32>
    %301 = vector.broadcast %300 : vector<1x128xf32> to vector<16x128xf32>
    %302 = vector.extract_strided_slice %296 {offsets = [1, 0], sizes = [1, 128], strides = [1, 1]} : vector<16x128xf32> to vector<1x128xf32>
    %303 = vector.shape_cast %302 : vector<1x128xf32> to vector<1x128xf32>
    %304 = vector.broadcast %303 : vector<1x128xf32> to vector<16x128xf32>
    %305 = vector.extract_strided_slice %296 {offsets = [2, 0], sizes = [1, 128], strides = [1, 1]} : vector<16x128xf32> to vector<1x128xf32>
    %306 = vector.shape_cast %305 : vector<1x128xf32> to vector<1x128xf32>
    %307 = vector.broadcast %306 : vector<1x128xf32> to vector<16x128xf32>
    %308 = vector.extract_strided_slice %296 {offsets = [3, 0], sizes = [1, 128], strides = [1, 1]} : vector<16x128xf32> to vector<1x128xf32>
    %309 = vector.shape_cast %308 : vector<1x128xf32> to vector<1x128xf32>
    %310 = vector.broadcast %309 : vector<1x128xf32> to vector<16x128xf32>
    %311 = vector.extract_strided_slice %296 {offsets = [4, 0], sizes = [1, 128], strides = [1, 1]} : vector<16x128xf32> to vector<1x128xf32>
    %312 = vector.shape_cast %311 : vector<1x128xf32> to vector<1x128xf32>
    %313 = vector.broadcast %312 : vector<1x128xf32> to vector<16x128xf32>
    %314 = vector.extract_strided_slice %296 {offsets = [5, 0], sizes = [1, 128], strides = [1, 1]} : vector<16x128xf32> to vector<1x128xf32>
    %315 = vector.shape_cast %314 : vector<1x128xf32> to vector<1x128xf32>
    %316 = vector.broadcast %315 : vector<1x128xf32> to vector<16x128xf32>
    %317 = vector.extract_strided_slice %296 {offsets = [6, 0], sizes = [1, 128], strides = [1, 1]} : vector<16x128xf32> to vector<1x128xf32>
    %318 = vector.shape_cast %317 : vector<1x128xf32> to vector<1x128xf32>
    %319 = vector.broadcast %318 : vector<1x128xf32> to vector<16x128xf32>
    %320 = vector.extract_strided_slice %296 {offsets = [7, 0], sizes = [1, 128], strides = [1, 1]} : vector<16x128xf32> to vector<1x128xf32>
    %321 = vector.shape_cast %320 : vector<1x128xf32> to vector<1x128xf32>
    %322 = vector.broadcast %321 : vector<1x128xf32> to vector<16x128xf32>
    %323 = vector.extract_strided_slice %296 {offsets = [8, 0], sizes = [1, 128], strides = [1, 1]} : vector<16x128xf32> to vector<1x128xf32>
    %324 = vector.shape_cast %323 : vector<1x128xf32> to vector<1x128xf32>
    %325 = vector.broadcast %324 : vector<1x128xf32> to vector<16x128xf32>
    %326 = vector.extract_strided_slice %296 {offsets = [9, 0], sizes = [1, 128], strides = [1, 1]} : vector<16x128xf32> to vector<1x128xf32>
    %327 = vector.shape_cast %326 : vector<1x128xf32> to vector<1x128xf32>
    %328 = vector.broadcast %327 : vector<1x128xf32> to vector<16x128xf32>
    %329 = vector.extract_strided_slice %296 {offsets = [10, 0], sizes = [1, 128], strides = [1, 1]} : vector<16x128xf32> to vector<1x128xf32>
    %330 = vector.shape_cast %329 : vector<1x128xf32> to vector<1x128xf32>
    %331 = vector.broadcast %330 : vector<1x128xf32> to vector<16x128xf32>
    %332 = vector.extract_strided_slice %296 {offsets = [11, 0], sizes = [1, 128], strides = [1, 1]} : vector<16x128xf32> to vector<1x128xf32>
    %333 = vector.shape_cast %332 : vector<1x128xf32> to vector<1x128xf32>
    %334 = vector.broadcast %333 : vector<1x128xf32> to vector<16x128xf32>
    %335 = vector.extract_strided_slice %296 {offsets = [12, 0], sizes = [1, 128], strides = [1, 1]} : vector<16x128xf32> to vector<1x128xf32>
    %336 = vector.shape_cast %335 : vector<1x128xf32> to vector<1x128xf32>
    %337 = vector.broadcast %336 : vector<1x128xf32> to vector<16x128xf32>
    %338 = vector.extract_strided_slice %296 {offsets = [13, 0], sizes = [1, 128], strides = [1, 1]} : vector<16x128xf32> to vector<1x128xf32>
    %339 = vector.shape_cast %338 : vector<1x128xf32> to vector<1x128xf32>
    %340 = vector.broadcast %339 : vector<1x128xf32> to vector<16x128xf32>
    %341 = vector.extract_strided_slice %296 {offsets = [14, 0], sizes = [1, 128], strides = [1, 1]} : vector<16x128xf32> to vector<1x128xf32>
    %342 = vector.shape_cast %341 : vector<1x128xf32> to vector<1x128xf32>
    %343 = vector.broadcast %342 : vector<1x128xf32> to vector<16x128xf32>
    %344 = vector.extract_strided_slice %296 {offsets = [15, 0], sizes = [1, 128], strides = [1, 1]} : vector<16x128xf32> to vector<1x128xf32>
    %345 = vector.shape_cast %344 : vector<1x128xf32> to vector<1x128xf32>
    %346 = vector.broadcast %345 : vector<1x128xf32> to vector<16x128xf32>
    %347 = tpu.concatenate %301, %304, %307, %310, %313, %316, %319, %322, %325, %328, %331, %334, %337, %340, %343, %346 in 0 : vector<16x128xf32>, vector<16x128xf32>, vector<16x128xf32>, vector<16x128xf32>, vector<16x128xf32>, vector<16x128xf32>, vector<16x128xf32>, vector<16x128xf32>, vector<16x128xf32>, vector<16x128xf32>, vector<16x128xf32>, vector<16x128xf32>, vector<16x128xf32>, vector<16x128xf32>, vector<16x128xf32>, vector<16x128xf32> -> vector<256x128xf32>
    %348 = tpu.concatenate %297, %297, %297, %297, %297, %297, %297, %297, %297, %297, %297, %297, %297, %297, %297, %297 in 0 : vector<16x128xf32>, vector<16x128xf32>, vector<16x128xf32>, vector<16x128xf32>, vector<16x128xf32>, vector<16x128xf32>, vector<16x128xf32>, vector<16x128xf32>, vector<16x128xf32>, vector<16x128xf32>, vector<16x128xf32>, vector<16x128xf32>, vector<16x128xf32>, vector<16x128xf32>, vector<16x128xf32>, vector<16x128xf32> -> vector<256x128xf32>
    %349 = arith.mulf %347, %348 : vector<256x128xf32>
    %cst_22 = arith.constant dense<0.000000e+00> : vector<16x128xf32>
    %350 = tpu.matmul %298, %349, %cst_22 {dimension_numbers = #tpu.dot_dimension_numbers<[1], [0], [0], [1], [0, 0, 1, 1], [], []>} : vector<16x256xf32>, vector<256x128xf32>, vector<16x128xf32> -> vector<16x128xf32>
    %351 = vector.extract_strided_slice %1 {offsets = [96, 0], sizes = [16, 128], strides = [1, 1]} : vector<128x128xf32> to vector<16x128xf32>
    %352 = vector.extract_strided_slice %2 {offsets = [96, 0], sizes = [16, 128], strides = [1, 1]} : vector<128x128xf32> to vector<16x128xf32>
    %353 = vector.extract_strided_slice %20 {offsets = [96, 0], sizes = [16, 256], strides = [1, 1]} : vector<128x256xf32> to vector<16x256xf32>
    %354 = vector.extract_strided_slice %351 {offsets = [0, 0], sizes = [1, 128], strides = [1, 1]} : vector<16x128xf32> to vector<1x128xf32>
    %355 = vector.shape_cast %354 : vector<1x128xf32> to vector<1x128xf32>
    %356 = vector.broadcast %355 : vector<1x128xf32> to vector<16x128xf32>
    %357 = vector.extract_strided_slice %351 {offsets = [1, 0], sizes = [1, 128], strides = [1, 1]} : vector<16x128xf32> to vector<1x128xf32>
    %358 = vector.shape_cast %357 : vector<1x128xf32> to vector<1x128xf32>
    %359 = vector.broadcast %358 : vector<1x128xf32> to vector<16x128xf32>
    %360 = vector.extract_strided_slice %351 {offsets = [2, 0], sizes = [1, 128], strides = [1, 1]} : vector<16x128xf32> to vector<1x128xf32>
    %361 = vector.shape_cast %360 : vector<1x128xf32> to vector<1x128xf32>
    %362 = vector.broadcast %361 : vector<1x128xf32> to vector<16x128xf32>
    %363 = vector.extract_strided_slice %351 {offsets = [3, 0], sizes = [1, 128], strides = [1, 1]} : vector<16x128xf32> to vector<1x128xf32>
    %364 = vector.shape_cast %363 : vector<1x128xf32> to vector<1x128xf32>
    %365 = vector.broadcast %364 : vector<1x128xf32> to vector<16x128xf32>
    %366 = vector.extract_strided_slice %351 {offsets = [4, 0], sizes = [1, 128], strides = [1, 1]} : vector<16x128xf32> to vector<1x128xf32>
    %367 = vector.shape_cast %366 : vector<1x128xf32> to vector<1x128xf32>
    %368 = vector.broadcast %367 : vector<1x128xf32> to vector<16x128xf32>
    %369 = vector.extract_strided_slice %351 {offsets = [5, 0], sizes = [1, 128], strides = [1, 1]} : vector<16x128xf32> to vector<1x128xf32>
    %370 = vector.shape_cast %369 : vector<1x128xf32> to vector<1x128xf32>
    %371 = vector.broadcast %370 : vector<1x128xf32> to vector<16x128xf32>
    %372 = vector.extract_strided_slice %351 {offsets = [6, 0], sizes = [1, 128], strides = [1, 1]} : vector<16x128xf32> to vector<1x128xf32>
    %373 = vector.shape_cast %372 : vector<1x128xf32> to vector<1x128xf32>
    %374 = vector.broadcast %373 : vector<1x128xf32> to vector<16x128xf32>
    %375 = vector.extract_strided_slice %351 {offsets = [7, 0], sizes = [1, 128], strides = [1, 1]} : vector<16x128xf32> to vector<1x128xf32>
    %376 = vector.shape_cast %375 : vector<1x128xf32> to vector<1x128xf32>
    %377 = vector.broadcast %376 : vector<1x128xf32> to vector<16x128xf32>
    %378 = vector.extract_strided_slice %351 {offsets = [8, 0], sizes = [1, 128], strides = [1, 1]} : vector<16x128xf32> to vector<1x128xf32>
    %379 = vector.shape_cast %378 : vector<1x128xf32> to vector<1x128xf32>
    %380 = vector.broadcast %379 : vector<1x128xf32> to vector<16x128xf32>
    %381 = vector.extract_strided_slice %351 {offsets = [9, 0], sizes = [1, 128], strides = [1, 1]} : vector<16x128xf32> to vector<1x128xf32>
    %382 = vector.shape_cast %381 : vector<1x128xf32> to vector<1x128xf32>
    %383 = vector.broadcast %382 : vector<1x128xf32> to vector<16x128xf32>
    %384 = vector.extract_strided_slice %351 {offsets = [10, 0], sizes = [1, 128], strides = [1, 1]} : vector<16x128xf32> to vector<1x128xf32>
    %385 = vector.shape_cast %384 : vector<1x128xf32> to vector<1x128xf32>
    %386 = vector.broadcast %385 : vector<1x128xf32> to vector<16x128xf32>
    %387 = vector.extract_strided_slice %351 {offsets = [11, 0], sizes = [1, 128], strides = [1, 1]} : vector<16x128xf32> to vector<1x128xf32>
    %388 = vector.shape_cast %387 : vector<1x128xf32> to vector<1x128xf32>
    %389 = vector.broadcast %388 : vector<1x128xf32> to vector<16x128xf32>
    %390 = vector.extract_strided_slice %351 {offsets = [12, 0], sizes = [1, 128], strides = [1, 1]} : vector<16x128xf32> to vector<1x128xf32>
    %391 = vector.shape_cast %390 : vector<1x128xf32> to vector<1x128xf32>
    %392 = vector.broadcast %391 : vector<1x128xf32> to vector<16x128xf32>
    %393 = vector.extract_strided_slice %351 {offsets = [13, 0], sizes = [1, 128], strides = [1, 1]} : vector<16x128xf32> to vector<1x128xf32>
    %394 = vector.shape_cast %393 : vector<1x128xf32> to vector<1x128xf32>
    %395 = vector.broadcast %394 : vector<1x128xf32> to vector<16x128xf32>
    %396 = vector.extract_strided_slice %351 {offsets = [14, 0], sizes = [1, 128], strides = [1, 1]} : vector<16x128xf32> to vector<1x128xf32>
    %397 = vector.shape_cast %396 : vector<1x128xf32> to vector<1x128xf32>
    %398 = vector.broadcast %397 : vector<1x128xf32> to vector<16x128xf32>
    %399 = vector.extract_strided_slice %351 {offsets = [15, 0], sizes = [1, 128], strides = [1, 1]} : vector<16x128xf32> to vector<1x128xf32>
    %400 = vector.shape_cast %399 : vector<1x128xf32> to vector<1x128xf32>
    %401 = vector.broadcast %400 : vector<1x128xf32> to vector<16x128xf32>
    %402 = tpu.concatenate %356, %359, %362, %365, %368, %371, %374, %377, %380, %383, %386, %389, %392, %395, %398, %401 in 0 : vector<16x128xf32>, vector<16x128xf32>, vector<16x128xf32>, vector<16x128xf32>, vector<16x128xf32>, vector<16x128xf32>, vector<16x128xf32>, vector<16x128xf32>, vector<16x128xf32>, vector<16x128xf32>, vector<16x128xf32>, vector<16x128xf32>, vector<16x128xf32>, vector<16x128xf32>, vector<16x128xf32>, vector<16x128xf32> -> vector<256x128xf32>
    %403 = tpu.concatenate %352, %352, %352, %352, %352, %352, %352, %352, %352, %352, %352, %352, %352, %352, %352, %352 in 0 : vector<16x128xf32>, vector<16x128xf32>, vector<16x128xf32>, vector<16x128xf32>, vector<16x128xf32>, vector<16x128xf32>, vector<16x128xf32>, vector<16x128xf32>, vector<16x128xf32>, vector<16x128xf32>, vector<16x128xf32>, vector<16x128xf32>, vector<16x128xf32>, vector<16x128xf32>, vector<16x128xf32>, vector<16x128xf32> -> vector<256x128xf32>
    %404 = arith.mulf %402, %403 : vector<256x128xf32>
    %cst_23 = arith.constant dense<0.000000e+00> : vector<16x128xf32>
    %405 = tpu.matmul %353, %404, %cst_23 {dimension_numbers = #tpu.dot_dimension_numbers<[1], [0], [0], [1], [0, 0, 1, 1], [], []>} : vector<16x256xf32>, vector<256x128xf32>, vector<16x128xf32> -> vector<16x128xf32>
    %406 = vector.extract_strided_slice %1 {offsets = [112, 0], sizes = [16, 128], strides = [1, 1]} : vector<128x128xf32> to vector<16x128xf32>
    %407 = vector.extract_strided_slice %2 {offsets = [112, 0], sizes = [16, 128], strides = [1, 1]} : vector<128x128xf32> to vector<16x128xf32>
    %408 = vector.extract_strided_slice %20 {offsets = [112, 0], sizes = [16, 256], strides = [1, 1]} : vector<128x256xf32> to vector<16x256xf32>
    %409 = vector.extract_strided_slice %406 {offsets = [0, 0], sizes = [1, 128], strides = [1, 1]} : vector<16x128xf32> to vector<1x128xf32>
    %410 = vector.shape_cast %409 : vector<1x128xf32> to vector<1x128xf32>
    %411 = vector.broadcast %410 : vector<1x128xf32> to vector<16x128xf32>
    %412 = vector.extract_strided_slice %406 {offsets = [1, 0], sizes = [1, 128], strides = [1, 1]} : vector<16x128xf32> to vector<1x128xf32>
    %413 = vector.shape_cast %412 : vector<1x128xf32> to vector<1x128xf32>
    %414 = vector.broadcast %413 : vector<1x128xf32> to vector<16x128xf32>
    %415 = vector.extract_strided_slice %406 {offsets = [2, 0], sizes = [1, 128], strides = [1, 1]} : vector<16x128xf32> to vector<1x128xf32>
    %416 = vector.shape_cast %415 : vector<1x128xf32> to vector<1x128xf32>
    %417 = vector.broadcast %416 : vector<1x128xf32> to vector<16x128xf32>
    %418 = vector.extract_strided_slice %406 {offsets = [3, 0], sizes = [1, 128], strides = [1, 1]} : vector<16x128xf32> to vector<1x128xf32>
    %419 = vector.shape_cast %418 : vector<1x128xf32> to vector<1x128xf32>
    %420 = vector.broadcast %419 : vector<1x128xf32> to vector<16x128xf32>
    %421 = vector.extract_strided_slice %406 {offsets = [4, 0], sizes = [1, 128], strides = [1, 1]} : vector<16x128xf32> to vector<1x128xf32>
    %422 = vector.shape_cast %421 : vector<1x128xf32> to vector<1x128xf32>
    %423 = vector.broadcast %422 : vector<1x128xf32> to vector<16x128xf32>
    %424 = vector.extract_strided_slice %406 {offsets = [5, 0], sizes = [1, 128], strides = [1, 1]} : vector<16x128xf32> to vector<1x128xf32>
    %425 = vector.shape_cast %424 : vector<1x128xf32> to vector<1x128xf32>
    %426 = vector.broadcast %425 : vector<1x128xf32> to vector<16x128xf32>
    %427 = vector.extract_strided_slice %406 {offsets = [6, 0], sizes = [1, 128], strides = [1, 1]} : vector<16x128xf32> to vector<1x128xf32>
    %428 = vector.shape_cast %427 : vector<1x128xf32> to vector<1x128xf32>
    %429 = vector.broadcast %428 : vector<1x128xf32> to vector<16x128xf32>
    %430 = vector.extract_strided_slice %406 {offsets = [7, 0], sizes = [1, 128], strides = [1, 1]} : vector<16x128xf32> to vector<1x128xf32>
    %431 = vector.shape_cast %430 : vector<1x128xf32> to vector<1x128xf32>
    %432 = vector.broadcast %431 : vector<1x128xf32> to vector<16x128xf32>
    %433 = vector.extract_strided_slice %406 {offsets = [8, 0], sizes = [1, 128], strides = [1, 1]} : vector<16x128xf32> to vector<1x128xf32>
    %434 = vector.shape_cast %433 : vector<1x128xf32> to vector<1x128xf32>
    %435 = vector.broadcast %434 : vector<1x128xf32> to vector<16x128xf32>
    %436 = vector.extract_strided_slice %406 {offsets = [9, 0], sizes = [1, 128], strides = [1, 1]} : vector<16x128xf32> to vector<1x128xf32>
    %437 = vector.shape_cast %436 : vector<1x128xf32> to vector<1x128xf32>
    %438 = vector.broadcast %437 : vector<1x128xf32> to vector<16x128xf32>
    %439 = vector.extract_strided_slice %406 {offsets = [10, 0], sizes = [1, 128], strides = [1, 1]} : vector<16x128xf32> to vector<1x128xf32>
    %440 = vector.shape_cast %439 : vector<1x128xf32> to vector<1x128xf32>
    %441 = vector.broadcast %440 : vector<1x128xf32> to vector<16x128xf32>
    %442 = vector.extract_strided_slice %406 {offsets = [11, 0], sizes = [1, 128], strides = [1, 1]} : vector<16x128xf32> to vector<1x128xf32>
    %443 = vector.shape_cast %442 : vector<1x128xf32> to vector<1x128xf32>
    %444 = vector.broadcast %443 : vector<1x128xf32> to vector<16x128xf32>
    %445 = vector.extract_strided_slice %406 {offsets = [12, 0], sizes = [1, 128], strides = [1, 1]} : vector<16x128xf32> to vector<1x128xf32>
    %446 = vector.shape_cast %445 : vector<1x128xf32> to vector<1x128xf32>
    %447 = vector.broadcast %446 : vector<1x128xf32> to vector<16x128xf32>
    %448 = vector.extract_strided_slice %406 {offsets = [13, 0], sizes = [1, 128], strides = [1, 1]} : vector<16x128xf32> to vector<1x128xf32>
    %449 = vector.shape_cast %448 : vector<1x128xf32> to vector<1x128xf32>
    %450 = vector.broadcast %449 : vector<1x128xf32> to vector<16x128xf32>
    %451 = vector.extract_strided_slice %406 {offsets = [14, 0], sizes = [1, 128], strides = [1, 1]} : vector<16x128xf32> to vector<1x128xf32>
    %452 = vector.shape_cast %451 : vector<1x128xf32> to vector<1x128xf32>
    %453 = vector.broadcast %452 : vector<1x128xf32> to vector<16x128xf32>
    %454 = vector.extract_strided_slice %406 {offsets = [15, 0], sizes = [1, 128], strides = [1, 1]} : vector<16x128xf32> to vector<1x128xf32>
    %455 = vector.shape_cast %454 : vector<1x128xf32> to vector<1x128xf32>
    %456 = vector.broadcast %455 : vector<1x128xf32> to vector<16x128xf32>
    %457 = tpu.concatenate %411, %414, %417, %420, %423, %426, %429, %432, %435, %438, %441, %444, %447, %450, %453, %456 in 0 : vector<16x128xf32>, vector<16x128xf32>, vector<16x128xf32>, vector<16x128xf32>, vector<16x128xf32>, vector<16x128xf32>, vector<16x128xf32>, vector<16x128xf32>, vector<16x128xf32>, vector<16x128xf32>, vector<16x128xf32>, vector<16x128xf32>, vector<16x128xf32>, vector<16x128xf32>, vector<16x128xf32>, vector<16x128xf32> -> vector<256x128xf32>
    %458 = tpu.concatenate %407, %407, %407, %407, %407, %407, %407, %407, %407, %407, %407, %407, %407, %407, %407, %407 in 0 : vector<16x128xf32>, vector<16x128xf32>, vector<16x128xf32>, vector<16x128xf32>, vector<16x128xf32>, vector<16x128xf32>, vector<16x128xf32>, vector<16x128xf32>, vector<16x128xf32>, vector<16x128xf32>, vector<16x128xf32>, vector<16x128xf32>, vector<16x128xf32>, vector<16x128xf32>, vector<16x128xf32>, vector<16x128xf32> -> vector<256x128xf32>
    %459 = arith.mulf %457, %458 : vector<256x128xf32>
    %cst_24 = arith.constant dense<0.000000e+00> : vector<16x128xf32>
    %460 = tpu.matmul %408, %459, %cst_24 {dimension_numbers = #tpu.dot_dimension_numbers<[1], [0], [0], [1], [0, 0, 1, 1], [], []>} : vector<16x256xf32>, vector<256x128xf32>, vector<16x128xf32> -> vector<16x128xf32>
    %461 = tpu.concatenate %75, %130, %185, %240, %295, %350, %405, %460 in 0 : vector<16x128xf32>, vector<16x128xf32>, vector<16x128xf32>, vector<16x128xf32>, vector<16x128xf32>, vector<16x128xf32>, vector<16x128xf32>, vector<16x128xf32> -> vector<128x128xf32>
    %462 = vector.broadcast %8 : vector<128x1xf32> to vector<128x128xf32>
    %463 = arith.mulf %462, %461 : vector<128x128xf32>
    %c0_25 = arith.constant 0 : index
    %c0_26 = arith.constant 0 : index
    %464 = vector.load %arg7[%c0_25, %c0_26] : memref<128x384xf32, #tpu.memory_space<vmem>>, vector<128x384xf32>
    %cst_27 = arith.constant dense<0.000000e+00> : vector<128x384xf32>
    %465 = tpu.matmul %463, %464, %cst_27 {dimension_numbers = #tpu.dot_dimension_numbers<[1], [0], [0], [1], [0, 0, 1, 1], [], []>} : vector<128x128xf32>, vector<128x384xf32>, vector<128x384xf32> -> vector<128x384xf32>
    %c0_28 = arith.constant 0 : index
    %c0_29 = arith.constant 0 : index
    %466 = vector.load %arg9[%c0_28, %c0_29] : memref<1x384xf32, #tpu.memory_space<vmem>>, vector<1x384xf32>
    %467 = vector.broadcast %466 : vector<1x384xf32> to vector<128x384xf32>
    %468 = arith.addf %465, %467 : vector<128x384xf32>
    %c0_30 = arith.constant 0 : index
    %c0_31 = arith.constant 0 : index
    %469 = vector.load %arg8[%c0_30, %c0_31] : memref<128x384xf32, #tpu.memory_space<vmem>>, vector<128x384xf32>
    %cst_32 = arith.constant dense<0.000000e+00> : vector<128x384xf32>
    %470 = tpu.matmul %1, %469, %cst_32 {dimension_numbers = #tpu.dot_dimension_numbers<[1], [0], [0], [1], [0, 0, 1, 1], [], []>} : vector<128x128xf32>, vector<128x384xf32>, vector<128x384xf32> -> vector<128x384xf32>
    %c0_33 = arith.constant 0 : index
    %c0_34 = arith.constant 0 : index
    %471 = vector.load %arg10[%c0_33, %c0_34] : memref<1x384xf32, #tpu.memory_space<vmem>>, vector<1x384xf32>
    %472 = vector.broadcast %471 : vector<1x384xf32> to vector<128x384xf32>
    %473 = arith.addf %470, %472 : vector<128x384xf32>
    %474 = vector.extract_strided_slice %468 {offsets = [0, 0], sizes = [128, 128], strides = [1, 1]} : vector<128x384xf32> to vector<128x128xf32>
    %475 = vector.extract_strided_slice %473 {offsets = [0, 0], sizes = [128, 128], strides = [1, 1]} : vector<128x384xf32> to vector<128x128xf32>
    %476 = arith.addf %474, %475 : vector<128x128xf32>
    %477 = arith.negf %476 : vector<128x128xf32>
    %478 = math.exp %477 : vector<128x128xf32>
    %cst_35 = arith.constant 1.000000e+00 : f32
    %479 = vector.broadcast %cst_35 : f32 to vector<128x128xf32>
    %480 = arith.addf %479, %478 : vector<128x128xf32>
    %481 = arith.divf %479, %480 : vector<128x128xf32>
    %482 = vector.extract_strided_slice %468 {offsets = [0, 128], sizes = [128, 128], strides = [1, 1]} : vector<128x384xf32> to vector<128x128xf32>
    %483 = vector.extract_strided_slice %473 {offsets = [0, 128], sizes = [128, 128], strides = [1, 1]} : vector<128x384xf32> to vector<128x128xf32>
    %484 = arith.addf %482, %483 : vector<128x128xf32>
    %485 = arith.negf %484 : vector<128x128xf32>
    %486 = math.exp %485 : vector<128x128xf32>
    %cst_36 = arith.constant 1.000000e+00 : f32
    %487 = vector.broadcast %cst_36 : f32 to vector<128x128xf32>
    %488 = arith.addf %487, %486 : vector<128x128xf32>
    %489 = arith.divf %487, %488 : vector<128x128xf32>
    %490 = vector.extract_strided_slice %468 {offsets = [0, 256], sizes = [128, 128], strides = [1, 1]} : vector<128x384xf32> to vector<128x128xf32>
    %491 = vector.extract_strided_slice %473 {offsets = [0, 256], sizes = [128, 128], strides = [1, 1]} : vector<128x384xf32> to vector<128x128xf32>
    %492 = arith.mulf %481, %491 : vector<128x128xf32>
    %493 = arith.addf %490, %492 : vector<128x128xf32>
    %494 = math.tanh %493 : vector<128x128xf32>
    %cst_37 = arith.constant 1.000000e+00 : f32
    %495 = vector.broadcast %cst_37 : f32 to vector<128x128xf32>
    %496 = arith.subf %495, %489 : vector<128x128xf32>
    %497 = arith.mulf %496, %494 : vector<128x128xf32>
    %498 = arith.mulf %489, %1 : vector<128x128xf32>
    %499 = arith.addf %497, %498 : vector<128x128xf32>
    %c0_38 = arith.constant 0 : index
    %c0_39 = arith.constant 0 : index
    %500 = vector.load %arg11[%c0_38, %c0_39] : memref<128x128xf32, #tpu.memory_space<vmem>>, vector<128x128xf32>
    tpu.vector_store %arg11[%c0_38, %c0_39], %499 {strides = array<i32>} : memref<128x128xf32, #tpu.memory_space<vmem>>, vector<128x128xf32>,
    return
  }
  func.func @transform_0(%arg0: i32) -> (i32, i32) {
    %c0_i32 = arith.constant 0 : i32
    %c0_i32_0 = arith.constant 0 : i32
    return %arg0, %c0_i32 : i32, i32
  }
  func.func @transform_1(%arg0: i32) -> (i32, i32) {
    %c0_i32 = arith.constant 0 : i32
    %c0_i32_0 = arith.constant 0 : i32
    return %arg0, %c0_i32 : i32, i32
  }
  func.func @transform_2(%arg0: i32) -> (i32, i32) {
    %c0_i32 = arith.constant 0 : i32
    %c0_i32_0 = arith.constant 0 : i32
    return %arg0, %c0_i32 : i32, i32
  }
  func.func @transform_3(%arg0: i32) -> (i32, i32) {
    %c0_i32 = arith.constant 0 : i32
    %c0_i32_0 = arith.constant 0 : i32
    %c0_i32_1 = arith.constant 0 : i32
    return %c0_i32, %c0_i32_0 : i32, i32
  }
  func.func @transform_4(%arg0: i32) -> (i32, i32) {
    %c0_i32 = arith.constant 0 : i32
    %c0_i32_0 = arith.constant 0 : i32
    %c0_i32_1 = arith.constant 0 : i32
    return %c0_i32, %c0_i32_0 : i32, i32
  }
  func.func @transform_5(%arg0: i32) -> (i32, i32) {
    %c0_i32 = arith.constant 0 : i32
    %c0_i32_0 = arith.constant 0 : i32
    %c0_i32_1 = arith.constant 0 : i32
    return %c0_i32, %c0_i32_0 : i32, i32
  }
  func.func @transform_6(%arg0: i32) -> (i32, i32) {
    %c0_i32 = arith.constant 0 : i32
    %c0_i32_0 = arith.constant 0 : i32
    %c0_i32_1 = arith.constant 0 : i32
    return %c0_i32, %c0_i32_0 : i32, i32
  }
  func.func @transform_7(%arg0: i32) -> (i32, i32) {
    %c0_i32 = arith.constant 0 : i32
    %c0_i32_0 = arith.constant 0 : i32
    %c0_i32_1 = arith.constant 0 : i32
    return %c0_i32, %c0_i32_0 : i32, i32
  }
  func.func @transform_8(%arg0: i32) -> (i32, i32) {
    %c0_i32 = arith.constant 0 : i32
    %c0_i32_0 = arith.constant 0 : i32
    %c0_i32_1 = arith.constant 0 : i32
    return %c0_i32, %c0_i32_0 : i32, i32
  }
  func.func @transform_9(%arg0: i32) -> (i32, i32) {
    %c0_i32 = arith.constant 0 : i32
    %c0_i32_0 = arith.constant 0 : i32
    %c0_i32_1 = arith.constant 0 : i32
    return %c0_i32, %c0_i32_0 : i32, i32
  }
  func.func @transform_10(%arg0: i32) -> (i32, i32) {
    %c0_i32 = arith.constant 0 : i32
    %c0_i32_0 = arith.constant 0 : i32
    return %arg0, %c0_i32 : i32, i32
  }
}

</mosaic_0001>

<llo_original>
// kernel: tpu_custom_call.1
$region0: #{tpu_custom_call.1}
  #allocation0 [shape = 'u32[]', space=smem, size = 0x4, offset = 0x4, fixed_abs, tag = 'smem constant byte address 0x4 - core index']
  #allocation1 [shape = 'u32[144,128]{1,0:T(1,128)}', space=vmem, size = 0x12000, scoped, tag = 'internal scratch']
  %s0 = inlined_call_operand.vmem [shape: f32[256,16], index: 0, kind: input, shape index: {}]
  %s1 = inlined_call_operand.vmem [shape: f32[256,128], index: 1, kind: input, shape index: {}]
  %s2 = inlined_call_operand.hbm [shape: f32[256,128], index: 2, kind: input, shape index: {}]
  %s3 = inlined_call_operand.hbm [shape: f32[16,16], index: 3, kind: input, shape index: {}]
  %s4 = inlined_call_operand.vmem [shape: f32[16,256], index: 4, kind: input, shape index: {}]
  %s5 = inlined_call_operand.vmem [shape: f32[1,256], index: 5, kind: input, shape index: {}]
  %s6 = inlined_call_operand.hbm [shape: f32[128,384], index: 6, kind: input, shape index: {}]
  %s7 = inlined_call_operand.hbm [shape: f32[128,384], index: 7, kind: input, shape index: {}]
  %s8 = inlined_call_operand.vmem [shape: f32[1,384], index: 8, kind: input, shape index: {}]
  %s9 = inlined_call_operand.vmem [shape: f32[1,384], index: 9, kind: input, shape index: {}]
  %s10 = inlined_call_operand.hbm [shape: f32[256,128], index: 10, kind: output, shape index: {}]
  %s11 = sld [smem:[#allocation0]]
  $region89: #{tpu_custom_call.1} parent=0
    _
  %s13 = ssub.s32 1, %s11
  %s14 = scalar_select 0, %s13, %s11
  $region1: #{tpu_custom_call.1} parent=0
    #allocation2 [shape = 'u8[131072]{0}', space=vmem, size = 0x20000, scoped, tag = 'input window, operand 2']
    #allocation3 [shape = 's32[2]{0}', space=sflag, size = 0x8, scoped, tag = 'scoped memory for tpu_custom_call.1']
    #allocation4 [shape = 's32[2]{0}', space=sflag, size = 0x8, scoped, tag = 'scoped memory for tpu_custom_call.1']
    #allocation5 [shape = 'u8[8192]{0}', space=vmem, size = 0x2000, scoped, tag = 'input window, operand 3, single buffered']
    #allocation6 [shape = 's32[1]{0}', space=sflag, size = 0x4, scoped, tag = 'scoped memory for tpu_custom_call.1']
    #allocation7 [shape = 'u8[196608]{0}', space=vmem, size = 0x30000, scoped, tag = 'input window, operand 6, single buffered']
    #allocation8 [shape = 'u8[196608]{0}', space=vmem, size = 0x30000, scoped, tag = 'input window, operand 7, single buffered']
    #allocation9 [shape = 's32[1]{0}', space=sflag, size = 0x4, scoped, tag = 'scoped memory for tpu_custom_call.1']
    #allocation10 [shape = 'u8[131072]{0}', space=vmem, size = 0x20000, scoped, tag = 'output window, operand 0']
    %15 = vsyncpa [#allocation3], 0
    %s16 = scalar_lea.sflag [#allocation3], 1
    %17 = vsyncpa %s16, 0
    %18 = vsyncpa [#allocation6], 0
    %19 = vsyncpa [#allocation9], 0
    %20 = vsyncpa [#allocation4], 0
    %s21 = scalar_lea.sflag [#allocation4], 1
    %22 = vsyncpa %s21, 0
    loop: start=0, step=1, limit=4
    $region2: #{tpu_custom_call.1} parent=1 // loop_pre_header
      _
    $region3: #{tpu_custom_call.1} parent=1 // loop_header
      %s24 = sphi 0, %s28
      %p25 = scmp.ge.s32.totalorder %s24, 4
      %s34 = sphi 0, %s36
      %s37 = sphi 0, %s34
      %s38 = sphi 0, %s37
      %s54 = sphi 0, %s38
      %s60 = sphi 0, %s62
      %s63 = sphi 0, %s60
      %s64 = sphi 0, %s63
      %s80 = sphi 0, %s64
      %s86 = sphi 0, %s88
      %s89 = sphi 0, %s86
      %s90 = sphi 0, %s89
      %s106 = sphi 0, %s90
      %s110 = sphi 0, %s110
      %s112 = sphi 0, %s110
      %s113 = sphi 0, %s112
      %s127 = sphi 0, %s113
      %s131 = sphi 0, %s131
      %s133 = sphi 0, %s131
      %s134 = sphi 0, %s133
      %s148 = sphi 0, %s134
      %s152 = sphi 0, %s152
      %s154 = sphi 0, %s152
      %s155 = sphi 0, %s154
      %s169 = sphi 0, %s155
      %s173 = sphi 0, %s173
      %s175 = sphi 0, %s173
      %s176 = sphi 0, %s175
      %s190 = sphi 0, %s176
      %s194 = sphi 0, %s194
      %s196 = sphi 0, %s194
      %s197 = sphi 0, %s196
      %s211 = sphi 0, %s197
      %s215 = sphi 0, %s215
      %s217 = sphi 0, %s215
      %s218 = sphi 0, %s217
      %s232 = sphi 0, %s218
      %s236 = sphi 0, %s236
      %s238 = sphi 0, %s236
      %s239 = sphi 0, %s238
      %s253 = sphi 0, %s239
      %s259 = sphi 0, %s261
      %s262 = sphi 0, %s259
      %s263 = sphi 0, %s262
      %s279 = sphi 0, %s263
    $region4: #{tpu_custom_call.1} parent=1 // loop_header_branch
      %27 = sbr.rel (%p25) target = $region8
    $region5: #{tpu_custom_call.1} parent=1 // loop_body
      %s29 = ssub.s32 %s24, 1
      %s30 = ssub.s32 %s24, 2
      %s31 = sadd.s32 %s24, 1
      %s32 = ssub.s32 %s24, %s31
      %p33 = scmp.eq.s32.totalorder %s32, 0
      %s35 = sadd.s32 %s34, 1
      %s36 = scalar_select %p33, %s34, %s35
      %p39 = pneg %p33
      %p40 = scmp.eq.s32.totalorder %s24, 1
      %p41 = por %p39, %p40
      %p42 = scmp.ne.s32.totalorder %s34, %s37
      %p43 = scmp.eq.s32.totalorder %s24, 0
      %p44 = por %p42, %p43
      %p45 = scmp.ne.s32.totalorder %s34, %s37
      %p46 = scmp.eq.s32.totalorder %s29, 1
      %p47 = por %p45, %p46
      %p48 = scmp.ne.s32.totalorder %s37, %s38
      %p49 = scmp.eq.s32.totalorder %s29, 0
      %p50 = por %p48, %p49
      %p51 = scmp.ne.s32.totalorder %s37, %s38
      %p52 = scmp.eq.s32.totalorder %s30, 1
      %p53 = por %p51, %p52
      %p55 = scmp.ne.s32.totalorder %s38, %s54
      %p56 = scmp.eq.s32.totalorder %s30, 0
      %p57 = por %p55, %p56
      %s58 = ssub.s32 %s24, %s31
      %p59 = scmp.eq.s32.totalorder %s58, 0
      %s61 = sadd.s32 %s60, 1
      %s62 = scalar_select %p59, %s60, %s61
      %p65 = pneg %p59
      %p66 = scmp.eq.s32.totalorder %s24, 1
      %p67 = por %p65, %p66
      %p68 = scmp.ne.s32.totalorder %s60, %s63
      %p69 = scmp.eq.s32.totalorder %s24, 0
      %p70 = por %p68, %p69
      %p71 = scmp.ne.s32.totalorder %s60, %s63
      %p72 = scmp.eq.s32.totalorder %s29, 1
      %p73 = por %p71, %p72
      %p74 = scmp.ne.s32.totalorder %s63, %s64
      %p75 = scmp.eq.s32.totalorder %s29, 0
      %p76 = por %p74, %p75
      %p77 = scmp.ne.s32.totalorder %s63, %s64
      %p78 = scmp.eq.s32.totalorder %s30, 1
      %p79 = por %p77, %p78
      %p81 = scmp.ne.s32.totalorder %s64, %s80
      %p82 = scmp.eq.s32.totalorder %s30, 0
      %p83 = por %p81, %p82
      %s84 = ssub.s32 %s24, %s31
      %p85 = scmp.eq.s32.totalorder %s84, 0
      %s87 = sadd.s32 %s86, 1
      %s88 = scalar_select %p85, %s86, %s87
      %p91 = pneg %p85
      %p92 = scmp.eq.s32.totalorder %s24, 1
      %p93 = por %p91, %p92
      %p94 = scmp.ne.s32.totalorder %s86, %s89
      %p95 = scmp.eq.s32.totalorder %s24, 0
      %p96 = por %p94, %p95
      %p97 = scmp.ne.s32.totalorder %s86, %s89
      %p98 = scmp.eq.s32.totalorder %s29, 1
      %p99 = por %p97, %p98
      %p100 = scmp.ne.s32.totalorder %s89, %s90
      %p101 = scmp.eq.s32.totalorder %s29, 0
      %p102 = por %p100, %p101
      %p103 = scmp.ne.s32.totalorder %s89, %s90
      %p104 = scmp.eq.s32.totalorder %s30, 1
      %p105 = por %p103, %p104
      %p107 = scmp.ne.s32.totalorder %s90, %s106
      %p108 = scmp.eq.s32.totalorder %s30, 0
      %p109 = por %p107, %p108
      %s111 = sadd.s32 %s110, 1
      %p114 = scmp.eq.s32.totalorder %s24, 1
      %p115 = scmp.ne.s32.totalorder %s110, %s112
      %p116 = scmp.eq.s32.totalorder %s24, 0
      %p117 = por %p115, %p116
      %p118 = scmp.ne.s32.totalorder %s110, %s112
      %p119 = scmp.eq.s32.totalorder %s29, 1
      %p120 = por %p118, %p119
      %p121 = scmp.ne.s32.totalorder %s112, %s113
      %p122 = scmp.eq.s32.totalorder %s29, 0
      %p123 = por %p121, %p122
      %p124 = scmp.ne.s32.totalorder %s112, %s113
      %p125 = scmp.eq.s32.totalorder %s30, 1
      %p126 = por %p124, %p125
      %p128 = scmp.ne.s32.totalorder %s113, %s127
      %p129 = scmp.eq.s32.totalorder %s30, 0
      %p130 = por %p128, %p129
      %s132 = sadd.s32 %s131, 1
      %p135 = scmp.eq.s32.totalorder %s24, 1
      %p136 = scmp.ne.s32.totalorder %s131, %s133
      %p137 = scmp.eq.s32.totalorder %s24, 0
      %p138 = por %p136, %p137
      %p139 = scmp.ne.s32.totalorder %s131, %s133
      %p140 = scmp.eq.s32.totalorder %s29, 1
      %p141 = por %p139, %p140
      %p142 = scmp.ne.s32.totalorder %s133, %s134
      %p143 = scmp.eq.s32.totalorder %s29, 0
      %p144 = por %p142, %p143
      %p145 = scmp.ne.s32.totalorder %s133, %s134
      %p146 = scmp.eq.s32.totalorder %s30, 1
      %p147 = por %p145, %p146
      %p149 = scmp.ne.s32.totalorder %s134, %s148
      %p150 = scmp.eq.s32.totalorder %s30, 0
      %p151 = por %p149, %p150
      %s153 = sadd.s32 %s152, 1
      %p156 = scmp.eq.s32.totalorder %s24, 1
      %p157 = scmp.ne.s32.totalorder %s152, %s154
      %p158 = scmp.eq.s32.totalorder %s24, 0
      %p159 = por %p157, %p158
      %p160 = scmp.ne.s32.totalorder %s152, %s154
      %p161 = scmp.eq.s32.totalorder %s29, 1
      %p162 = por %p160, %p161
      %p163 = scmp.ne.s32.totalorder %s154, %s155
      %p164 = scmp.eq.s32.totalorder %s29, 0
      %p165 = por %p163, %p164
      %p166 = scmp.ne.s32.totalorder %s154, %s155
      %p167 = scmp.eq.s32.totalorder %s30, 1
      %p168 = por %p166, %p167
      %p170 = scmp.ne.s32.totalorder %s155, %s169
      %p171 = scmp.eq.s32.totalorder %s30, 0
      %p172 = por %p170, %p171
      %s174 = sadd.s32 %s173, 1
      %p177 = scmp.eq.s32.totalorder %s24, 1
      %p178 = scmp.ne.s32.totalorder %s173, %s175
      %p179 = scmp.eq.s32.totalorder %s24, 0
      %p180 = por %p178, %p179
      %p181 = scmp.ne.s32.totalorder %s173, %s175
      %p182 = scmp.eq.s32.totalorder %s29, 1
      %p183 = por %p181, %p182
      %p184 = scmp.ne.s32.totalorder %s175, %s176
      %p185 = scmp.eq.s32.totalorder %s29, 0
      %p186 = por %p184, %p185
      %p187 = scmp.ne.s32.totalorder %s175, %s176
      %p188 = scmp.eq.s32.totalorder %s30, 1
      %p189 = por %p187, %p188
      %p191 = scmp.ne.s32.totalorder %s176, %s190
      %p192 = scmp.eq.s32.totalorder %s30, 0
      %p193 = por %p191, %p192
      %s195 = sadd.s32 %s194, 1
      %p198 = scmp.eq.s32.totalorder %s24, 1
      %p199 = scmp.ne.s32.totalorder %s194, %s196
      %p200 = scmp.eq.s32.totalorder %s24, 0
      %p201 = por %p199, %p200
      %p202 = scmp.ne.s32.totalorder %s194, %s196
      %p203 = scmp.eq.s32.totalorder %s29, 1
      %p204 = por %p202, %p203
      %p205 = scmp.ne.s32.totalorder %s196, %s197
      %p206 = scmp.eq.s32.totalorder %s29, 0
      %p207 = por %p205, %p206
      %p208 = scmp.ne.s32.totalorder %s196, %s197
      %p209 = scmp.eq.s32.totalorder %s30, 1
      %p210 = por %p208, %p209
      %p212 = scmp.ne.s32.totalorder %s197, %s211
      %p213 = scmp.eq.s32.totalorder %s30, 0
      %p214 = por %p212, %p213
      %s216 = sadd.s32 %s215, 1
      %p219 = scmp.eq.s32.totalorder %s24, 1
      %p220 = scmp.ne.s32.totalorder %s215, %s217
      %p221 = scmp.eq.s32.totalorder %s24, 0
      %p222 = por %p220, %p221
      %p223 = scmp.ne.s32.totalorder %s215, %s217
      %p224 = scmp.eq.s32.totalorder %s29, 1
      %p225 = por %p223, %p224
      %p226 = scmp.ne.s32.totalorder %s217, %s218
      %p227 = scmp.eq.s32.totalorder %s29, 0
      %p228 = por %p226, %p227
      %p229 = scmp.ne.s32.totalorder %s217, %s218
      %p230 = scmp.eq.s32.totalorder %s30, 1
      %p231 = por %p229, %p230
      %p233 = scmp.ne.s32.totalorder %s218, %s232
      %p234 = scmp.eq.s32.totalorder %s30, 0
      %p235 = por %p233, %p234
      %s237 = sadd.s32 %s236, 1
      %p240 = scmp.eq.s32.totalorder %s24, 1
      %p241 = scmp.ne.s32.totalorder %s236, %s238
      %p242 = scmp.eq.s32.totalorder %s24, 0
      %p243 = por %p241, %p242
      %p244 = scmp.ne.s32.totalorder %s236, %s238
      %p245 = scmp.eq.s32.totalorder %s29, 1
      %p246 = por %p244, %p245
      %p247 = scmp.ne.s32.totalorder %s238, %s239
      %p248 = scmp.eq.s32.totalorder %s29, 0
      %p249 = por %p247, %p248
      %p250 = scmp.ne.s32.totalorder %s238, %s239
      %p251 = scmp.eq.s32.totalorder %s30, 1
      %p252 = por %p250, %p251
      %p254 = scmp.ne.s32.totalorder %s239, %s253
      %p255 = scmp.eq.s32.totalorder %s30, 0
      %p256 = por %p254, %p255
      %s257 = ssub.s32 %s24, %s31
      %p258 = scmp.eq.s32.totalorder %s257, 0
      %s260 = sadd.s32 %s259, 1
      %s261 = scalar_select %p258, %s259, %s260
      %p264 = pneg %p258
      %p265 = scmp.eq.s32.totalorder %s24, 1
      %p266 = por %p264, %p265
      %p267 = scmp.ne.s32.totalorder %s259, %s262
      %p268 = scmp.eq.s32.totalorder %s24, 0
      %p269 = por %p267, %p268
      %p270 = scmp.ne.s32.totalorder %s259, %s262
      %p271 = scmp.eq.s32.totalorder %s29, 1
      %p272 = por %p270, %p271
      %p273 = scmp.ne.s32.totalorder %s262, %s263
      %p274 = scmp.eq.s32.totalorder %s29, 0
      %p275 = por %p273, %p274
      %p276 = scmp.ne.s32.totalorder %s262, %s263
      %p277 = scmp.eq.s32.totalorder %s30, 1
      %p278 = por %p276, %p277
      %p280 = scmp.ne.s32.totalorder %s263, %s279
      %p281 = scmp.eq.s32.totalorder %s30, 0
      %p282 = por %p280, %p281
      %p283 = scmp.le.s32.totalorder 1, %s24
      %p284 = scmp.lt.s32.totalorder %s24, 3
      %p285 = pnand %p283, %p284
      %p286 = pneg %p285
      // Predicated region
      $region9: #{tpu_custom_call.1} parent=5 // pred_check
        _
      $region10: #{tpu_custom_call.1} parent=5 // pred_check_branch
        %288 = sbr.rel (%p285) target = $region12
      $region11: #{tpu_custom_call.1} parent=5 // pred_region
        %s289 = ssub.s32 %s24, 1
        // Predicated region
        $region13: #{tpu_custom_call.1} parent=11 // pred_check
          %p290 = pneg %p123
        $region14: #{tpu_custom_call.1} parent=11 // pred_check_branch
          %292 = sbr.rel (%p290) target = $region16
        $region15: #{tpu_custom_call.1} parent=11 // pred_region
          %s294 = ssub.s32 256, 256
          %295 = vsyncadd [#allocation6], %s294
          %s296 = sshll.u32 [#allocation5], 4
          %s297 = int_to_ptr.vmem [resolvable:$true] %s296
          %302 = dma.hbm_to_vmem [thread:$0]  %s3, 256, %s297, [#allocation6], 128, 128, 8
        $region16: #{tpu_custom_call.1} parent=11 // pred_fallthru
          _
        // Predicated region
        $region17: #{tpu_custom_call.1} parent=11 // pred_check
          %p303 = pneg %p144
        $region18: #{tpu_custom_call.1} parent=11 // pred_check_branch
          %305 = sbr.rel (%p303) target = $region20
        $region19: #{tpu_custom_call.1} parent=11 // pred_region
          _
        $region20: #{tpu_custom_call.1} parent=11 // pred_fallthru
          _
        // Predicated region
        $region21: #{tpu_custom_call.1} parent=11 // pred_check
          %p306 = pneg %p165
        $region22: #{tpu_custom_call.1} parent=11 // pred_check_branch
          %308 = sbr.rel (%p306) target = $region24
        $region23: #{tpu_custom_call.1} parent=11 // pred_region
          _
        $region24: #{tpu_custom_call.1} parent=11 // pred_fallthru
          _
        // Predicated region
        $region25: #{tpu_custom_call.1} parent=11 // pred_check
          %p309 = pneg %p186
        $region26: #{tpu_custom_call.1} parent=11 // pred_check_branch
          %311 = sbr.rel (%p309) target = $region28
        $region27: #{tpu_custom_call.1} parent=11 // pred_region
          %s313 = ssub.s32 6144, 6144
          %314 = vsyncadd [#allocation6], %s313
          %s315 = sshll.u32 [#allocation7], 4
          %s316 = int_to_ptr.vmem [resolvable:$true] %s315
          %321 = dma.hbm_to_vmem [thread:$0]  %s6, 6144, %s316, [#allocation6], 384, 384, 24
        $region28: #{tpu_custom_call.1} parent=11 // pred_fallthru
          _
        // Predicated region
        $region29: #{tpu_custom_call.1} parent=11 // pred_check
          %p322 = pneg %p207
        $region30: #{tpu_custom_call.1} parent=11 // pred_check_branch
          %324 = sbr.rel (%p322) target = $region32
        $region31: #{tpu_custom_call.1} parent=11 // pred_region
          %s326 = ssub.s32 6144, 6144
          %327 = vsyncadd [#allocation9], %s326
          %s328 = sshll.u32 [#allocation8], 4
          %s329 = int_to_ptr.vmem [resolvable:$true] %s328
          %334 = dma.hbm_to_vmem [thread:$0]  %s7, 6144, %s329, [#allocation9], 384, 384, 24
        $region32: #{tpu_custom_call.1} parent=11 // pred_fallthru
          _
        // Predicated region
        $region33: #{tpu_custom_call.1} parent=11 // pred_check
          %p335 = pneg %p228
        $region34: #{tpu_custom_call.1} parent=11 // pred_check_branch
          %337 = sbr.rel (%p335) target = $region36
        $region35: #{tpu_custom_call.1} parent=11 // pred_region
          _
        $region36: #{tpu_custom_call.1} parent=11 // pred_fallthru
          _
        // Predicated region
        $region37: #{tpu_custom_call.1} parent=11 // pred_check
          %p338 = pneg %p249
        $region38: #{tpu_custom_call.1} parent=11 // pred_check_branch
          %340 = sbr.rel (%p338) target = $region40
        $region39: #{tpu_custom_call.1} parent=11 // pred_region
          _
        $region40: #{tpu_custom_call.1} parent=11 // pred_fallthru
          _
      $region12: #{tpu_custom_call.1} parent=5 // pred_fallthru
        _
      %p341 = scmp.lt.s32.totalorder %s24, 2
      // Predicated region
      $region41: #{tpu_custom_call.1} parent=5 // pred_check
        %p342 = pneg %p341
      $region42: #{tpu_custom_call.1} parent=5 // pred_check_branch
        %344 = sbr.rel (%p342) target = $region44
      $region43: #{tpu_custom_call.1} parent=5 // pred_region
        // Predicated region
        $region45: #{tpu_custom_call.1} parent=43 // pred_check
          %p345 = pneg %p44
        $region46: #{tpu_custom_call.1} parent=43 // pred_check_branch
          %347 = sbr.rel (%p345) target = $region48
        $region47: #{tpu_custom_call.1} parent=43 // pred_region
          %s348 = smul.u32 16, %s24
          %p349 = scmp.lt.s32.totalorder %s348, 31
          %s350 = scalar_select %p349, %s348, 31
          %s351 = smul.addr %s350, 8
          %s352 = scalar_lea.vmem %s0, %s351
          %s353 = smul.u32 16, %s24
        $region48: #{tpu_custom_call.1} parent=43 // pred_fallthru
          _
        // Predicated region
        $region49: #{tpu_custom_call.1} parent=43 // pred_check
          %p354 = pneg %p70
        $region50: #{tpu_custom_call.1} parent=43 // pred_check_branch
          %356 = sbr.rel (%p354) target = $region52
        $region51: #{tpu_custom_call.1} parent=43 // pred_region
          %s357 = smul.u32 16, %s24
          %p358 = scmp.lt.s32.totalorder %s357, 31
          %s359 = scalar_select %p358, %s357, 31
          %s360 = smul.addr %s359, 8
          %s361 = scalar_lea.vmem %s1, %s360
          %s362 = smul.u32 16, %s24
        $region52: #{tpu_custom_call.1} parent=43 // pred_fallthru
          _
        // Predicated region
        $region53: #{tpu_custom_call.1} parent=43 // pred_check
          %p363 = pneg %p96
        $region54: #{tpu_custom_call.1} parent=43 // pred_check_branch
          %365 = sbr.rel (%p363) target = $region56
        $region55: #{tpu_custom_call.1} parent=43 // pred_region
          %s366 = sand.u32 %s86, 1
          %s367 = scalar_lea.sflag [#allocation3], %s366
          %s368 = sand.u32 %s86, 1
          %s369 = smul.addr %s368, 128
          %s370 = scalar_lea.vmem [#allocation2], %s369
          %s371 = smul.u32 16, %s24
          %s373 = ssub.s32 2048, 2048
          %374 = vsyncadd %s367, %s373
          %s375 = smul.addr %s371, 128
          %s376 = scalar_lea.hbm %s2, %s375
          %s377 = sshll.u32 %s370, 4
          %s378 = int_to_ptr.vmem [resolvable:$true] %s377
          %383 = dma.hbm_to_vmem [thread:$0]  %s376, 2048, %s378, %s367, 128, 128, 8
        $region56: #{tpu_custom_call.1} parent=43 // pred_fallthru
          _
      $region44: #{tpu_custom_call.1} parent=5 // pred_fallthru
        _
      %p384 = scmp.le.s32.totalorder 1, %s24
      %p385 = scmp.lt.s32.totalorder %s24, 3
      %p386 = pnand %p384, %p385
      %p387 = pneg %p386
      // Predicated region
      $region57: #{tpu_custom_call.1} parent=5 // pred_check
        _
      $region58: #{tpu_custom_call.1} parent=5 // pred_check_branch
        %389 = sbr.rel (%p386) target = $region60
      $region59: #{tpu_custom_call.1} parent=5 // pred_region
        %s390 = ssub.s32 %s24, 1
        %s391 = sand.u32 %s89, 1
        %s392 = scalar_lea.sflag [#allocation3], %s391
        %s393 = sand.u32 %s89, 1
        %s394 = smul.addr %s393, 128
        %s395 = scalar_lea.vmem [#allocation2], %s394
        // Predicated region
        $region61: #{tpu_custom_call.1} parent=59 // pred_check
          %p396 = pneg %p102
        $region62: #{tpu_custom_call.1} parent=59 // pred_check_branch
          %398 = sbr.rel (%p396) target = $region64
        $region63: #{tpu_custom_call.1} parent=59 // pred_region
          %399 = dma.done %s392, 2048
        $region64: #{tpu_custom_call.1} parent=59 // pred_fallthru
          _
        // Predicated region
        $region65: #{tpu_custom_call.1} parent=59 // pred_check
          %p400 = pneg %p123
        $region66: #{tpu_custom_call.1} parent=59 // pred_check_branch
          %402 = sbr.rel (%p400) target = $region68
        $region67: #{tpu_custom_call.1} parent=59 // pred_region
          %403 = dma.done [#allocation6], 256
        $region68: #{tpu_custom_call.1} parent=59 // pred_fallthru
          _
        // Predicated region
        $region69: #{tpu_custom_call.1} parent=59 // pred_check
          %p404 = pneg %p186
        $region70: #{tpu_custom_call.1} parent=59 // pred_check_branch
          %406 = sbr.rel (%p404) target = $region72
        $region71: #{tpu_custom_call.1} parent=59 // pred_region
          %407 = dma.done [#allocation6], 6144
        $region72: #{tpu_custom_call.1} parent=59 // pred_fallthru
          _
        // Predicated region
        $region73: #{tpu_custom_call.1} parent=59 // pred_check
          %p408 = pneg %p207
        $region74: #{tpu_custom_call.1} parent=59 // pred_check_branch
          %410 = sbr.rel (%p408) target = $region76
        $region75: #{tpu_custom_call.1} parent=59 // pred_region
          %411 = dma.done [#allocation9], 6144
        $region76: #{tpu_custom_call.1} parent=59 // pred_fallthru
          _
        %s412 = smul.u32 16, %s29
        %p413 = scmp.lt.s32.totalorder %s412, 31
        %s414 = scalar_select %p413, %s412, 31
        %s415 = smul.addr %s414, 8
        %s416 = scalar_lea.vmem %s0, %s415
        %p417 = pneg %p50
        %p418 = pneg %p47
        %s419 = smul.u32 16, %s29
        %p420 = scmp.lt.s32.totalorder %s419, 31
        %s421 = scalar_select %p420, %s419, 31
        %s422 = smul.addr %s421, 8
        %s423 = scalar_lea.vmem %s1, %s422
        %p424 = pneg %p76
        %p425 = pneg %p73
        %s426 = sand.u32 %s89, 1
        %s427 = scalar_lea.sflag [#allocation3], %s426
        %s428 = sand.u32 %s89, 1
        %s429 = smul.addr %s428, 128
        %s430 = scalar_lea.vmem [#allocation2], %s429
        %p431 = pneg %p102
        %p432 = pneg %p99
        %p433 = pneg %p123
        %p434 = pneg %p120
        %p435 = pneg %p144
        %p436 = pneg %p141
        %p437 = pneg %p165
        %p438 = pneg %p162
        %p439 = pneg %p186
        %p440 = pneg %p183
        %p441 = pneg %p207
        %p442 = pneg %p204
        %p443 = pneg %p228
        %p444 = pneg %p225
        %p445 = pneg %p249
        %p446 = pneg %p246
        %p447 = pneg %p275
        %p448 = pneg %p272
        %s449 = sand.u32 %s262, 1
        %s450 = scalar_lea.sflag [#allocation4], %s449
        %s451 = sand.u32 %s262, 1
        %s452 = smul.addr %s451, 128
        %s453 = scalar_lea.vmem [#allocation10], %s452
        %s454 = smul.u32 16, %s29
        %p455 = scmp.lt.s32.totalorder %s454, 31
        %s456 = scalar_select %p455, %s454, 31
        %s457 = smul.addr %s456, 8
        %s458 = scalar_lea.vmem %s0, %s457
        %s459 = smul.u32 16, %s29
        %s460 = smul.u32 16, %s29
        %p461 = scmp.lt.s32.totalorder %s460, 31
        %s462 = scalar_select %p461, %s460, 31
        %s463 = smul.addr %s462, 8
        %s464 = scalar_lea.vmem %s1, %s463
        %s465 = smul.u32 16, %s29
        %s466 = smul.u32 16, %s29
        %s467 = smul.u32 16, %s29
        %v468 = vld [vmem:[%s458] sm:$0xff]
        %v469 = vld [vmem:[%s458 + $0x8] sm:$0xff]
        %v470 = vld [vmem:[%s458 + $0x10] sm:$0xff]
        %v471 = vld [vmem:[%s458 + $0x18] sm:$0xff]
        %v472 = vld [vmem:[%s458 + $0x20] sm:$0xff]
        %v473 = vld [vmem:[%s458 + $0x28] sm:$0xff]
        %v474 = vld [vmem:[%s458 + $0x30] sm:$0xff]
        %v475 = vld [vmem:[%s458 + $0x38] sm:$0xff]
        %v476 = vld [vmem:[%s458 + $0x40] sm:$0xff]
        %v477 = vld [vmem:[%s458 + $0x48] sm:$0xff]
        %v478 = vld [vmem:[%s458 + $0x50] sm:$0xff]
        %v479 = vld [vmem:[%s458 + $0x58] sm:$0xff]
        %v480 = vld [vmem:[%s458 + $0x60] sm:$0xff]
        %v481 = vld [vmem:[%s458 + $0x68] sm:$0xff]
        %v482 = vld [vmem:[%s458 + $0x70] sm:$0xff]
        %v483 = vld [vmem:[%s458 + $0x78] sm:$0xff]
        %v484 = vld [vmem:[%s464] sm:$0xff]
        %v485 = vld [vmem:[%s464 + $0x8] sm:$0xff]
        %v486 = vld [vmem:[%s464 + $0x10] sm:$0xff]
        %v487 = vld [vmem:[%s464 + $0x18] sm:$0xff]
        %v488 = vld [vmem:[%s464 + $0x20] sm:$0xff]
        %v489 = vld [vmem:[%s464 + $0x28] sm:$0xff]
        %v490 = vld [vmem:[%s464 + $0x30] sm:$0xff]
        %v491 = vld [vmem:[%s464 + $0x38] sm:$0xff]
        %v492 = vld [vmem:[%s464 + $0x40] sm:$0xff]
        %v493 = vld [vmem:[%s464 + $0x48] sm:$0xff]
        %v494 = vld [vmem:[%s464 + $0x50] sm:$0xff]
        %v495 = vld [vmem:[%s464 + $0x58] sm:$0xff]
        %v496 = vld [vmem:[%s464 + $0x60] sm:$0xff]
        %v497 = vld [vmem:[%s464 + $0x68] sm:$0xff]
        %v498 = vld [vmem:[%s464 + $0x70] sm:$0xff]
        %v499 = vld [vmem:[%s464 + $0x78] sm:$0xff]
        %v500 = vld [vmem:[%s395] sm:$0xff]
        %v501 = vld [vmem:[%s395 + $0x8] sm:$0xff]
        %v502 = vld [vmem:[%s395 + $0x10] sm:$0xff]
        %v503 = vld [vmem:[%s395 + $0x18] sm:$0xff]
        %v504 = vld [vmem:[%s395 + $0x20] sm:$0xff]
        %v505 = vld [vmem:[%s395 + $0x28] sm:$0xff]
        %v506 = vld [vmem:[%s395 + $0x30] sm:$0xff]
        %v507 = vld [vmem:[%s395 + $0x38] sm:$0xff]
        %v508 = vld [vmem:[%s395 + $0x40] sm:$0xff]
        %v509 = vld [vmem:[%s395 + $0x48] sm:$0xff]
        %v510 = vld [vmem:[%s395 + $0x50] sm:$0xff]
        %v511 = vld [vmem:[%s395 + $0x58] sm:$0xff]
        %v512 = vld [vmem:[%s395 + $0x60] sm:$0xff]
        %v513 = vld [vmem:[%s395 + $0x68] sm:$0xff]
        %v514 = vld [vmem:[%s395 + $0x70] sm:$0xff]
        %v515 = vld [vmem:[%s395 + $0x78] sm:$0xff]
        %vm516 = vcmask 130048
        %v517 = vsel %vm516, %v468, 0.0
        %518 = vadd.xlane.f32.xlu0 %v517
        %v519 = vpop.xlane.xlu0 %518
        %v520 = vsel %vm516, %v469, 0.0
        %521 = vadd.xlane.f32.xlu0 %v520
        %v522 = vpop.xlane.xlu0 %521
        %v523 = vsel %vm516, %v470, 0.0
        %524 = vadd.xlane.f32.xlu0 %v523
        %v525 = vpop.xlane.xlu0 %524
        %v526 = vsel %vm516, %v471, 0.0
        %527 = vadd.xlane.f32.xlu0 %v526
        %v528 = vpop.xlane.xlu0 %527
        %v529 = vsel %vm516, %v472, 0.0
        %530 = vadd.xlane.f32.xlu0 %v529
        %v531 = vpop.xlane.xlu0 %530
        %v532 = vsel %vm516, %v473, 0.0
        %533 = vadd.xlane.f32.xlu0 %v532
        %v534 = vpop.xlane.xlu0 %533
        %v535 = vsel %vm516, %v474, 0.0
        %536 = vadd.xlane.f32.xlu0 %v535
        %v537 = vpop.xlane.xlu0 %536
        %v538 = vsel %vm516, %v475, 0.0
        %539 = vadd.xlane.f32.xlu0 %v538
        %v540 = vpop.xlane.xlu0 %539
        %v541 = vsel %vm516, %v476, 0.0
        %542 = vadd.xlane.f32.xlu0 %v541
        %v543 = vpop.xlane.xlu0 %542
        %v544 = vsel %vm516, %v477, 0.0
        %545 = vadd.xlane.f32.xlu0 %v544
        %v546 = vpop.xlane.xlu0 %545
        %v547 = vsel %vm516, %v478, 0.0
        %548 = vadd.xlane.f32.xlu0 %v547
        %v549 = vpop.xlane.xlu0 %548
        %v550 = vsel %vm516, %v479, 0.0
        %551 = vadd.xlane.f32.xlu0 %v550
        %v552 = vpop.xlane.xlu0 %551
        %v553 = vsel %vm516, %v480, 0.0
        %554 = vadd.xlane.f32.xlu0 %v553
        %v555 = vpop.xlane.xlu0 %554
        %v556 = vsel %vm516, %v481, 0.0
        %557 = vadd.xlane.f32.xlu0 %v556
        %v558 = vpop.xlane.xlu0 %557
        %v559 = vsel %vm516, %v482, 0.0
        %560 = vadd.xlane.f32.xlu0 %v559
        %v561 = vpop.xlane.xlu0 %560
        %v562 = vsel %vm516, %v483, 0.0
        %563 = vadd.xlane.f32.xlu0 %v562
        %v564 = vpop.xlane.xlu0 %563
        %vm565 = vcmp.ne.f32.partialorder %v519, 1.0
        %vm566 = vcmp.ne.f32.partialorder %v522, 1.0
        %vm567 = vcmp.ne.f32.partialorder %v525, 1.0
        %vm568 = vcmp.ne.f32.partialorder %v528, 1.0
        %vm569 = vcmp.ne.f32.partialorder %v531, 1.0
        %vm570 = vcmp.ne.f32.partialorder %v534, 1.0
        %vm571 = vcmp.ne.f32.partialorder %v537, 1.0
        %vm572 = vcmp.ne.f32.partialorder %v540, 1.0
        %vm573 = vcmp.ne.f32.partialorder %v543, 1.0
        %vm574 = vcmp.ne.f32.partialorder %v546, 1.0
        %vm575 = vcmp.ne.f32.partialorder %v549, 1.0
        %vm576 = vcmp.ne.f32.partialorder %v552, 1.0
        %vm577 = vcmp.ne.f32.partialorder %v555, 1.0
        %vm578 = vcmp.ne.f32.partialorder %v558, 1.0
        %vm579 = vcmp.ne.f32.partialorder %v561, 1.0
        %vm580 = vcmp.ne.f32.partialorder %v564, 1.0
        %v581 = vsel %vm565, 1, 0
        %v582 = vsel %vm566, 1, 0
        %v583 = vsel %vm567, 1, 0
        %v584 = vsel %vm568, 1, 0
        %v585 = vsel %vm569, 1, 0
        %v586 = vsel %vm570, 1, 0
        %v587 = vsel %vm571, 1, 0
        %v588 = vsel %vm572, 1, 0
        %v589 = vsel %vm573, 1, 0
        %v590 = vsel %vm574, 1, 0
        %v591 = vsel %vm575, 1, 0
        %v592 = vsel %vm576, 1, 0
        %v593 = vsel %vm577, 1, 0
        %v594 = vsel %vm578, 1, 0
        %v595 = vsel %vm579, 1, 0
        %v596 = vsel %vm580, 1, 0
        %v597 = vcvt.s32.f32 %v581
        %v598 = vcvt.s32.f32 %v582
        %v599 = vcvt.s32.f32 %v583
        %v600 = vcvt.s32.f32 %v584
        %v601 = vcvt.s32.f32 %v585
        %v602 = vcvt.s32.f32 %v586
        %v603 = vcvt.s32.f32 %v587
        %v604 = vcvt.s32.f32 %v588
        %v605 = vcvt.s32.f32 %v589
        %v606 = vcvt.s32.f32 %v590
        %v607 = vcvt.s32.f32 %v591
        %v608 = vcvt.s32.f32 %v592
        %v609 = vcvt.s32.f32 %v593
        %v610 = vcvt.s32.f32 %v594
        %v611 = vcvt.s32.f32 %v595
        %v612 = vcvt.s32.f32 %v596
        %v613 = vld [vmem:[#allocation5] sm:$0xff]
        %v614 = vld [vmem:[#allocation5 + $0x8] sm:$0xff]
        %v616 = vsel %vm516, %v468, 0
        %v619 = vsel %vm516, %v469, 0
        %v622 = vsel %vm516, %v470, 0
        %v625 = vsel %vm516, %v471, 0
        %v628 = vsel %vm516, %v472, 0
        %v631 = vsel %vm516, %v473, 0
        %v634 = vsel %vm516, %v474, 0
        %v637 = vsel %vm516, %v475, 0
        %v640 = vsel %vm516, %v476, 0
        %v643 = vsel %vm516, %v477, 0
        %v646 = vsel %vm516, %v478, 0
        %v649 = vsel %vm516, %v479, 0
        %v652 = vsel %vm516, %v480, 0
        %v655 = vsel %vm516, %v481, 0
        %v658 = vsel %vm516, %v482, 0
        %v661 = vsel %vm516, %v483, 0
        %663 = vmatprep.subr.mxu0 0.0
        %664 = vmatpush1.msra.mxu0 %v613
        %665 = vmatprep.subr.mxu0 0.0
        %666 = vmatpush1.msra.mxu0 %v614
        %667 = vmatprep.subr.mxu0 0.0
        %668 = vmatpush1.msra.mxu0 0.0
        %669 = vmatprep.subr.mxu0 0.0
        %670 = vmatpush1.msra.mxu0 0.0
        %671 = vmatprep.subr.mxu0 0.0
        %672 = vmatpush1.msra.mxu0 0.0
        %673 = vmatprep.subr.mxu0 0.0
        %674 = vmatpush1.msra.mxu0 0.0
        %675 = vmatprep.subr.mxu0 0.0
        %676 = vmatpush1.msra.mxu0 0.0
        %677 = vmatprep.subr.mxu0 0.0
        %678 = vmatpush1.msra.mxu0 0.0
        %679 = vmatprep.subr.mxu0 0.0
        %680 = vmatpush1.msra.mxu0 0.0
        %681 = vmatprep.subr.mxu0 0.0
        %682 = vmatpush1.msra.mxu0 0.0
        %683 = vmatprep.subr.mxu0 0.0
        %684 = vmatpush1.msra.mxu0 0.0
        %685 = vmatprep.subr.mxu0 0.0
        %686 = vmatpush1.msra.mxu0 0.0
        %687 = vmatprep.subr.mxu0 0.0
        %688 = vmatpush1.msra.mxu0 0.0
        %689 = vmatprep.subr.mxu0 0.0
        %690 = vmatpush1.msra.mxu0 0.0
        %691 = vmatprep.subr.mxu0 0.0
        %692 = vmatpush1.msra.mxu0 0.0
        %693 = vmatprep.subr.mxu0 0.0
        %694 = vmatpush1.msra.mxu0 0.0
        %695 = vmatprep.subr.mxu0 0.0
        %696 = vmatpush1.msra.mxu0 0.0
        %697 = vmatprep.subr.mxu0 0.0
        %698 = vmatpush1.msra.mxu0 0.0
        %699 = vmatprep.subr.mxu0 0.0
        %700 = vmatpush1.msra.mxu0 0.0
        %701 = vmatprep.subr.mxu0 0.0
        %702 = vmatpush1.msra.mxu0 0.0
        %703 = vmatprep.subr.mxu0 0.0
        %704 = vmatpush1.msra.mxu0 0.0
        %705 = vmatprep.subr.mxu0 0.0
        %706 = vmatpush1.msra.mxu0 0.0
        %707 = vmatprep.subr.mxu0 0.0
        %708 = vmatpush1.msra.mxu0 0.0
        %709 = vmatprep.subr.mxu0 0.0
        %710 = vmatpush1.msra.mxu0 0.0
        %711 = vmatprep.subr.mxu0 0.0
        %712 = vmatpush1.msra.mxu0 0.0
        %713 = vmatprep.subr.mxu0 0.0
        %714 = vmatpush1.msra.mxu0 0.0
        %715 = vmatprep.subr.mxu0 0.0
        %716 = vmatpush1.msra.mxu0 0.0
        %717 = vmatprep.subr.mxu0 0.0
        %718 = vmatpush1.msra.mxu0 0.0
        %719 = vmatprep.subr.mxu0 0.0
        %720 = vmatpush1.msra.mxu0 0.0
        %721 = vmatprep.subr.mxu0 0.0
        %722 = vmatpush1.msra.mxu0 0.0
        %723 = vmatprep.subr.mxu0 0.0
        %724 = vmatpush1.msra.mxu0 0.0
        %725 = vmatprep.subr.mxu0 0.0
        %726 = vmatpush1.msra.mxu0 0.0
        %727 = vmatprep.mubr.f32.mxu0 0.0
        %728 = vmatmul.mubr.f32.gmra.mrb[0].mxu0 %v616
        %v729 = vpop.f32.mrb[0].mxu0
        %v730 = vadd.f32 0.0, %v729
        %v731 = vpop.f32.mrb[0].mxu0
        %732 = vmatprep.mubr.f32.mxu0 0.0
        %733 = vmatmul.mubr.f32.gmra.mrb[0].mxu0 %v619
        %v734 = vpop.f32.mrb[0].mxu0
        %v735 = vadd.f32 0.0, %v734
        %v736 = vpop.f32.mrb[0].mxu0
        %737 = vmatprep.mubr.f32.mxu0 0.0
        %738 = vmatmul.mubr.f32.gmra.mrb[0].mxu0 %v622
        %v739 = vpop.f32.mrb[0].mxu0
        %v740 = vadd.f32 0.0, %v739
        %v741 = vpop.f32.mrb[0].mxu0
        %742 = vmatprep.mubr.f32.mxu0 0.0
        %743 = vmatmul.mubr.f32.gmra.mrb[0].mxu0 %v625
        %v744 = vpop.f32.mrb[0].mxu0
        %v745 = vadd.f32 0.0, %v744
        %v746 = vpop.f32.mrb[0].mxu0
        %747 = vmatprep.mubr.f32.mxu0 0.0
        %748 = vmatmul.mubr.f32.gmra.mrb[0].mxu0 %v628
        %v749 = vpop.f32.mrb[0].mxu0
        %v750 = vadd.f32 0.0, %v749
        %v751 = vpop.f32.mrb[0].mxu0
        %752 = vmatprep.mubr.f32.mxu0 0.0
        %753 = vmatmul.mubr.f32.gmra.mrb[0].mxu0 %v631
        %v754 = vpop.f32.mrb[0].mxu0
        %v755 = vadd.f32 0.0, %v754
        %v756 = vpop.f32.mrb[0].mxu0
        %757 = vmatprep.mubr.f32.mxu0 0.0
        %758 = vmatmul.mubr.f32.gmra.mrb[0].mxu0 %v634
        %v759 = vpop.f32.mrb[0].mxu0
        %v760 = vadd.f32 0.0, %v759
        %v761 = vpop.f32.mrb[0].mxu0
        %762 = vmatprep.mubr.f32.mxu0 0.0
        %763 = vmatmul.mubr.f32.gmra.mrb[0].mxu0 %v637
        %v764 = vpop.f32.mrb[0].mxu0
        %v765 = vadd.f32 0.0, %v764
        %v766 = vpop.f32.mrb[0].mxu0
        %767 = vmatprep.mubr.f32.mxu0 0.0
        %768 = vmatmul.mubr.f32.gmra.mrb[0].mxu0 %v640
        %v769 = vpop.f32.mrb[0].mxu0
        %v770 = vadd.f32 0.0, %v769
        %v771 = vpop.f32.mrb[0].mxu0
        %772 = vmatprep.mubr.f32.mxu0 0.0
        %773 = vmatmul.mubr.f32.gmra.mrb[0].mxu0 %v643
        %v774 = vpop.f32.mrb[0].mxu0
        %v775 = vadd.f32 0.0, %v774
        %v776 = vpop.f32.mrb[0].mxu0
        %777 = vmatprep.mubr.f32.mxu0 0.0
        %778 = vmatmul.mubr.f32.gmra.mrb[0].mxu0 %v646
        %v779 = vpop.f32.mrb[0].mxu0
        %v780 = vadd.f32 0.0, %v779
        %v781 = vpop.f32.mrb[0].mxu0
        %782 = vmatprep.mubr.f32.mxu0 0.0
        %783 = vmatmul.mubr.f32.gmra.mrb[0].mxu0 %v649
        %v784 = vpop.f32.mrb[0].mxu0
        %v785 = vadd.f32 0.0, %v784
        %v786 = vpop.f32.mrb[0].mxu0
        %787 = vmatprep.mubr.f32.mxu0 0.0
        %788 = vmatmul.mubr.f32.gmra.mrb[0].mxu0 %v652
        %v789 = vpop.f32.mrb[0].mxu0
        %v790 = vadd.f32 0.0, %v789
        %v791 = vpop.f32.mrb[0].mxu0
        %792 = vmatprep.mubr.f32.mxu0 0.0
        %793 = vmatmul.mubr.f32.gmra.mrb[0].mxu0 %v655
        %v794 = vpop.f32.mrb[0].mxu0
        %v795 = vadd.f32 0.0, %v794
        %v796 = vpop.f32.mrb[0].mxu0
        %797 = vmatprep.mubr.f32.mxu0 0.0
        %798 = vmatmul.mubr.f32.gmra.mrb[0].mxu0 %v658
        %v799 = vpop.f32.mrb[0].mxu0
        %v800 = vadd.f32 0.0, %v799
        %v801 = vpop.f32.mrb[0].mxu0
        %802 = vmatprep.mubr.f32.mxu0 0.0
        %803 = vmatmul.mubr.f32.gmra.mrb[0].mxu0 %v661
        %v804 = vpop.f32.mrb[0].mxu0
        %v805 = vadd.f32 0.0, %v804
        %v806 = vpop.f32.mrb[0].mxu0
        %807 = vdwg.mxu0
        %v808 = vld [vmem:[%s4] sm:$0xff]
        %v809 = vld [vmem:[%s4 + $0x8] sm:$0xff]
        %v810 = vld [vmem:[%s4 + $0x10] sm:$0xff]
        %v811 = vld [vmem:[%s4 + $0x18] sm:$0xff]
        %812 = vmatprep.subr.mxu0 %v809
        %813 = vmatpush1.msra.mxu0 %v808
        %814 = vmatprep.subr.mxu0 %v811
        %815 = vmatpush1.msra.mxu0 %v810
        %816 = vmatprep.subr.mxu0 0.0
        %817 = vmatpush1.msra.mxu0 0.0
        %818 = vmatprep.subr.mxu0 0.0
        %819 = vmatpush1.msra.mxu0 0.0
        %820 = vmatprep.subr.mxu0 0.0
        %821 = vmatpush1.msra.mxu0 0.0
        %822 = vmatprep.subr.mxu0 0.0
        %823 = vmatpush1.msra.mxu0 0.0
        %824 = vmatprep.subr.mxu0 0.0
        %825 = vmatpush1.msra.mxu0 0.0
        %826 = vmatprep.subr.mxu0 0.0
        %827 = vmatpush1.msra.mxu0 0.0
        %828 = vmatprep.subr.mxu0 0.0
        %829 = vmatpush1.msra.mxu0 0.0
        %830 = vmatprep.subr.mxu0 0.0
        %831 = vmatpush1.msra.mxu0 0.0
        %832 = vmatprep.subr.mxu0 0.0
        %833 = vmatpush1.msra.mxu0 0.0
        %834 = vmatprep.subr.mxu0 0.0
        %835 = vmatpush1.msra.mxu0 0.0
        %836 = vmatprep.subr.mxu0 0.0
        %837 = vmatpush1.msra.mxu0 0.0
        %838 = vmatprep.subr.mxu0 0.0
        %839 = vmatpush1.msra.mxu0 0.0
        %840 = vmatprep.subr.mxu0 0.0
        %841 = vmatpush1.msra.mxu0 0.0
        %842 = vmatprep.subr.mxu0 0.0
        %843 = vmatpush1.msra.mxu0 0.0
        %844 = vmatprep.subr.mxu0 0.0
        %845 = vmatpush1.msra.mxu0 0.0
        %846 = vmatprep.subr.mxu0 0.0
        %847 = vmatpush1.msra.mxu0 0.0
        %848 = vmatprep.subr.mxu0 0.0
        %849 = vmatpush1.msra.mxu0 0.0
        %850 = vmatprep.subr.mxu0 0.0
        %851 = vmatpush1.msra.mxu0 0.0
        %852 = vmatprep.subr.mxu0 0.0
        %853 = vmatpush1.msra.mxu0 0.0
        %854 = vmatprep.subr.mxu0 0.0
        %855 = vmatpush1.msra.mxu0 0.0
        %856 = vmatprep.subr.mxu0 0.0
        %857 = vmatpush1.msra.mxu0 0.0
        %858 = vmatprep.subr.mxu0 0.0
        %859 = vmatpush1.msra.mxu0 0.0
        %860 = vmatprep.subr.mxu0 0.0
        %861 = vmatpush1.msra.mxu0 0.0
        %862 = vmatprep.subr.mxu0 0.0
        %863 = vmatpush1.msra.mxu0 0.0
        %864 = vmatprep.subr.mxu0 0.0
        %865 = vmatpush1.msra.mxu0 0.0
        %866 = vmatprep.subr.mxu0 0.0
        %867 = vmatpush1.msra.mxu0 0.0
        %868 = vmatprep.subr.mxu0 0.0
        %869 = vmatpush1.msra.mxu0 0.0
        %870 = vmatprep.subr.mxu0 0.0
        %871 = vmatpush1.msra.mxu0 0.0
        %872 = vmatprep.subr.mxu0 0.0
        %873 = vmatpush1.msra.mxu0 0.0
        %874 = vmatprep.subr.mxu0 0.0
        %875 = vmatpush1.msra.mxu0 0.0
        %876 = vmatprep.mubr.f32.mxu0 0.0
        %877 = vmatmul.mubr.f32.gmra.mrb[0].mxu0 %v616
        %v878 = vpop.f32.mrb[0].mxu0
        %v879 = vadd.f32 0.0, %v878
        %v880 = vpop.f32.mrb[0].mxu0
        %v881 = vadd.f32 0.0, %v880
        %882 = vmatprep.mubr.f32.mxu0 0.0
        %883 = vmatmul.mubr.f32.gmra.mrb[0].mxu0 %v619
        %v884 = vpop.f32.mrb[0].mxu0
        %v885 = vadd.f32 0.0, %v884
        %v886 = vpop.f32.mrb[0].mxu0
        %v887 = vadd.f32 0.0, %v886
        %888 = vmatprep.mubr.f32.mxu0 0.0
        %889 = vmatmul.mubr.f32.gmra.mrb[0].mxu0 %v622
        %v890 = vpop.f32.mrb[0].mxu0
        %v891 = vadd.f32 0.0, %v890
        %v892 = vpop.f32.mrb[0].mxu0
        %v893 = vadd.f32 0.0, %v892
        %894 = vmatprep.mubr.f32.mxu0 0.0
        %895 = vmatmul.mubr.f32.gmra.mrb[0].mxu0 %v625
        %v896 = vpop.f32.mrb[0].mxu0
        %v897 = vadd.f32 0.0, %v896
        %v898 = vpop.f32.mrb[0].mxu0
        %v899 = vadd.f32 0.0, %v898
        %900 = vmatprep.mubr.f32.mxu0 0.0
        %901 = vmatmul.mubr.f32.gmra.mrb[0].mxu0 %v628
        %v902 = vpop.f32.mrb[0].mxu0
        %v903 = vadd.f32 0.0, %v902
        %v904 = vpop.f32.mrb[0].mxu0
        %v905 = vadd.f32 0.0, %v904
        %906 = vmatprep.mubr.f32.mxu0 0.0
        %907 = vmatmul.mubr.f32.gmra.mrb[0].mxu0 %v631
        %v908 = vpop.f32.mrb[0].mxu0
        %v909 = vadd.f32 0.0, %v908
        %v910 = vpop.f32.mrb[0].mxu0
        %v911 = vadd.f32 0.0, %v910
        %912 = vmatprep.mubr.f32.mxu0 0.0
        %913 = vmatmul.mubr.f32.gmra.mrb[0].mxu0 %v634
        %v914 = vpop.f32.mrb[0].mxu0
        %v915 = vadd.f32 0.0, %v914
        %v916 = vpop.f32.mrb[0].mxu0
        %v917 = vadd.f32 0.0, %v916
        %918 = vmatprep.mubr.f32.mxu0 0.0
        %919 = vmatmul.mubr.f32.gmra.mrb[0].mxu0 %v637
        %v920 = vpop.f32.mrb[0].mxu0
        %v921 = vadd.f32 0.0, %v920
        %v922 = vpop.f32.mrb[0].mxu0
        %v923 = vadd.f32 0.0, %v922
        %924 = vmatprep.mubr.f32.mxu0 0.0
        %925 = vmatmul.mubr.f32.gmra.mrb[0].mxu0 %v640
        %v926 = vpop.f32.mrb[0].mxu0
        %v927 = vadd.f32 0.0, %v926
        %v928 = vpop.f32.mrb[0].mxu0
        %v929 = vadd.f32 0.0, %v928
        %930 = vmatprep.mubr.f32.mxu0 0.0
        %931 = vmatmul.mubr.f32.gmra.mrb[0].mxu0 %v643
        %v932 = vpop.f32.mrb[0].mxu0
        %v933 = vadd.f32 0.0, %v932
        %v934 = vpop.f32.mrb[0].mxu0
        %v935 = vadd.f32 0.0, %v934
        %936 = vmatprep.mubr.f32.mxu0 0.0
        %937 = vmatmul.mubr.f32.gmra.mrb[0].mxu0 %v646
        %v938 = vpop.f32.mrb[0].mxu0
        %v939 = vadd.f32 0.0, %v938
        %v940 = vpop.f32.mrb[0].mxu0
        %v941 = vadd.f32 0.0, %v940
        %942 = vmatprep.mubr.f32.mxu0 0.0
        %943 = vmatmul.mubr.f32.gmra.mrb[0].mxu0 %v649
        %v944 = vpop.f32.mrb[0].mxu0
        %v945 = vadd.f32 0.0, %v944
        %v946 = vpop.f32.mrb[0].mxu0
        %v947 = vadd.f32 0.0, %v946
        %948 = vmatprep.mubr.f32.mxu0 0.0
        %949 = vmatmul.mubr.f32.gmra.mrb[0].mxu0 %v652
        %v950 = vpop.f32.mrb[0].mxu0
        %v951 = vadd.f32 0.0, %v950
        %v952 = vpop.f32.mrb[0].mxu0
        %v953 = vadd.f32 0.0, %v952
        %954 = vmatprep.mubr.f32.mxu0 0.0
        %955 = vmatmul.mubr.f32.gmra.mrb[0].mxu0 %v655
        %v956 = vpop.f32.mrb[0].mxu0
        %v957 = vadd.f32 0.0, %v956
        %v958 = vpop.f32.mrb[0].mxu0
        %v959 = vadd.f32 0.0, %v958
        %960 = vmatprep.mubr.f32.mxu0 0.0
        %961 = vmatmul.mubr.f32.gmra.mrb[0].mxu0 %v658
        %v962 = vpop.f32.mrb[0].mxu0
        %v963 = vadd.f32 0.0, %v962
        %v964 = vpop.f32.mrb[0].mxu0
        %v965 = vadd.f32 0.0, %v964
        %966 = vmatprep.mubr.f32.mxu0 0.0
        %967 = vmatmul.mubr.f32.gmra.mrb[0].mxu0 %v661
        %v968 = vpop.f32.mrb[0].mxu0
        %v969 = vadd.f32 0.0, %v968
        %v970 = vpop.f32.mrb[0].mxu0
        %v971 = vadd.f32 0.0, %v970
        %972 = vdwg.mxu0
        %v974 = vsel %vm516, %v730, 0
        %v977 = vsel %vm516, %v735, 0
        %v980 = vsel %vm516, %v740, 0
        %v983 = vsel %vm516, %v745, 0
        %v986 = vsel %vm516, %v750, 0
        %v989 = vsel %vm516, %v755, 0
        %v992 = vsel %vm516, %v760, 0
        %v995 = vsel %vm516, %v765, 0
        %v998 = vsel %vm516, %v770, 0
        %v1001 = vsel %vm516, %v775, 0
        %v1004 = vsel %vm516, %v780, 0
        %v1007 = vsel %vm516, %v785, 0
        %v1010 = vsel %vm516, %v790, 0
        %v1013 = vsel %vm516, %v795, 0
        %v1016 = vsel %vm516, %v800, 0
        %v1019 = vsel %vm516, %v805, 0
        %1021 = vmatprep.subr.mxu0 %v809
        %1022 = vmatpush1.msra.mxu0 %v808
        %1023 = vmatprep.subr.mxu0 %v811
        %1024 = vmatpush1.msra.mxu0 %v810
        %1025 = vmatprep.subr.mxu0 0.0
        %1026 = vmatpush1.msra.mxu0 0.0
        %1027 = vmatprep.subr.mxu0 0.0
        %1028 = vmatpush1.msra.mxu0 0.0
        %1029 = vmatprep.subr.mxu0 0.0
        %1030 = vmatpush1.msra.mxu0 0.0
        %1031 = vmatprep.subr.mxu0 0.0
        %1032 = vmatpush1.msra.mxu0 0.0
        %1033 = vmatprep.subr.mxu0 0.0
        %1034 = vmatpush1.msra.mxu0 0.0
        %1035 = vmatprep.subr.mxu0 0.0
        %1036 = vmatpush1.msra.mxu0 0.0
        %1037 = vmatprep.subr.mxu0 0.0
        %1038 = vmatpush1.msra.mxu0 0.0
        %1039 = vmatprep.subr.mxu0 0.0
        %1040 = vmatpush1.msra.mxu0 0.0
        %1041 = vmatprep.subr.mxu0 0.0
        %1042 = vmatpush1.msra.mxu0 0.0
        %1043 = vmatprep.subr.mxu0 0.0
        %1044 = vmatpush1.msra.mxu0 0.0
        %1045 = vmatprep.subr.mxu0 0.0
        %1046 = vmatpush1.msra.mxu0 0.0
        %1047 = vmatprep.subr.mxu0 0.0
        %1048 = vmatpush1.msra.mxu0 0.0
        %1049 = vmatprep.subr.mxu0 0.0
        %1050 = vmatpush1.msra.mxu0 0.0
        %1051 = vmatprep.subr.mxu0 0.0
        %1052 = vmatpush1.msra.mxu0 0.0
        %1053 = vmatprep.subr.mxu0 0.0
        %1054 = vmatpush1.msra.mxu0 0.0
        %1055 = vmatprep.subr.mxu0 0.0
        %1056 = vmatpush1.msra.mxu0 0.0
        %1057 = vmatprep.subr.mxu0 0.0
        %1058 = vmatpush1.msra.mxu0 0.0
        %1059 = vmatprep.subr.mxu0 0.0
        %1060 = vmatpush1.msra.mxu0 0.0
        %1061 = vmatprep.subr.mxu0 0.0
        %1062 = vmatpush1.msra.mxu0 0.0
        %1063 = vmatprep.subr.mxu0 0.0
        %1064 = vmatpush1.msra.mxu0 0.0
        %1065 = vmatprep.subr.mxu0 0.0
        %1066 = vmatpush1.msra.mxu0 0.0
        %1067 = vmatprep.subr.mxu0 0.0
        %1068 = vmatpush1.msra.mxu0 0.0
        %1069 = vmatprep.subr.mxu0 0.0
        %1070 = vmatpush1.msra.mxu0 0.0
        %1071 = vmatprep.subr.mxu0 0.0
        %1072 = vmatpush1.msra.mxu0 0.0
        %1073 = vmatprep.subr.mxu0 0.0
        %1074 = vmatpush1.msra.mxu0 0.0
        %1075 = vmatprep.subr.mxu0 0.0
        %1076 = vmatpush1.msra.mxu0 0.0
        %1077 = vmatprep.subr.mxu0 0.0
        %1078 = vmatpush1.msra.mxu0 0.0
        %1079 = vmatprep.subr.mxu0 0.0
        %1080 = vmatpush1.msra.mxu0 0.0
        %1081 = vmatprep.subr.mxu0 0.0
        %1082 = vmatpush1.msra.mxu0 0.0
        %1083 = vmatprep.subr.mxu0 0.0
        %1084 = vmatpush1.msra.mxu0 0.0
        %1085 = vmatprep.mubr.f32.mxu0 0.0
        %1086 = vmatmul.mubr.f32.gmra.mrb[0].mxu0 %v974
        %v1087 = vpop.f32.mrb[0].mxu0
        %v1088 = vadd.f32 0.0, %v1087
        %v1089 = vpop.f32.mrb[0].mxu0
        %v1090 = vadd.f32 0.0, %v1089
        %1091 = vmatprep.mubr.f32.mxu0 0.0
        %1092 = vmatmul.mubr.f32.gmra.mrb[0].mxu0 %v977
        %v1093 = vpop.f32.mrb[0].mxu0
        %v1094 = vadd.f32 0.0, %v1093
        %v1095 = vpop.f32.mrb[0].mxu0
        %v1096 = vadd.f32 0.0, %v1095
        %1097 = vmatprep.mubr.f32.mxu0 0.0
        %1098 = vmatmul.mubr.f32.gmra.mrb[0].mxu0 %v980
        %v1099 = vpop.f32.mrb[0].mxu0
        %v1100 = vadd.f32 0.0, %v1099
        %v1101 = vpop.f32.mrb[0].mxu0
        %v1102 = vadd.f32 0.0, %v1101
        %1103 = vmatprep.mubr.f32.mxu0 0.0
        %1104 = vmatmul.mubr.f32.gmra.mrb[0].mxu0 %v983
        %v1105 = vpop.f32.mrb[0].mxu0
        %v1106 = vadd.f32 0.0, %v1105
        %v1107 = vpop.f32.mrb[0].mxu0
        %v1108 = vadd.f32 0.0, %v1107
        %1109 = vmatprep.mubr.f32.mxu0 0.0
        %1110 = vmatmul.mubr.f32.gmra.mrb[0].mxu0 %v986
        %v1111 = vpop.f32.mrb[0].mxu0
        %v1112 = vadd.f32 0.0, %v1111
        %v1113 = vpop.f32.mrb[0].mxu0
        %v1114 = vadd.f32 0.0, %v1113
        %1115 = vmatprep.mubr.f32.mxu0 0.0
        %1116 = vmatmul.mubr.f32.gmra.mrb[0].mxu0 %v989
        %v1117 = vpop.f32.mrb[0].mxu0
        %v1118 = vadd.f32 0.0, %v1117
        %v1119 = vpop.f32.mrb[0].mxu0
        %v1120 = vadd.f32 0.0, %v1119
        %1121 = vmatprep.mubr.f32.mxu0 0.0
        %1122 = vmatmul.mubr.f32.gmra.mrb[0].mxu0 %v992
        %v1123 = vpop.f32.mrb[0].mxu0
        %v1124 = vadd.f32 0.0, %v1123
        %v1125 = vpop.f32.mrb[0].mxu0
        %v1126 = vadd.f32 0.0, %v1125
        %1127 = vmatprep.mubr.f32.mxu0 0.0
        %1128 = vmatmul.mubr.f32.gmra.mrb[0].mxu0 %v995
        %v1129 = vpop.f32.mrb[0].mxu0
        %v1130 = vadd.f32 0.0, %v1129
        %v1131 = vpop.f32.mrb[0].mxu0
        %v1132 = vadd.f32 0.0, %v1131
        %1133 = vmatprep.mubr.f32.mxu0 0.0
        %1134 = vmatmul.mubr.f32.gmra.mrb[0].mxu0 %v998
        %v1135 = vpop.f32.mrb[0].mxu0
        %v1136 = vadd.f32 0.0, %v1135
        %v1137 = vpop.f32.mrb[0].mxu0
        %v1138 = vadd.f32 0.0, %v1137
        %1139 = vmatprep.mubr.f32.mxu0 0.0
        %1140 = vmatmul.mubr.f32.gmra.mrb[0].mxu0 %v1001
        %v1141 = vpop.f32.mrb[0].mxu0
        %v1142 = vadd.f32 0.0, %v1141
        %v1143 = vpop.f32.mrb[0].mxu0
        %v1144 = vadd.f32 0.0, %v1143
        %1145 = vmatprep.mubr.f32.mxu0 0.0
        %1146 = vmatmul.mubr.f32.gmra.mrb[0].mxu0 %v1004
        %v1147 = vpop.f32.mrb[0].mxu0
        %v1148 = vadd.f32 0.0, %v1147
        %v1149 = vpop.f32.mrb[0].mxu0
        %v1150 = vadd.f32 0.0, %v1149
        %1151 = vmatprep.mubr.f32.mxu0 0.0
        %1152 = vmatmul.mubr.f32.gmra.mrb[0].mxu0 %v1007
        %v1153 = vpop.f32.mrb[0].mxu0
        %v1154 = vadd.f32 0.0, %v1153
        %v1155 = vpop.f32.mrb[0].mxu0
        %v1156 = vadd.f32 0.0, %v1155
        %1157 = vmatprep.mubr.f32.mxu0 0.0
        %1158 = vmatmul.mubr.f32.gmra.mrb[0].mxu0 %v1010
        %v1159 = vpop.f32.mrb[0].mxu0
        %v1160 = vadd.f32 0.0, %v1159
        %v1161 = vpop.f32.mrb[0].mxu0
        %v1162 = vadd.f32 0.0, %v1161
        %1163 = vmatprep.mubr.f32.mxu0 0.0
        %1164 = vmatmul.mubr.f32.gmra.mrb[0].mxu0 %v1013
        %v1165 = vpop.f32.mrb[0].mxu0
        %v1166 = vadd.f32 0.0, %v1165
        %v1167 = vpop.f32.mrb[0].mxu0
        %v1168 = vadd.f32 0.0, %v1167
        %1169 = vmatprep.mubr.f32.mxu0 0.0
        %1170 = vmatmul.mubr.f32.gmra.mrb[0].mxu0 %v1016
        %v1171 = vpop.f32.mrb[0].mxu0
        %v1172 = vadd.f32 0.0, %v1171
        %v1173 = vpop.f32.mrb[0].mxu0
        %v1174 = vadd.f32 0.0, %v1173
        %1175 = vmatprep.mubr.f32.mxu0 0.0
        %1176 = vmatmul.mubr.f32.gmra.mrb[0].mxu0 %v1019
        %v1177 = vpop.f32.mrb[0].mxu0
        %v1178 = vadd.f32 0.0, %v1177
        %v1179 = vpop.f32.mrb[0].mxu0
        %v1180 = vadd.f32 0.0, %v1179
        %1181 = vdwg.mxu0
        %v1182 = vld [vmem:[%s5] sm:$0x3]
        %v1184 = vlaneseq
        %v1185 = vshrl.u32 %v1184, 7
        %v1186 = vsub.s32 0, %v1185
        %v1187 = vrot.slane %v1182, %v1186
        %v1188 = vlaneseq
        %v1189 = vshrl.u32 %v1188, 7
        %v1190 = vsub.s32 1, %v1189
        %v1191 = vrot.slane %v1182, %v1190
        %vm1194 = vcmp.eq.f32.partialorder %v1088, %v1187
        %vm1195 = vcmp.eq.f32.partialorder %v1090, %v1191
        %vm1196 = vcmp.eq.f32.partialorder %v1094, %v1187
        %vm1197 = vcmp.eq.f32.partialorder %v1096, %v1191
        %vm1198 = vcmp.eq.f32.partialorder %v1100, %v1187
        %vm1199 = vcmp.eq.f32.partialorder %v1102, %v1191
        %vm1200 = vcmp.eq.f32.partialorder %v1106, %v1187
        %vm1201 = vcmp.eq.f32.partialorder %v1108, %v1191
        %vm1202 = vcmp.eq.f32.partialorder %v1112, %v1187
        %vm1203 = vcmp.eq.f32.partialorder %v1114, %v1191
        %vm1204 = vcmp.eq.f32.partialorder %v1118, %v1187
        %vm1205 = vcmp.eq.f32.partialorder %v1120, %v1191
        %vm1206 = vcmp.eq.f32.partialorder %v1124, %v1187
        %vm1207 = vcmp.eq.f32.partialorder %v1126, %v1191
        %vm1208 = vcmp.eq.f32.partialorder %v1130, %v1187
        %vm1209 = vcmp.eq.f32.partialorder %v1132, %v1191
        %vm1210 = vcmp.eq.f32.partialorder %v1136, %v1187
        %vm1211 = vcmp.eq.f32.partialorder %v1138, %v1191
        %vm1212 = vcmp.eq.f32.partialorder %v1142, %v1187
        %vm1213 = vcmp.eq.f32.partialorder %v1144, %v1191
        %vm1214 = vcmp.eq.f32.partialorder %v1148, %v1187
        %vm1215 = vcmp.eq.f32.partialorder %v1150, %v1191
        %vm1216 = vcmp.eq.f32.partialorder %v1154, %v1187
        %vm1217 = vcmp.eq.f32.partialorder %v1156, %v1191
        %vm1218 = vcmp.eq.f32.partialorder %v1160, %v1187
        %vm1219 = vcmp.eq.f32.partialorder %v1162, %v1191
        %vm1220 = vcmp.eq.f32.partialorder %v1166, %v1187
        %vm1221 = vcmp.eq.f32.partialorder %v1168, %v1191
        %vm1222 = vcmp.eq.f32.partialorder %v1172, %v1187
        %vm1223 = vcmp.eq.f32.partialorder %v1174, %v1191
        %vm1224 = vcmp.eq.f32.partialorder %v1178, %v1187
        %vm1225 = vcmp.eq.f32.partialorder %v1180, %v1191
        %v1226 = vsel %vm1194, 1, 0
        %v1227 = vsel %vm1195, 1, 0
        %v1228 = vsel %vm1196, 1, 0
        %v1229 = vsel %vm1197, 1, 0
        %v1230 = vsel %vm1198, 1, 0
        %v1231 = vsel %vm1199, 1, 0
        %v1232 = vsel %vm1200, 1, 0
        %v1233 = vsel %vm1201, 1, 0
        %v1234 = vsel %vm1202, 1, 0
        %v1235 = vsel %vm1203, 1, 0
        %v1236 = vsel %vm1204, 1, 0
        %v1237 = vsel %vm1205, 1, 0
        %v1238 = vsel %vm1206, 1, 0
        %v1239 = vsel %vm1207, 1, 0
        %v1240 = vsel %vm1208, 1, 0
        %v1241 = vsel %vm1209, 1, 0
        %v1242 = vsel %vm1210, 1, 0
        %v1243 = vsel %vm1211, 1, 0
        %v1244 = vsel %vm1212, 1, 0
        %v1245 = vsel %vm1213, 1, 0
        %v1246 = vsel %vm1214, 1, 0
        %v1247 = vsel %vm1215, 1, 0
        %v1248 = vsel %vm1216, 1, 0
        %v1249 = vsel %vm1217, 1, 0
        %v1250 = vsel %vm1218, 1, 0
        %v1251 = vsel %vm1219, 1, 0
        %v1252 = vsel %vm1220, 1, 0
        %v1253 = vsel %vm1221, 1, 0
        %v1254 = vsel %vm1222, 1, 0
        %v1255 = vsel %vm1223, 1, 0
        %v1256 = vsel %vm1224, 1, 0
        %v1257 = vsel %vm1225, 1, 0
        %v1258 = vcvt.s32.f32 %v1226
        %v1259 = vcvt.s32.f32 %v1227
        %v1260 = vcvt.s32.f32 %v1228
        %v1261 = vcvt.s32.f32 %v1229
        %v1262 = vcvt.s32.f32 %v1230
        %v1263 = vcvt.s32.f32 %v1231
        %v1264 = vcvt.s32.f32 %v1232
        %v1265 = vcvt.s32.f32 %v1233
        %v1266 = vcvt.s32.f32 %v1234
        %v1267 = vcvt.s32.f32 %v1235
        %v1268 = vcvt.s32.f32 %v1236
        %v1269 = vcvt.s32.f32 %v1237
        %v1270 = vcvt.s32.f32 %v1238
        %v1271 = vcvt.s32.f32 %v1239
        %v1272 = vcvt.s32.f32 %v1240
        %v1273 = vcvt.s32.f32 %v1241
        %v1274 = vcvt.s32.f32 %v1242
        %v1275 = vcvt.s32.f32 %v1243
        %v1276 = vcvt.s32.f32 %v1244
        %v1277 = vcvt.s32.f32 %v1245
        %v1278 = vcvt.s32.f32 %v1246
        %v1279 = vcvt.s32.f32 %v1247
        %v1280 = vcvt.s32.f32 %v1248
        %v1281 = vcvt.s32.f32 %v1249
        %v1282 = vcvt.s32.f32 %v1250
        %v1283 = vcvt.s32.f32 %v1251
        %v1284 = vcvt.s32.f32 %v1252
        %v1285 = vcvt.s32.f32 %v1253
        %v1286 = vcvt.s32.f32 %v1254
        %v1287 = vcvt.s32.f32 %v1255
        %v1288 = vcvt.s32.f32 %v1256
        %v1289 = vcvt.s32.f32 %v1257
        %v1290 = vmul.f32 %v879, %v1258
        %v1291 = vmul.f32 %v881, %v1259
        %v1292 = vmul.f32 %v885, %v1260
        %v1293 = vmul.f32 %v887, %v1261
        %v1294 = vmul.f32 %v891, %v1262
        %v1295 = vmul.f32 %v893, %v1263
        %v1296 = vmul.f32 %v897, %v1264
        %v1297 = vmul.f32 %v899, %v1265
        %v1298 = vmul.f32 %v903, %v1266
        %v1299 = vmul.f32 %v905, %v1267
        %v1300 = vmul.f32 %v909, %v1268
        %v1301 = vmul.f32 %v911, %v1269
        %v1302 = vmul.f32 %v915, %v1270
        %v1303 = vmul.f32 %v917, %v1271
        %v1304 = vmul.f32 %v921, %v1272
        %v1305 = vmul.f32 %v923, %v1273
        %v1306 = vmul.f32 %v927, %v1274
        %v1307 = vmul.f32 %v929, %v1275
        %v1308 = vmul.f32 %v933, %v1276
        %v1309 = vmul.f32 %v935, %v1277
        %v1310 = vmul.f32 %v939, %v1278
        %v1311 = vmul.f32 %v941, %v1279
        %v1312 = vmul.f32 %v945, %v1280
        %v1313 = vmul.f32 %v947, %v1281
        %v1314 = vmul.f32 %v951, %v1282
        %v1315 = vmul.f32 %v953, %v1283
        %v1316 = vmul.f32 %v957, %v1284
        %v1317 = vmul.f32 %v959, %v1285
        %v1318 = vmul.f32 %v963, %v1286
        %v1319 = vmul.f32 %v965, %v1287
        %v1320 = vmul.f32 %v969, %v1288
        %v1321 = vmul.f32 %v971, %v1289
        %v1322 = vlaneseq
        %v1323 = vshrl.u32 %v1322, 7
        %v1324 = vsub.s32 0, %v1323
        %v1325 = vrot.slane %v484, %v1324
        %v1326 = vlaneseq
        %v1327 = vshrl.u32 %v1326, 7
        %v1328 = vsub.s32 1, %v1327
        %v1329 = vrot.slane %v484, %v1328
        %v1330 = vlaneseq
        %v1331 = vshrl.u32 %v1330, 7
        %v1332 = vsub.s32 2, %v1331
        %v1333 = vrot.slane %v484, %v1332
        %v1334 = vlaneseq
        %v1335 = vshrl.u32 %v1334, 7
        %v1336 = vsub.s32 3, %v1335
        %v1337 = vrot.slane %v484, %v1336
        %v1338 = vlaneseq
        %v1339 = vshrl.u32 %v1338, 7
        %v1340 = vsub.s32 4, %v1339
        %v1341 = vrot.slane %v484, %v1340
        %v1342 = vlaneseq
        %v1343 = vshrl.u32 %v1342, 7
        %v1344 = vsub.s32 5, %v1343
        %v1345 = vrot.slane %v484, %v1344
        %v1346 = vlaneseq
        %v1347 = vshrl.u32 %v1346, 7
        %v1348 = vsub.s32 6, %v1347
        %v1349 = vrot.slane %v484, %v1348
        %v1350 = vlaneseq
        %v1351 = vshrl.u32 %v1350, 7
        %v1352 = vsub.s32 7, %v1351
        %v1353 = vrot.slane %v484, %v1352
        %v1354 = vlaneseq
        %v1355 = vshrl.u32 %v1354, 7
        %v1356 = vsub.s32 0, %v1355
        %v1357 = vrot.slane %v485, %v1356
        %v1358 = vlaneseq
        %v1359 = vshrl.u32 %v1358, 7
        %v1360 = vsub.s32 1, %v1359
        %v1361 = vrot.slane %v485, %v1360
        %v1362 = vlaneseq
        %v1363 = vshrl.u32 %v1362, 7
        %v1364 = vsub.s32 2, %v1363
        %v1365 = vrot.slane %v485, %v1364
        %v1366 = vlaneseq
        %v1367 = vshrl.u32 %v1366, 7
        %v1368 = vsub.s32 3, %v1367
        %v1369 = vrot.slane %v485, %v1368
        %v1370 = vlaneseq
        %v1371 = vshrl.u32 %v1370, 7
        %v1372 = vsub.s32 4, %v1371
        %v1373 = vrot.slane %v485, %v1372
        %v1374 = vlaneseq
        %v1375 = vshrl.u32 %v1374, 7
        %v1376 = vsub.s32 5, %v1375
        %v1377 = vrot.slane %v485, %v1376
        %v1378 = vlaneseq
        %v1379 = vshrl.u32 %v1378, 7
        %v1380 = vsub.s32 6, %v1379
        %v1381 = vrot.slane %v485, %v1380
        %v1382 = vlaneseq
        %v1383 = vshrl.u32 %v1382, 7
        %v1384 = vsub.s32 7, %v1383
        %v1385 = vrot.slane %v485, %v1384
        %v1386 = vmul.f32 %v1325, %v500
        %v1387 = vmul.f32 %v1325, %v501
        %v1388 = vmul.f32 %v1329, %v500
        %v1389 = vmul.f32 %v1329, %v501
        %v1390 = vmul.f32 %v1333, %v500
        %v1391 = vmul.f32 %v1333, %v501
        %v1392 = vmul.f32 %v1337, %v500
        %v1393 = vmul.f32 %v1337, %v501
        %v1394 = vmul.f32 %v1341, %v500
        %v1395 = vmul.f32 %v1341, %v501
        %v1396 = vmul.f32 %v1345, %v500
        %v1397 = vmul.f32 %v1345, %v501
        %v1398 = vmul.f32 %v1349, %v500
        %v1399 = vmul.f32 %v1349, %v501
        %v1400 = vmul.f32 %v1353, %v500
        %v1401 = vmul.f32 %v1353, %v501
        %v1402 = vmul.f32 %v1357, %v500
        %v1403 = vmul.f32 %v1357, %v501
        %v1404 = vmul.f32 %v1361, %v500
        %v1405 = vmul.f32 %v1361, %v501
        %v1406 = vmul.f32 %v1365, %v500
        %v1407 = vmul.f32 %v1365, %v501
        %v1408 = vmul.f32 %v1369, %v500
        %v1409 = vmul.f32 %v1369, %v501
        %v1410 = vmul.f32 %v1373, %v500
        %v1411 = vmul.f32 %v1373, %v501
        %v1412 = vmul.f32 %v1377, %v500
        %v1413 = vmul.f32 %v1377, %v501
        %v1414 = vmul.f32 %v1381, %v500
        %v1415 = vmul.f32 %v1381, %v501
        %v1416 = vmul.f32 %v1385, %v500
        %v1417 = vmul.f32 %v1385, %v501
        %1418 = vmatprep.subr.mxu0 0.0
        %1419 = vmatpush1.msra.mxu0 %v1386
        %1420 = vmatprep.subr.mxu0 0.0
        %1421 = vmatpush1.msra.mxu0 %v1387
        %1422 = vmatprep.subr.mxu0 0.0
        %1423 = vmatpush1.msra.mxu0 %v1388
        %1424 = vmatprep.subr.mxu0 0.0
        %1425 = vmatpush1.msra.mxu0 %v1389
        %1426 = vmatprep.subr.mxu0 0.0
        %1427 = vmatpush1.msra.mxu0 %v1390
        %1428 = vmatprep.subr.mxu0 0.0
        %1429 = vmatpush1.msra.mxu0 %v1391
        %1430 = vmatprep.subr.mxu0 0.0
        %1431 = vmatpush1.msra.mxu0 %v1392
        %1432 = vmatprep.subr.mxu0 0.0
        %1433 = vmatpush1.msra.mxu0 %v1393
        %1434 = vmatprep.subr.mxu0 0.0
        %1435 = vmatpush1.msra.mxu0 %v1394
        %1436 = vmatprep.subr.mxu0 0.0
        %1437 = vmatpush1.msra.mxu0 %v1395
        %1438 = vmatprep.subr.mxu0 0.0
        %1439 = vmatpush1.msra.mxu0 %v1396
        %1440 = vmatprep.subr.mxu0 0.0
        %1441 = vmatpush1.msra.mxu0 %v1397
        %1442 = vmatprep.subr.mxu0 0.0
        %1443 = vmatpush1.msra.mxu0 %v1398
        %1444 = vmatprep.subr.mxu0 0.0
        %1445 = vmatpush1.msra.mxu0 %v1399
        %1446 = vmatprep.subr.mxu0 0.0
        %1447 = vmatpush1.msra.mxu0 %v1400
        %1448 = vmatprep.subr.mxu0 0.0
        %1449 = vmatpush1.msra.mxu0 %v1401
        %1450 = vmatprep.subr.mxu0 0.0
        %1451 = vmatpush1.msra.mxu0 %v1402
        %1452 = vmatprep.subr.mxu0 0.0
        %1453 = vmatpush1.msra.mxu0 %v1403
        %1454 = vmatprep.subr.mxu0 0.0
        %1455 = vmatpush1.msra.mxu0 %v1404
        %1456 = vmatprep.subr.mxu0 0.0
        %1457 = vmatpush1.msra.mxu0 %v1405
        %1458 = vmatprep.subr.mxu0 0.0
        %1459 = vmatpush1.msra.mxu0 %v1406
        %1460 = vmatprep.subr.mxu0 0.0
        %1461 = vmatpush1.msra.mxu0 %v1407
        %1462 = vmatprep.subr.mxu0 0.0
        %1463 = vmatpush1.msra.mxu0 %v1408
        %1464 = vmatprep.subr.mxu0 0.0
        %1465 = vmatpush1.msra.mxu0 %v1409
        %1466 = vmatprep.subr.mxu0 0.0
        %1467 = vmatpush1.msra.mxu0 %v1410
        %1468 = vmatprep.subr.mxu0 0.0
        %1469 = vmatpush1.msra.mxu0 %v1411
        %1470 = vmatprep.subr.mxu0 0.0
        %1471 = vmatpush1.msra.mxu0 %v1412
        %1472 = vmatprep.subr.mxu0 0.0
        %1473 = vmatpush1.msra.mxu0 %v1413
        %1474 = vmatprep.subr.mxu0 0.0
        %1475 = vmatpush1.msra.mxu0 %v1414
        %1476 = vmatprep.subr.mxu0 0.0
        %1477 = vmatpush1.msra.mxu0 %v1415
        %1478 = vmatprep.subr.mxu0 0.0
        %1479 = vmatpush1.msra.mxu0 %v1416
        %1480 = vmatprep.subr.mxu0 0.0
        %1481 = vmatpush1.msra.mxu0 %v1417
        %1482 = vmatprep.mubr.f32.mxu0 %v1291
        %1483 = vmatmul.mubr.f32.gmra.mrb[0].mxu0 %v1290
        %v1484 = vpop.f32.mrb[0].mxu0
        %v1485 = vadd.f32 0.0, %v1484
        %v1486 = vpop.f32.mrb[0].mxu0
        %1487 = vmatprep.mubr.f32.mxu0 %v1293
        %1488 = vmatmul.mubr.f32.gmra.mrb[0].mxu0 %v1292
        %v1489 = vpop.f32.mrb[0].mxu0
        %v1490 = vadd.f32 0.0, %v1489
        %v1491 = vpop.f32.mrb[0].mxu0
        %1492 = vdwg.mxu0
        %v1493 = vlaneseq
        %v1494 = vshrl.u32 %v1493, 7
        %v1495 = vsub.s32 0, %v1494
        %v1496 = vrot.slane %v486, %v1495
        %v1497 = vlaneseq
        %v1498 = vshrl.u32 %v1497, 7
        %v1499 = vsub.s32 1, %v1498
        %v1500 = vrot.slane %v486, %v1499
        %v1501 = vlaneseq
        %v1502 = vshrl.u32 %v1501, 7
        %v1503 = vsub.s32 2, %v1502
        %v1504 = vrot.slane %v486, %v1503
        %v1505 = vlaneseq
        %v1506 = vshrl.u32 %v1505, 7
        %v1507 = vsub.s32 3, %v1506
        %v1508 = vrot.slane %v486, %v1507
        %v1509 = vlaneseq
        %v1510 = vshrl.u32 %v1509, 7
        %v1511 = vsub.s32 4, %v1510
        %v1512 = vrot.slane %v486, %v1511
        %v1513 = vlaneseq
        %v1514 = vshrl.u32 %v1513, 7
        %v1515 = vsub.s32 5, %v1514
        %v1516 = vrot.slane %v486, %v1515
        %v1517 = vlaneseq
        %v1518 = vshrl.u32 %v1517, 7
        %v1519 = vsub.s32 6, %v1518
        %v1520 = vrot.slane %v486, %v1519
        %v1521 = vlaneseq
        %v1522 = vshrl.u32 %v1521, 7
        %v1523 = vsub.s32 7, %v1522
        %v1524 = vrot.slane %v486, %v1523
        %v1525 = vlaneseq
        %v1526 = vshrl.u32 %v1525, 7
        %v1527 = vsub.s32 0, %v1526
        %v1528 = vrot.slane %v487, %v1527
        %v1529 = vlaneseq
        %v1530 = vshrl.u32 %v1529, 7
        %v1531 = vsub.s32 1, %v1530
        %v1532 = vrot.slane %v487, %v1531
        %v1533 = vlaneseq
        %v1534 = vshrl.u32 %v1533, 7
        %v1535 = vsub.s32 2, %v1534
        %v1536 = vrot.slane %v487, %v1535
        %v1537 = vlaneseq
        %v1538 = vshrl.u32 %v1537, 7
        %v1539 = vsub.s32 3, %v1538
        %v1540 = vrot.slane %v487, %v1539
        %v1541 = vlaneseq
        %v1542 = vshrl.u32 %v1541, 7
        %v1543 = vsub.s32 4, %v1542
        %v1544 = vrot.slane %v487, %v1543
        %v1545 = vlaneseq
        %v1546 = vshrl.u32 %v1545, 7
        %v1547 = vsub.s32 5, %v1546
        %v1548 = vrot.slane %v487, %v1547
        %v1549 = vlaneseq
        %v1550 = vshrl.u32 %v1549, 7
        %v1551 = vsub.s32 6, %v1550
        %v1552 = vrot.slane %v487, %v1551
        %v1553 = vlaneseq
        %v1554 = vshrl.u32 %v1553, 7
        %v1555 = vsub.s32 7, %v1554
        %v1556 = vrot.slane %v487, %v1555
        %v1557 = vmul.f32 %v1496, %v502
        %v1558 = vmul.f32 %v1496, %v503
        %v1559 = vmul.f32 %v1500, %v502
        %v1560 = vmul.f32 %v1500, %v503
        %v1561 = vmul.f32 %v1504, %v502
        %v1562 = vmul.f32 %v1504, %v503
        %v1563 = vmul.f32 %v1508, %v502
        %v1564 = vmul.f32 %v1508, %v503
        %v1565 = vmul.f32 %v1512, %v502
        %v1566 = vmul.f32 %v1512, %v503
        %v1567 = vmul.f32 %v1516, %v502
        %v1568 = vmul.f32 %v1516, %v503
        %v1569 = vmul.f32 %v1520, %v502
        %v1570 = vmul.f32 %v1520, %v503
        %v1571 = vmul.f32 %v1524, %v502
        %v1572 = vmul.f32 %v1524, %v503
        %v1573 = vmul.f32 %v1528, %v502
        %v1574 = vmul.f32 %v1528, %v503
        %v1575 = vmul.f32 %v1532, %v502
        %v1576 = vmul.f32 %v1532, %v503
        %v1577 = vmul.f32 %v1536, %v502
        %v1578 = vmul.f32 %v1536, %v503
        %v1579 = vmul.f32 %v1540, %v502
        %v1580 = vmul.f32 %v1540, %v503
        %v1581 = vmul.f32 %v1544, %v502
        %v1582 = vmul.f32 %v1544, %v503
        %v1583 = vmul.f32 %v1548, %v502
        %v1584 = vmul.f32 %v1548, %v503
        %v1585 = vmul.f32 %v1552, %v502
        %v1586 = vmul.f32 %v1552, %v503
        %v1587 = vmul.f32 %v1556, %v502
        %v1588 = vmul.f32 %v1556, %v503
        %1589 = vmatprep.subr.mxu0 0.0
        %1590 = vmatpush1.msra.mxu0 %v1557
        %1591 = vmatprep.subr.mxu0 0.0
        %1592 = vmatpush1.msra.mxu0 %v1558
        %1593 = vmatprep.subr.mxu0 0.0
        %1594 = vmatpush1.msra.mxu0 %v1559
        %1595 = vmatprep.subr.mxu0 0.0
        %1596 = vmatpush1.msra.mxu0 %v1560
        %1597 = vmatprep.subr.mxu0 0.0
        %1598 = vmatpush1.msra.mxu0 %v1561
        %1599 = vmatprep.subr.mxu0 0.0
        %1600 = vmatpush1.msra.mxu0 %v1562
        %1601 = vmatprep.subr.mxu0 0.0
        %1602 = vmatpush1.msra.mxu0 %v1563
        %1603 = vmatprep.subr.mxu0 0.0
        %1604 = vmatpush1.msra.mxu0 %v1564
        %1605 = vmatprep.subr.mxu0 0.0
        %1606 = vmatpush1.msra.mxu0 %v1565
        %1607 = vmatprep.subr.mxu0 0.0
        %1608 = vmatpush1.msra.mxu0 %v1566
        %1609 = vmatprep.subr.mxu0 0.0
        %1610 = vmatpush1.msra.mxu0 %v1567
        %1611 = vmatprep.subr.mxu0 0.0
        %1612 = vmatpush1.msra.mxu0 %v1568
        %1613 = vmatprep.subr.mxu0 0.0
        %1614 = vmatpush1.msra.mxu0 %v1569
        %1615 = vmatprep.subr.mxu0 0.0
        %1616 = vmatpush1.msra.mxu0 %v1570
        %1617 = vmatprep.subr.mxu0 0.0
        %1618 = vmatpush1.msra.mxu0 %v1571
        %1619 = vmatprep.subr.mxu0 0.0
        %1620 = vmatpush1.msra.mxu0 %v1572
        %1621 = vmatprep.subr.mxu0 0.0
        %1622 = vmatpush1.msra.mxu0 %v1573
        %1623 = vmatprep.subr.mxu0 0.0
        %1624 = vmatpush1.msra.mxu0 %v1574
        %1625 = vmatprep.subr.mxu0 0.0
        %1626 = vmatpush1.msra.mxu0 %v1575
        %1627 = vmatprep.subr.mxu0 0.0
        %1628 = vmatpush1.msra.mxu0 %v1576
        %1629 = vmatprep.subr.mxu0 0.0
        %1630 = vmatpush1.msra.mxu0 %v1577
        %1631 = vmatprep.subr.mxu0 0.0
        %1632 = vmatpush1.msra.mxu0 %v1578
        %1633 = vmatprep.subr.mxu0 0.0
        %1634 = vmatpush1.msra.mxu0 %v1579
        %1635 = vmatprep.subr.mxu0 0.0
        %1636 = vmatpush1.msra.mxu0 %v1580
        %1637 = vmatprep.subr.mxu0 0.0
        %1638 = vmatpush1.msra.mxu0 %v1581
        %1639 = vmatprep.subr.mxu0 0.0
        %1640 = vmatpush1.msra.mxu0 %v1582
        %1641 = vmatprep.subr.mxu0 0.0
        %1642 = vmatpush1.msra.mxu0 %v1583
        %1643 = vmatprep.subr.mxu0 0.0
        %1644 = vmatpush1.msra.mxu0 %v1584
        %1645 = vmatprep.subr.mxu0 0.0
        %1646 = vmatpush1.msra.mxu0 %v1585
        %1647 = vmatprep.subr.mxu0 0.0
        %1648 = vmatpush1.msra.mxu0 %v1586
        %1649 = vmatprep.subr.mxu0 0.0
        %1650 = vmatpush1.msra.mxu0 %v1587
        %1651 = vmatprep.subr.mxu0 0.0
        %1652 = vmatpush1.msra.mxu0 %v1588
        %1653 = vmatprep.mubr.f32.mxu0 %v1295
        %1654 = vmatmul.mubr.f32.gmra.mrb[0].mxu0 %v1294
        %v1655 = vpop.f32.mrb[0].mxu0
        %v1656 = vadd.f32 0.0, %v1655
        %v1657 = vpop.f32.mrb[0].mxu0
        %1658 = vmatprep.mubr.f32.mxu0 %v1297
        %1659 = vmatmul.mubr.f32.gmra.mrb[0].mxu0 %v1296
        %v1660 = vpop.f32.mrb[0].mxu0
        %v1661 = vadd.f32 0.0, %v1660
        %v1662 = vpop.f32.mrb[0].mxu0
        %1663 = vdwg.mxu0
        %v1664 = vlaneseq
        %v1665 = vshrl.u32 %v1664, 7
        %v1666 = vsub.s32 0, %v1665
        %v1667 = vrot.slane %v488, %v1666
        %v1668 = vlaneseq
        %v1669 = vshrl.u32 %v1668, 7
        %v1670 = vsub.s32 1, %v1669
        %v1671 = vrot.slane %v488, %v1670
        %v1672 = vlaneseq
        %v1673 = vshrl.u32 %v1672, 7
        %v1674 = vsub.s32 2, %v1673
        %v1675 = vrot.slane %v488, %v1674
        %v1676 = vlaneseq
        %v1677 = vshrl.u32 %v1676, 7
        %v1678 = vsub.s32 3, %v1677
        %v1679 = vrot.slane %v488, %v1678
        %v1680 = vlaneseq
        %v1681 = vshrl.u32 %v1680, 7
        %v1682 = vsub.s32 4, %v1681
        %v1683 = vrot.slane %v488, %v1682
        %v1684 = vlaneseq
        %v1685 = vshrl.u32 %v1684, 7
        %v1686 = vsub.s32 5, %v1685
        %v1687 = vrot.slane %v488, %v1686
        %v1688 = vlaneseq
        %v1689 = vshrl.u32 %v1688, 7
        %v1690 = vsub.s32 6, %v1689
        %v1691 = vrot.slane %v488, %v1690
        %v1692 = vlaneseq
        %v1693 = vshrl.u32 %v1692, 7
        %v1694 = vsub.s32 7, %v1693
        %v1695 = vrot.slane %v488, %v1694
        %v1696 = vlaneseq
        %v1697 = vshrl.u32 %v1696, 7
        %v1698 = vsub.s32 0, %v1697
        %v1699 = vrot.slane %v489, %v1698
        %v1700 = vlaneseq
        %v1701 = vshrl.u32 %v1700, 7
        %v1702 = vsub.s32 1, %v1701
        %v1703 = vrot.slane %v489, %v1702
        %v1704 = vlaneseq
        %v1705 = vshrl.u32 %v1704, 7
        %v1706 = vsub.s32 2, %v1705
        %v1707 = vrot.slane %v489, %v1706
        %v1708 = vlaneseq
        %v1709 = vshrl.u32 %v1708, 7
        %v1710 = vsub.s32 3, %v1709
        %v1711 = vrot.slane %v489, %v1710
        %v1712 = vlaneseq
        %v1713 = vshrl.u32 %v1712, 7
        %v1714 = vsub.s32 4, %v1713
        %v1715 = vrot.slane %v489, %v1714
        %v1716 = vlaneseq
        %v1717 = vshrl.u32 %v1716, 7
        %v1718 = vsub.s32 5, %v1717
        %v1719 = vrot.slane %v489, %v1718
        %v1720 = vlaneseq
        %v1721 = vshrl.u32 %v1720, 7
        %v1722 = vsub.s32 6, %v1721
        %v1723 = vrot.slane %v489, %v1722
        %v1724 = vlaneseq
        %v1725 = vshrl.u32 %v1724, 7
        %v1726 = vsub.s32 7, %v1725
        %v1727 = vrot.slane %v489, %v1726
        %v1728 = vmul.f32 %v1667, %v504
        %v1729 = vmul.f32 %v1667, %v505
        %v1730 = vmul.f32 %v1671, %v504
        %v1731 = vmul.f32 %v1671, %v505
        %v1732 = vmul.f32 %v1675, %v504
        %v1733 = vmul.f32 %v1675, %v505
        %v1734 = vmul.f32 %v1679, %v504
        %v1735 = vmul.f32 %v1679, %v505
        %v1736 = vmul.f32 %v1683, %v504
        %v1737 = vmul.f32 %v1683, %v505
        %v1738 = vmul.f32 %v1687, %v504
        %v1739 = vmul.f32 %v1687, %v505
        %v1740 = vmul.f32 %v1691, %v504
        %v1741 = vmul.f32 %v1691, %v505
        %v1742 = vmul.f32 %v1695, %v504
        %v1743 = vmul.f32 %v1695, %v505
        %v1744 = vmul.f32 %v1699, %v504
        %v1745 = vmul.f32 %v1699, %v505
        %v1746 = vmul.f32 %v1703, %v504
        %v1747 = vmul.f32 %v1703, %v505
        %v1748 = vmul.f32 %v1707, %v504
        %v1749 = vmul.f32 %v1707, %v505
        %v1750 = vmul.f32 %v1711, %v504
        %v1751 = vmul.f32 %v1711, %v505
        %v1752 = vmul.f32 %v1715, %v504
        %v1753 = vmul.f32 %v1715, %v505
        %v1754 = vmul.f32 %v1719, %v504
        %v1755 = vmul.f32 %v1719, %v505
        %v1756 = vmul.f32 %v1723, %v504
        %v1757 = vmul.f32 %v1723, %v505
        %v1758 = vmul.f32 %v1727, %v504
        %v1759 = vmul.f32 %v1727, %v505
        %1760 = vmatprep.subr.mxu0 0.0
        %1761 = vmatpush1.msra.mxu0 %v1728
        %1762 = vmatprep.subr.mxu0 0.0
        %1763 = vmatpush1.msra.mxu0 %v1729
        %1764 = vmatprep.subr.mxu0 0.0
        %1765 = vmatpush1.msra.mxu0 %v1730
        %1766 = vmatprep.subr.mxu0 0.0
        %1767 = vmatpush1.msra.mxu0 %v1731
        %1768 = vmatprep.subr.mxu0 0.0
        %1769 = vmatpush1.msra.mxu0 %v1732
        %1770 = vmatprep.subr.mxu0 0.0
        %1771 = vmatpush1.msra.mxu0 %v1733
        %1772 = vmatprep.subr.mxu0 0.0
        %1773 = vmatpush1.msra.mxu0 %v1734
        %1774 = vmatprep.subr.mxu0 0.0
        %1775 = vmatpush1.msra.mxu0 %v1735
        %1776 = vmatprep.subr.mxu0 0.0
        %1777 = vmatpush1.msra.mxu0 %v1736
        %1778 = vmatprep.subr.mxu0 0.0
        %1779 = vmatpush1.msra.mxu0 %v1737
        %1780 = vmatprep.subr.mxu0 0.0
        %1781 = vmatpush1.msra.mxu0 %v1738
        %1782 = vmatprep.subr.mxu0 0.0
        %1783 = vmatpush1.msra.mxu0 %v1739
        %1784 = vmatprep.subr.mxu0 0.0
        %1785 = vmatpush1.msra.mxu0 %v1740
        %1786 = vmatprep.subr.mxu0 0.0
        %1787 = vmatpush1.msra.mxu0 %v1741
        %1788 = vmatprep.subr.mxu0 0.0
        %1789 = vmatpush1.msra.mxu0 %v1742
        %1790 = vmatprep.subr.mxu0 0.0
        %1791 = vmatpush1.msra.mxu0 %v1743
        %1792 = vmatprep.subr.mxu0 0.0
        %1793 = vmatpush1.msra.mxu0 %v1744
        %1794 = vmatprep.subr.mxu0 0.0
        %1795 = vmatpush1.msra.mxu0 %v1745
        %1796 = vmatprep.subr.mxu0 0.0
        %1797 = vmatpush1.msra.mxu0 %v1746
        %1798 = vmatprep.subr.mxu0 0.0
        %1799 = vmatpush1.msra.mxu0 %v1747
        %1800 = vmatprep.subr.mxu0 0.0
        %1801 = vmatpush1.msra.mxu0 %v1748
        %1802 = vmatprep.subr.mxu0 0.0
        %1803 = vmatpush1.msra.mxu0 %v1749
        %1804 = vmatprep.subr.mxu0 0.0
        %1805 = vmatpush1.msra.mxu0 %v1750
        %1806 = vmatprep.subr.mxu0 0.0
        %1807 = vmatpush1.msra.mxu0 %v1751
        %1808 = vmatprep.subr.mxu0 0.0
        %1809 = vmatpush1.msra.mxu0 %v1752
        %1810 = vmatprep.subr.mxu0 0.0
        %1811 = vmatpush1.msra.mxu0 %v1753
        %1812 = vmatprep.subr.mxu0 0.0
        %1813 = vmatpush1.msra.mxu0 %v1754
        %1814 = vmatprep.subr.mxu0 0.0
        %1815 = vmatpush1.msra.mxu0 %v1755
        %1816 = vmatprep.subr.mxu0 0.0
        %1817 = vmatpush1.msra.mxu0 %v1756
        %1818 = vmatprep.subr.mxu0 0.0
        %1819 = vmatpush1.msra.mxu0 %v1757
        %1820 = vmatprep.subr.mxu0 0.0
        %1821 = vmatpush1.msra.mxu0 %v1758
        %1822 = vmatprep.subr.mxu0 0.0
        %1823 = vmatpush1.msra.mxu0 %v1759
        %1824 = vmatprep.mubr.f32.mxu0 %v1299
        %1825 = vmatmul.mubr.f32.gmra.mrb[0].mxu0 %v1298
        %v1826 = vpop.f32.mrb[0].mxu0
        %v1827 = vadd.f32 0.0, %v1826
        %v1828 = vpop.f32.mrb[0].mxu0
        %1829 = vmatprep.mubr.f32.mxu0 %v1301
        %1830 = vmatmul.mubr.f32.gmra.mrb[0].mxu0 %v1300
        %v1831 = vpop.f32.mrb[0].mxu0
        %v1832 = vadd.f32 0.0, %v1831
        %v1833 = vpop.f32.mrb[0].mxu0
        %1834 = vdwg.mxu0
        %v1835 = vlaneseq
        %v1836 = vshrl.u32 %v1835, 7
        %v1837 = vsub.s32 0, %v1836
        %v1838 = vrot.slane %v490, %v1837
        %v1839 = vlaneseq
        %v1840 = vshrl.u32 %v1839, 7
        %v1841 = vsub.s32 1, %v1840
        %v1842 = vrot.slane %v490, %v1841
        %v1843 = vlaneseq
        %v1844 = vshrl.u32 %v1843, 7
        %v1845 = vsub.s32 2, %v1844
        %v1846 = vrot.slane %v490, %v1845
        %v1847 = vlaneseq
        %v1848 = vshrl.u32 %v1847, 7
        %v1849 = vsub.s32 3, %v1848
        %v1850 = vrot.slane %v490, %v1849
        %v1851 = vlaneseq
        %v1852 = vshrl.u32 %v1851, 7
        %v1853 = vsub.s32 4, %v1852
        %v1854 = vrot.slane %v490, %v1853
        %v1855 = vlaneseq
        %v1856 = vshrl.u32 %v1855, 7
        %v1857 = vsub.s32 5, %v1856
        %v1858 = vrot.slane %v490, %v1857
        %v1859 = vlaneseq
        %v1860 = vshrl.u32 %v1859, 7
        %v1861 = vsub.s32 6, %v1860
        %v1862 = vrot.slane %v490, %v1861
        %v1863 = vlaneseq
        %v1864 = vshrl.u32 %v1863, 7
        %v1865 = vsub.s32 7, %v1864
        %v1866 = vrot.slane %v490, %v1865
        %v1867 = vlaneseq
        %v1868 = vshrl.u32 %v1867, 7
        %v1869 = vsub.s32 0, %v1868
        %v1870 = vrot.slane %v491, %v1869
        %v1871 = vlaneseq
        %v1872 = vshrl.u32 %v1871, 7
        %v1873 = vsub.s32 1, %v1872
        %v1874 = vrot.slane %v491, %v1873
        %v1875 = vlaneseq
        %v1876 = vshrl.u32 %v1875, 7
        %v1877 = vsub.s32 2, %v1876
        %v1878 = vrot.slane %v491, %v1877
        %v1879 = vlaneseq
        %v1880 = vshrl.u32 %v1879, 7
        %v1881 = vsub.s32 3, %v1880
        %v1882 = vrot.slane %v491, %v1881
        %v1883 = vlaneseq
        %v1884 = vshrl.u32 %v1883, 7
        %v1885 = vsub.s32 4, %v1884
        %v1886 = vrot.slane %v491, %v1885
        %v1887 = vlaneseq
        %v1888 = vshrl.u32 %v1887, 7
        %v1889 = vsub.s32 5, %v1888
        %v1890 = vrot.slane %v491, %v1889
        %v1891 = vlaneseq
        %v1892 = vshrl.u32 %v1891, 7
        %v1893 = vsub.s32 6, %v1892
        %v1894 = vrot.slane %v491, %v1893
        %v1895 = vlaneseq
        %v1896 = vshrl.u32 %v1895, 7
        %v1897 = vsub.s32 7, %v1896
        %v1898 = vrot.slane %v491, %v1897
        %v1899 = vmul.f32 %v1838, %v506
        %v1900 = vmul.f32 %v1838, %v507
        %v1901 = vmul.f32 %v1842, %v506
        %v1902 = vmul.f32 %v1842, %v507
        %v1903 = vmul.f32 %v1846, %v506
        %v1904 = vmul.f32 %v1846, %v507
        %v1905 = vmul.f32 %v1850, %v506
        %v1906 = vmul.f32 %v1850, %v507
        %v1907 = vmul.f32 %v1854, %v506
        %v1908 = vmul.f32 %v1854, %v507
        %v1909 = vmul.f32 %v1858, %v506
        %v1910 = vmul.f32 %v1858, %v507
        %v1911 = vmul.f32 %v1862, %v506
        %v1912 = vmul.f32 %v1862, %v507
        %v1913 = vmul.f32 %v1866, %v506
        %v1914 = vmul.f32 %v1866, %v507
        %v1915 = vmul.f32 %v1870, %v506
        %v1916 = vmul.f32 %v1870, %v507
        %v1917 = vmul.f32 %v1874, %v506
        %v1918 = vmul.f32 %v1874, %v507
        %v1919 = vmul.f32 %v1878, %v506
        %v1920 = vmul.f32 %v1878, %v507
        %v1921 = vmul.f32 %v1882, %v506
        %v1922 = vmul.f32 %v1882, %v507
        %v1923 = vmul.f32 %v1886, %v506
        %v1924 = vmul.f32 %v1886, %v507
        %v1925 = vmul.f32 %v1890, %v506
        %v1926 = vmul.f32 %v1890, %v507
        %v1927 = vmul.f32 %v1894, %v506
        %v1928 = vmul.f32 %v1894, %v507
        %v1929 = vmul.f32 %v1898, %v506
        %v1930 = vmul.f32 %v1898, %v507
        %1931 = vmatprep.subr.mxu0 0.0
        %1932 = vmatpush1.msra.mxu0 %v1899
        %1933 = vmatprep.subr.mxu0 0.0
        %1934 = vmatpush1.msra.mxu0 %v1900
        %1935 = vmatprep.subr.mxu0 0.0
        %1936 = vmatpush1.msra.mxu0 %v1901
        %1937 = vmatprep.subr.mxu0 0.0
        %1938 = vmatpush1.msra.mxu0 %v1902
        %1939 = vmatprep.subr.mxu0 0.0
        %1940 = vmatpush1.msra.mxu0 %v1903
        %1941 = vmatprep.subr.mxu0 0.0
        %1942 = vmatpush1.msra.mxu0 %v1904
        %1943 = vmatprep.subr.mxu0 0.0
        %1944 = vmatpush1.msra.mxu0 %v1905
        %1945 = vmatprep.subr.mxu0 0.0
        %1946 = vmatpush1.msra.mxu0 %v1906
        %1947 = vmatprep.subr.mxu0 0.0
        %1948 = vmatpush1.msra.mxu0 %v1907
        %1949 = vmatprep.subr.mxu0 0.0
        %1950 = vmatpush1.msra.mxu0 %v1908
        %1951 = vmatprep.subr.mxu0 0.0
        %1952 = vmatpush1.msra.mxu0 %v1909
        %1953 = vmatprep.subr.mxu0 0.0
        %1954 = vmatpush1.msra.mxu0 %v1910
        %1955 = vmatprep.subr.mxu0 0.0
        %1956 = vmatpush1.msra.mxu0 %v1911
        %1957 = vmatprep.subr.mxu0 0.0
        %1958 = vmatpush1.msra.mxu0 %v1912
        %1959 = vmatprep.subr.mxu0 0.0
        %1960 = vmatpush1.msra.mxu0 %v1913
        %1961 = vmatprep.subr.mxu0 0.0
        %1962 = vmatpush1.msra.mxu0 %v1914
        %1963 = vmatprep.subr.mxu0 0.0
        %1964 = vmatpush1.msra.mxu0 %v1915
        %1965 = vmatprep.subr.mxu0 0.0
        %1966 = vmatpush1.msra.mxu0 %v1916
        %1967 = vmatprep.subr.mxu0 0.0
        %1968 = vmatpush1.msra.mxu0 %v1917
        %1969 = vmatprep.subr.mxu0 0.0
        %1970 = vmatpush1.msra.mxu0 %v1918
        %1971 = vmatprep.subr.mxu0 0.0
        %1972 = vmatpush1.msra.mxu0 %v1919
        %1973 = vmatprep.subr.mxu0 0.0
        %1974 = vmatpush1.msra.mxu0 %v1920
        %1975 = vmatprep.subr.mxu0 0.0
        %1976 = vmatpush1.msra.mxu0 %v1921
        %1977 = vmatprep.subr.mxu0 0.0
        %1978 = vmatpush1.msra.mxu0 %v1922
        %1979 = vmatprep.subr.mxu0 0.0
        %1980 = vmatpush1.msra.mxu0 %v1923
        %1981 = vmatprep.subr.mxu0 0.0
        %1982 = vmatpush1.msra.mxu0 %v1924
        %1983 = vmatprep.subr.mxu0 0.0
        %1984 = vmatpush1.msra.mxu0 %v1925
        %1985 = vmatprep.subr.mxu0 0.0
        %1986 = vmatpush1.msra.mxu0 %v1926
        %1987 = vmatprep.subr.mxu0 0.0
        %1988 = vmatpush1.msra.mxu0 %v1927
        %1989 = vmatprep.subr.mxu0 0.0
        %1990 = vmatpush1.msra.mxu0 %v1928
        %1991 = vmatprep.subr.mxu0 0.0
        %1992 = vmatpush1.msra.mxu0 %v1929
        %1993 = vmatprep.subr.mxu0 0.0
        %1994 = vmatpush1.msra.mxu0 %v1930
        %1995 = vmatprep.mubr.f32.mxu0 %v1303
        %1996 = vmatmul.mubr.f32.gmra.mrb[0].mxu0 %v1302
        %v1997 = vpop.f32.mrb[0].mxu0
        %v1998 = vadd.f32 0.0, %v1997
        %v1999 = vpop.f32.mrb[0].mxu0
        %2000 = vmatprep.mubr.f32.mxu0 %v1305
        %2001 = vmatmul.mubr.f32.gmra.mrb[0].mxu0 %v1304
        %v2002 = vpop.f32.mrb[0].mxu0
        %v2003 = vadd.f32 0.0, %v2002
        %v2004 = vpop.f32.mrb[0].mxu0
        %2005 = vdwg.mxu0
        %v2006 = vlaneseq
        %v2007 = vshrl.u32 %v2006, 7
        %v2008 = vsub.s32 0, %v2007
        %v2009 = vrot.slane %v492, %v2008
        %v2010 = vlaneseq
        %v2011 = vshrl.u32 %v2010, 7
        %v2012 = vsub.s32 1, %v2011
        %v2013 = vrot.slane %v492, %v2012
        %v2014 = vlaneseq
        %v2015 = vshrl.u32 %v2014, 7
        %v2016 = vsub.s32 2, %v2015
        %v2017 = vrot.slane %v492, %v2016
        %v2018 = vlaneseq
        %v2019 = vshrl.u32 %v2018, 7
        %v2020 = vsub.s32 3, %v2019
        %v2021 = vrot.slane %v492, %v2020
        %v2022 = vlaneseq
        %v2023 = vshrl.u32 %v2022, 7
        %v2024 = vsub.s32 4, %v2023
        %v2025 = vrot.slane %v492, %v2024
        %v2026 = vlaneseq
        %v2027 = vshrl.u32 %v2026, 7
        %v2028 = vsub.s32 5, %v2027
        %v2029 = vrot.slane %v492, %v2028
        %v2030 = vlaneseq
        %v2031 = vshrl.u32 %v2030, 7
        %v2032 = vsub.s32 6, %v2031
        %v2033 = vrot.slane %v492, %v2032
        %v2034 = vlaneseq
        %v2035 = vshrl.u32 %v2034, 7
        %v2036 = vsub.s32 7, %v2035
        %v2037 = vrot.slane %v492, %v2036
        %v2038 = vlaneseq
        %v2039 = vshrl.u32 %v2038, 7
        %v2040 = vsub.s32 0, %v2039
        %v2041 = vrot.slane %v493, %v2040
        %v2042 = vlaneseq
        %v2043 = vshrl.u32 %v2042, 7
        %v2044 = vsub.s32 1, %v2043
        %v2045 = vrot.slane %v493, %v2044
        %v2046 = vlaneseq
        %v2047 = vshrl.u32 %v2046, 7
        %v2048 = vsub.s32 2, %v2047
        %v2049 = vrot.slane %v493, %v2048
        %v2050 = vlaneseq
        %v2051 = vshrl.u32 %v2050, 7
        %v2052 = vsub.s32 3, %v2051
        %v2053 = vrot.slane %v493, %v2052
        %v2054 = vlaneseq
        %v2055 = vshrl.u32 %v2054, 7
        %v2056 = vsub.s32 4, %v2055
        %v2057 = vrot.slane %v493, %v2056
        %v2058 = vlaneseq
        %v2059 = vshrl.u32 %v2058, 7
        %v2060 = vsub.s32 5, %v2059
        %v2061 = vrot.slane %v493, %v2060
        %v2062 = vlaneseq
        %v2063 = vshrl.u32 %v2062, 7
        %v2064 = vsub.s32 6, %v2063
        %v2065 = vrot.slane %v493, %v2064
        %v2066 = vlaneseq
        %v2067 = vshrl.u32 %v2066, 7
        %v2068 = vsub.s32 7, %v2067
        %v2069 = vrot.slane %v493, %v2068
        %v2070 = vmul.f32 %v2009, %v508
        %v2071 = vmul.f32 %v2009, %v509
        %v2072 = vmul.f32 %v2013, %v508
        %v2073 = vmul.f32 %v2013, %v509
        %v2074 = vmul.f32 %v2017, %v508
        %v2075 = vmul.f32 %v2017, %v509
        %v2076 = vmul.f32 %v2021, %v508
        %v2077 = vmul.f32 %v2021, %v509
        %v2078 = vmul.f32 %v2025, %v508
        %v2079 = vmul.f32 %v2025, %v509
        %v2080 = vmul.f32 %v2029, %v508
        %v2081 = vmul.f32 %v2029, %v509
        %v2082 = vmul.f32 %v2033, %v508
        %v2083 = vmul.f32 %v2033, %v509
        %v2084 = vmul.f32 %v2037, %v508
        %v2085 = vmul.f32 %v2037, %v509
        %v2086 = vmul.f32 %v2041, %v508
        %v2087 = vmul.f32 %v2041, %v509
        %v2088 = vmul.f32 %v2045, %v508
        %v2089 = vmul.f32 %v2045, %v509
        %v2090 = vmul.f32 %v2049, %v508
        %v2091 = vmul.f32 %v2049, %v509
        %v2092 = vmul.f32 %v2053, %v508
        %v2093 = vmul.f32 %v2053, %v509
        %v2094 = vmul.f32 %v2057, %v508
        %v2095 = vmul.f32 %v2057, %v509
        %v2096 = vmul.f32 %v2061, %v508
        %v2097 = vmul.f32 %v2061, %v509
        %v2098 = vmul.f32 %v2065, %v508
        %v2099 = vmul.f32 %v2065, %v509
        %v2100 = vmul.f32 %v2069, %v508
        %v2101 = vmul.f32 %v2069, %v509
        %2102 = vmatprep.subr.mxu0 0.0
        %2103 = vmatpush1.msra.mxu0 %v2070
        %2104 = vmatprep.subr.mxu0 0.0
        %2105 = vmatpush1.msra.mxu0 %v2071
        %2106 = vmatprep.subr.mxu0 0.0
        %2107 = vmatpush1.msra.mxu0 %v2072
        %2108 = vmatprep.subr.mxu0 0.0
        %2109 = vmatpush1.msra.mxu0 %v2073
        %2110 = vmatprep.subr.mxu0 0.0
        %2111 = vmatpush1.msra.mxu0 %v2074
        %2112 = vmatprep.subr.mxu0 0.0
        %2113 = vmatpush1.msra.mxu0 %v2075
        %2114 = vmatprep.subr.mxu0 0.0
        %2115 = vmatpush1.msra.mxu0 %v2076
        %2116 = vmatprep.subr.mxu0 0.0
        %2117 = vmatpush1.msra.mxu0 %v2077
        %2118 = vmatprep.subr.mxu0 0.0
        %2119 = vmatpush1.msra.mxu0 %v2078
        %2120 = vmatprep.subr.mxu0 0.0
        %2121 = vmatpush1.msra.mxu0 %v2079
        %2122 = vmatprep.subr.mxu0 0.0
        %2123 = vmatpush1.msra.mxu0 %v2080
        %2124 = vmatprep.subr.mxu0 0.0
        %2125 = vmatpush1.msra.mxu0 %v2081
        %2126 = vmatprep.subr.mxu0 0.0
        %2127 = vmatpush1.msra.mxu0 %v2082
        %2128 = vmatprep.subr.mxu0 0.0
        %2129 = vmatpush1.msra.mxu0 %v2083
        %2130 = vmatprep.subr.mxu0 0.0
        %2131 = vmatpush1.msra.mxu0 %v2084
        %2132 = vmatprep.subr.mxu0 0.0
        %2133 = vmatpush1.msra.mxu0 %v2085
        %2134 = vmatprep.subr.mxu0 0.0
        %2135 = vmatpush1.msra.mxu0 %v2086
        %2136 = vmatprep.subr.mxu0 0.0
        %2137 = vmatpush1.msra.mxu0 %v2087
        %2138 = vmatprep.subr.mxu0 0.0
        %2139 = vmatpush1.msra.mxu0 %v2088
        %2140 = vmatprep.subr.mxu0 0.0
        %2141 = vmatpush1.msra.mxu0 %v2089
        %2142 = vmatprep.subr.mxu0 0.0
        %2143 = vmatpush1.msra.mxu0 %v2090
        %2144 = vmatprep.subr.mxu0 0.0
        %2145 = vmatpush1.msra.mxu0 %v2091
        %2146 = vmatprep.subr.mxu0 0.0
        %2147 = vmatpush1.msra.mxu0 %v2092
        %2148 = vmatprep.subr.mxu0 0.0
        %2149 = vmatpush1.msra.mxu0 %v2093
        %2150 = vmatprep.subr.mxu0 0.0
        %2151 = vmatpush1.msra.mxu0 %v2094
        %2152 = vmatprep.subr.mxu0 0.0
        %2153 = vmatpush1.msra.mxu0 %v2095
        %2154 = vmatprep.subr.mxu0 0.0
        %2155 = vmatpush1.msra.mxu0 %v2096
        %2156 = vmatprep.subr.mxu0 0.0
        %2157 = vmatpush1.msra.mxu0 %v2097
        %2158 = vmatprep.subr.mxu0 0.0
        %2159 = vmatpush1.msra.mxu0 %v2098
        %2160 = vmatprep.subr.mxu0 0.0
        %2161 = vmatpush1.msra.mxu0 %v2099
        %2162 = vmatprep.subr.mxu0 0.0
        %2163 = vmatpush1.msra.mxu0 %v2100
        %2164 = vmatprep.subr.mxu0 0.0
        %2165 = vmatpush1.msra.mxu0 %v2101
        %2166 = vmatprep.mubr.f32.mxu0 %v1307
        %2167 = vmatmul.mubr.f32.gmra.mrb[0].mxu0 %v1306
        %v2168 = vpop.f32.mrb[0].mxu0
        %v2169 = vadd.f32 0.0, %v2168
        %v2170 = vpop.f32.mrb[0].mxu0
        %2171 = vmatprep.mubr.f32.mxu0 %v1309
        %2172 = vmatmul.mubr.f32.gmra.mrb[0].mxu0 %v1308
        %v2173 = vpop.f32.mrb[0].mxu0
        %v2174 = vadd.f32 0.0, %v2173
        %v2175 = vpop.f32.mrb[0].mxu0
        %2176 = vdwg.mxu0
        %v2177 = vlaneseq
        %v2178 = vshrl.u32 %v2177, 7
        %v2179 = vsub.s32 0, %v2178
        %v2180 = vrot.slane %v494, %v2179
        %v2181 = vlaneseq
        %v2182 = vshrl.u32 %v2181, 7
        %v2183 = vsub.s32 1, %v2182
        %v2184 = vrot.slane %v494, %v2183
        %v2185 = vlaneseq
        %v2186 = vshrl.u32 %v2185, 7
        %v2187 = vsub.s32 2, %v2186
        %v2188 = vrot.slane %v494, %v2187
        %v2189 = vlaneseq
        %v2190 = vshrl.u32 %v2189, 7
        %v2191 = vsub.s32 3, %v2190
        %v2192 = vrot.slane %v494, %v2191
        %v2193 = vlaneseq
        %v2194 = vshrl.u32 %v2193, 7
        %v2195 = vsub.s32 4, %v2194
        %v2196 = vrot.slane %v494, %v2195
        %v2197 = vlaneseq
        %v2198 = vshrl.u32 %v2197, 7
        %v2199 = vsub.s32 5, %v2198
        %v2200 = vrot.slane %v494, %v2199
        %v2201 = vlaneseq
        %v2202 = vshrl.u32 %v2201, 7
        %v2203 = vsub.s32 6, %v2202
        %v2204 = vrot.slane %v494, %v2203
        %v2205 = vlaneseq
        %v2206 = vshrl.u32 %v2205, 7
        %v2207 = vsub.s32 7, %v2206
        %v2208 = vrot.slane %v494, %v2207
        %v2209 = vlaneseq
        %v2210 = vshrl.u32 %v2209, 7
        %v2211 = vsub.s32 0, %v2210
        %v2212 = vrot.slane %v495, %v2211
        %v2213 = vlaneseq
        %v2214 = vshrl.u32 %v2213, 7
        %v2215 = vsub.s32 1, %v2214
        %v2216 = vrot.slane %v495, %v2215
        %v2217 = vlaneseq
        %v2218 = vshrl.u32 %v2217, 7
        %v2219 = vsub.s32 2, %v2218
        %v2220 = vrot.slane %v495, %v2219
        %v2221 = vlaneseq
        %v2222 = vshrl.u32 %v2221, 7
        %v2223 = vsub.s32 3, %v2222
        %v2224 = vrot.slane %v495, %v2223
        %v2225 = vlaneseq
        %v2226 = vshrl.u32 %v2225, 7
        %v2227 = vsub.s32 4, %v2226
        %v2228 = vrot.slane %v495, %v2227
        %v2229 = vlaneseq
        %v2230 = vshrl.u32 %v2229, 7
        %v2231 = vsub.s32 5, %v2230
        %v2232 = vrot.slane %v495, %v2231
        %v2233 = vlaneseq
        %v2234 = vshrl.u32 %v2233, 7
        %v2235 = vsub.s32 6, %v2234
        %v2236 = vrot.slane %v495, %v2235
        %v2237 = vlaneseq
        %v2238 = vshrl.u32 %v2237, 7
        %v2239 = vsub.s32 7, %v2238
        %v2240 = vrot.slane %v495, %v2239
        %v2241 = vmul.f32 %v2180, %v510
        %v2242 = vmul.f32 %v2180, %v511
        %v2243 = vmul.f32 %v2184, %v510
        %v2244 = vmul.f32 %v2184, %v511
        %v2245 = vmul.f32 %v2188, %v510
        %v2246 = vmul.f32 %v2188, %v511
        %v2247 = vmul.f32 %v2192, %v510
        %v2248 = vmul.f32 %v2192, %v511
        %v2249 = vmul.f32 %v2196, %v510
        %v2250 = vmul.f32 %v2196, %v511
        %v2251 = vmul.f32 %v2200, %v510
        %v2252 = vmul.f32 %v2200, %v511
        %v2253 = vmul.f32 %v2204, %v510
        %v2254 = vmul.f32 %v2204, %v511
        %v2255 = vmul.f32 %v2208, %v510
        %v2256 = vmul.f32 %v2208, %v511
        %v2257 = vmul.f32 %v2212, %v510
        %v2258 = vmul.f32 %v2212, %v511
        %v2259 = vmul.f32 %v2216, %v510
        %v2260 = vmul.f32 %v2216, %v511
        %v2261 = vmul.f32 %v2220, %v510
        %v2262 = vmul.f32 %v2220, %v511
        %v2263 = vmul.f32 %v2224, %v510
        %v2264 = vmul.f32 %v2224, %v511
        %v2265 = vmul.f32 %v2228, %v510
        %v2266 = vmul.f32 %v2228, %v511
        %v2267 = vmul.f32 %v2232, %v510
        %v2268 = vmul.f32 %v2232, %v511
        %v2269 = vmul.f32 %v2236, %v510
        %v2270 = vmul.f32 %v2236, %v511
        %v2271 = vmul.f32 %v2240, %v510
        %v2272 = vmul.f32 %v2240, %v511
        %2273 = vmatprep.subr.mxu0 0.0
        %2274 = vmatpush1.msra.mxu0 %v2241
        %2275 = vmatprep.subr.mxu0 0.0
        %2276 = vmatpush1.msra.mxu0 %v2242
        %2277 = vmatprep.subr.mxu0 0.0
        %2278 = vmatpush1.msra.mxu0 %v2243
        %2279 = vmatprep.subr.mxu0 0.0
        %2280 = vmatpush1.msra.mxu0 %v2244
        %2281 = vmatprep.subr.mxu0 0.0
        %2282 = vmatpush1.msra.mxu0 %v2245
        %2283 = vmatprep.subr.mxu0 0.0
        %2284 = vmatpush1.msra.mxu0 %v2246
        %2285 = vmatprep.subr.mxu0 0.0
        %2286 = vmatpush1.msra.mxu0 %v2247
        %2287 = vmatprep.subr.mxu0 0.0
        %2288 = vmatpush1.msra.mxu0 %v2248
        %2289 = vmatprep.subr.mxu0 0.0
        %2290 = vmatpush1.msra.mxu0 %v2249
        %2291 = vmatprep.subr.mxu0 0.0
        %2292 = vmatpush1.msra.mxu0 %v2250
        %2293 = vmatprep.subr.mxu0 0.0
        %2294 = vmatpush1.msra.mxu0 %v2251
        %2295 = vmatprep.subr.mxu0 0.0
        %2296 = vmatpush1.msra.mxu0 %v2252
        %2297 = vmatprep.subr.mxu0 0.0
        %2298 = vmatpush1.msra.mxu0 %v2253
        %2299 = vmatprep.subr.mxu0 0.0
        %2300 = vmatpush1.msra.mxu0 %v2254
        %2301 = vmatprep.subr.mxu0 0.0
        %2302 = vmatpush1.msra.mxu0 %v2255
        %2303 = vmatprep.subr.mxu0 0.0
        %2304 = vmatpush1.msra.mxu0 %v2256
        %2305 = vmatprep.subr.mxu0 0.0
        %2306 = vmatpush1.msra.mxu0 %v2257
        %2307 = vmatprep.subr.mxu0 0.0
        %2308 = vmatpush1.msra.mxu0 %v2258
        %2309 = vmatprep.subr.mxu0 0.0
        %2310 = vmatpush1.msra.mxu0 %v2259
        %2311 = vmatprep.subr.mxu0 0.0
        %2312 = vmatpush1.msra.mxu0 %v2260
        %2313 = vmatprep.subr.mxu0 0.0
        %2314 = vmatpush1.msra.mxu0 %v2261
        %2315 = vmatprep.subr.mxu0 0.0
        %2316 = vmatpush1.msra.mxu0 %v2262
        %2317 = vmatprep.subr.mxu0 0.0
        %2318 = vmatpush1.msra.mxu0 %v2263
        %2319 = vmatprep.subr.mxu0 0.0
        %2320 = vmatpush1.msra.mxu0 %v2264
        %2321 = vmatprep.subr.mxu0 0.0
        %2322 = vmatpush1.msra.mxu0 %v2265
        %2323 = vmatprep.subr.mxu0 0.0
        %2324 = vmatpush1.msra.mxu0 %v2266
        %2325 = vmatprep.subr.mxu0 0.0
        %2326 = vmatpush1.msra.mxu0 %v2267
        %2327 = vmatprep.subr.mxu0 0.0
        %2328 = vmatpush1.msra.mxu0 %v2268
        %2329 = vmatprep.subr.mxu0 0.0
        %2330 = vmatpush1.msra.mxu0 %v2269
        %2331 = vmatprep.subr.mxu0 0.0
        %2332 = vmatpush1.msra.mxu0 %v2270
        %2333 = vmatprep.subr.mxu0 0.0
        %2334 = vmatpush1.msra.mxu0 %v2271
        %2335 = vmatprep.subr.mxu0 0.0
        %2336 = vmatpush1.msra.mxu0 %v2272
        %2337 = vmatprep.mubr.f32.mxu0 %v1311
        %2338 = vmatmul.mubr.f32.gmra.mrb[0].mxu0 %v1310
        %v2339 = vpop.f32.mrb[0].mxu0
        %v2340 = vadd.f32 0.0, %v2339
        %v2341 = vpop.f32.mrb[0].mxu0
        %2342 = vmatprep.mubr.f32.mxu0 %v1313
        %2343 = vmatmul.mubr.f32.gmra.mrb[0].mxu0 %v1312
        %v2344 = vpop.f32.mrb[0].mxu0
        %v2345 = vadd.f32 0.0, %v2344
        %v2346 = vpop.f32.mrb[0].mxu0
        %2347 = vdwg.mxu0
        %v2348 = vlaneseq
        %v2349 = vshrl.u32 %v2348, 7
        %v2350 = vsub.s32 0, %v2349
        %v2351 = vrot.slane %v496, %v2350
        %v2352 = vlaneseq
        %v2353 = vshrl.u32 %v2352, 7
        %v2354 = vsub.s32 1, %v2353
        %v2355 = vrot.slane %v496, %v2354
        %v2356 = vlaneseq
        %v2357 = vshrl.u32 %v2356, 7
        %v2358 = vsub.s32 2, %v2357
        %v2359 = vrot.slane %v496, %v2358
        %v2360 = vlaneseq
        %v2361 = vshrl.u32 %v2360, 7
        %v2362 = vsub.s32 3, %v2361
        %v2363 = vrot.slane %v496, %v2362
        %v2364 = vlaneseq
        %v2365 = vshrl.u32 %v2364, 7
        %v2366 = vsub.s32 4, %v2365
        %v2367 = vrot.slane %v496, %v2366
        %v2368 = vlaneseq
        %v2369 = vshrl.u32 %v2368, 7
        %v2370 = vsub.s32 5, %v2369
        %v2371 = vrot.slane %v496, %v2370
        %v2372 = vlaneseq
        %v2373 = vshrl.u32 %v2372, 7
        %v2374 = vsub.s32 6, %v2373
        %v2375 = vrot.slane %v496, %v2374
        %v2376 = vlaneseq
        %v2377 = vshrl.u32 %v2376, 7
        %v2378 = vsub.s32 7, %v2377
        %v2379 = vrot.slane %v496, %v2378
        %v2380 = vlaneseq
        %v2381 = vshrl.u32 %v2380, 7
        %v2382 = vsub.s32 0, %v2381
        %v2383 = vrot.slane %v497, %v2382
        %v2384 = vlaneseq
        %v2385 = vshrl.u32 %v2384, 7
        %v2386 = vsub.s32 1, %v2385
        %v2387 = vrot.slane %v497, %v2386
        %v2388 = vlaneseq
        %v2389 = vshrl.u32 %v2388, 7
        %v2390 = vsub.s32 2, %v2389
        %v2391 = vrot.slane %v497, %v2390
        %v2392 = vlaneseq
        %v2393 = vshrl.u32 %v2392, 7
        %v2394 = vsub.s32 3, %v2393
        %v2395 = vrot.slane %v497, %v2394
        %v2396 = vlaneseq
        %v2397 = vshrl.u32 %v2396, 7
        %v2398 = vsub.s32 4, %v2397
        %v2399 = vrot.slane %v497, %v2398
        %v2400 = vlaneseq
        %v2401 = vshrl.u32 %v2400, 7
        %v2402 = vsub.s32 5, %v2401
        %v2403 = vrot.slane %v497, %v2402
        %v2404 = vlaneseq
        %v2405 = vshrl.u32 %v2404, 7
        %v2406 = vsub.s32 6, %v2405
        %v2407 = vrot.slane %v497, %v2406
        %v2408 = vlaneseq
        %v2409 = vshrl.u32 %v2408, 7
        %v2410 = vsub.s32 7, %v2409
        %v2411 = vrot.slane %v497, %v2410
        %v2412 = vmul.f32 %v2351, %v512
        %v2413 = vmul.f32 %v2351, %v513
        %v2414 = vmul.f32 %v2355, %v512
        %v2415 = vmul.f32 %v2355, %v513
        %v2416 = vmul.f32 %v2359, %v512
        %v2417 = vmul.f32 %v2359, %v513
        %v2418 = vmul.f32 %v2363, %v512
        %v2419 = vmul.f32 %v2363, %v513
        %v2420 = vmul.f32 %v2367, %v512
        %v2421 = vmul.f32 %v2367, %v513
        %v2422 = vmul.f32 %v2371, %v512
        %v2423 = vmul.f32 %v2371, %v513
        %v2424 = vmul.f32 %v2375, %v512
        %v2425 = vmul.f32 %v2375, %v513
        %v2426 = vmul.f32 %v2379, %v512
        %v2427 = vmul.f32 %v2379, %v513
        %v2428 = vmul.f32 %v2383, %v512
        %v2429 = vmul.f32 %v2383, %v513
        %v2430 = vmul.f32 %v2387, %v512
        %v2431 = vmul.f32 %v2387, %v513
        %v2432 = vmul.f32 %v2391, %v512
        %v2433 = vmul.f32 %v2391, %v513
        %v2434 = vmul.f32 %v2395, %v512
        %v2435 = vmul.f32 %v2395, %v513
        %v2436 = vmul.f32 %v2399, %v512
        %v2437 = vmul.f32 %v2399, %v513
        %v2438 = vmul.f32 %v2403, %v512
        %v2439 = vmul.f32 %v2403, %v513
        %v2440 = vmul.f32 %v2407, %v512
        %v2441 = vmul.f32 %v2407, %v513
        %v2442 = vmul.f32 %v2411, %v512
        %v2443 = vmul.f32 %v2411, %v513
        %2444 = vmatprep.subr.mxu0 0.0
        %2445 = vmatpush1.msra.mxu0 %v2412
        %2446 = vmatprep.subr.mxu0 0.0
        %2447 = vmatpush1.msra.mxu0 %v2413
        %2448 = vmatprep.subr.mxu0 0.0
        %2449 = vmatpush1.msra.mxu0 %v2414
        %2450 = vmatprep.subr.mxu0 0.0
        %2451 = vmatpush1.msra.mxu0 %v2415
        %2452 = vmatprep.subr.mxu0 0.0
        %2453 = vmatpush1.msra.mxu0 %v2416
        %2454 = vmatprep.subr.mxu0 0.0
        %2455 = vmatpush1.msra.mxu0 %v2417
        %2456 = vmatprep.subr.mxu0 0.0
        %2457 = vmatpush1.msra.mxu0 %v2418
        %2458 = vmatprep.subr.mxu0 0.0
        %2459 = vmatpush1.msra.mxu0 %v2419
        %2460 = vmatprep.subr.mxu0 0.0
        %2461 = vmatpush1.msra.mxu0 %v2420
        %2462 = vmatprep.subr.mxu0 0.0
        %2463 = vmatpush1.msra.mxu0 %v2421
        %2464 = vmatprep.subr.mxu0 0.0
        %2465 = vmatpush1.msra.mxu0 %v2422
        %2466 = vmatprep.subr.mxu0 0.0
        %2467 = vmatpush1.msra.mxu0 %v2423
        %2468 = vmatprep.subr.mxu0 0.0
        %2469 = vmatpush1.msra.mxu0 %v2424
        %2470 = vmatprep.subr.mxu0 0.0
        %2471 = vmatpush1.msra.mxu0 %v2425
        %2472 = vmatprep.subr.mxu0 0.0
        %2473 = vmatpush1.msra.mxu0 %v2426
        %2474 = vmatprep.subr.mxu0 0.0
        %2475 = vmatpush1.msra.mxu0 %v2427
        %2476 = vmatprep.subr.mxu0 0.0
        %2477 = vmatpush1.msra.mxu0 %v2428
        %2478 = vmatprep.subr.mxu0 0.0
        %2479 = vmatpush1.msra.mxu0 %v2429
        %2480 = vmatprep.subr.mxu0 0.0
        %2481 = vmatpush1.msra.mxu0 %v2430
        %2482 = vmatprep.subr.mxu0 0.0
        %2483 = vmatpush1.msra.mxu0 %v2431
        %2484 = vmatprep.subr.mxu0 0.0
        %2485 = vmatpush1.msra.mxu0 %v2432
        %2486 = vmatprep.subr.mxu0 0.0
        %2487 = vmatpush1.msra.mxu0 %v2433
        %2488 = vmatprep.subr.mxu0 0.0
        %2489 = vmatpush1.msra.mxu0 %v2434
        %2490 = vmatprep.subr.mxu0 0.0
        %2491 = vmatpush1.msra.mxu0 %v2435
        %2492 = vmatprep.subr.mxu0 0.0
        %2493 = vmatpush1.msra.mxu0 %v2436
        %2494 = vmatprep.subr.mxu0 0.0
        %2495 = vmatpush1.msra.mxu0 %v2437
        %2496 = vmatprep.subr.mxu0 0.0
        %2497 = vmatpush1.msra.mxu0 %v2438
        %2498 = vmatprep.subr.mxu0 0.0
        %2499 = vmatpush1.msra.mxu0 %v2439
        %2500 = vmatprep.subr.mxu0 0.0
        %2501 = vmatpush1.msra.mxu0 %v2440
        %2502 = vmatprep.subr.mxu0 0.0
        %2503 = vmatpush1.msra.mxu0 %v2441
        %2504 = vmatprep.subr.mxu0 0.0
        %2505 = vmatpush1.msra.mxu0 %v2442
        %2506 = vmatprep.subr.mxu0 0.0
        %2507 = vmatpush1.msra.mxu0 %v2443
        %2508 = vmatprep.mubr.f32.mxu0 %v1315
        %2509 = vmatmul.mubr.f32.gmra.mrb[0].mxu0 %v1314
        %v2510 = vpop.f32.mrb[0].mxu0
        %v2511 = vadd.f32 0.0, %v2510
        %v2512 = vpop.f32.mrb[0].mxu0
        %2513 = vmatprep.mubr.f32.mxu0 %v1317
        %2514 = vmatmul.mubr.f32.gmra.mrb[0].mxu0 %v1316
        %v2515 = vpop.f32.mrb[0].mxu0
        %v2516 = vadd.f32 0.0, %v2515
        %v2517 = vpop.f32.mrb[0].mxu0
        %2518 = vdwg.mxu0
        %v2519 = vlaneseq
        %v2520 = vshrl.u32 %v2519, 7
        %v2521 = vsub.s32 0, %v2520
        %v2522 = vrot.slane %v498, %v2521
        %v2523 = vlaneseq
        %v2524 = vshrl.u32 %v2523, 7
        %v2525 = vsub.s32 1, %v2524
        %v2526 = vrot.slane %v498, %v2525
        %v2527 = vlaneseq
        %v2528 = vshrl.u32 %v2527, 7
        %v2529 = vsub.s32 2, %v2528
        %v2530 = vrot.slane %v498, %v2529
        %v2531 = vlaneseq
        %v2532 = vshrl.u32 %v2531, 7
        %v2533 = vsub.s32 3, %v2532
        %v2534 = vrot.slane %v498, %v2533
        %v2535 = vlaneseq
        %v2536 = vshrl.u32 %v2535, 7
        %v2537 = vsub.s32 4, %v2536
        %v2538 = vrot.slane %v498, %v2537
        %v2539 = vlaneseq
        %v2540 = vshrl.u32 %v2539, 7
        %v2541 = vsub.s32 5, %v2540
        %v2542 = vrot.slane %v498, %v2541
        %v2543 = vlaneseq
        %v2544 = vshrl.u32 %v2543, 7
        %v2545 = vsub.s32 6, %v2544
        %v2546 = vrot.slane %v498, %v2545
        %v2547 = vlaneseq
        %v2548 = vshrl.u32 %v2547, 7
        %v2549 = vsub.s32 7, %v2548
        %v2550 = vrot.slane %v498, %v2549
        %v2551 = vlaneseq
        %v2552 = vshrl.u32 %v2551, 7
        %v2553 = vsub.s32 0, %v2552
        %v2554 = vrot.slane %v499, %v2553
        %v2555 = vlaneseq
        %v2556 = vshrl.u32 %v2555, 7
        %v2557 = vsub.s32 1, %v2556
        %v2558 = vrot.slane %v499, %v2557
        %v2559 = vlaneseq
        %v2560 = vshrl.u32 %v2559, 7
        %v2561 = vsub.s32 2, %v2560
        %v2562 = vrot.slane %v499, %v2561
        %v2563 = vlaneseq
        %v2564 = vshrl.u32 %v2563, 7
        %v2565 = vsub.s32 3, %v2564
        %v2566 = vrot.slane %v499, %v2565
        %v2567 = vlaneseq
        %v2568 = vshrl.u32 %v2567, 7
        %v2569 = vsub.s32 4, %v2568
        %v2570 = vrot.slane %v499, %v2569
        %v2571 = vlaneseq
        %v2572 = vshrl.u32 %v2571, 7
        %v2573 = vsub.s32 5, %v2572
        %v2574 = vrot.slane %v499, %v2573
        %v2575 = vlaneseq
        %v2576 = vshrl.u32 %v2575, 7
        %v2577 = vsub.s32 6, %v2576
        %v2578 = vrot.slane %v499, %v2577
        %v2579 = vlaneseq
        %v2580 = vshrl.u32 %v2579, 7
        %v2581 = vsub.s32 7, %v2580
        %v2582 = vrot.slane %v499, %v2581
        %v2583 = vmul.f32 %v2522, %v514
        %v2584 = vmul.f32 %v2522, %v515
        %v2585 = vmul.f32 %v2526, %v514
        %v2586 = vmul.f32 %v2526, %v515
        %v2587 = vmul.f32 %v2530, %v514
        %v2588 = vmul.f32 %v2530, %v515
        %v2589 = vmul.f32 %v2534, %v514
        %v2590 = vmul.f32 %v2534, %v515
        %v2591 = vmul.f32 %v2538, %v514
        %v2592 = vmul.f32 %v2538, %v515
        %v2593 = vmul.f32 %v2542, %v514
        %v2594 = vmul.f32 %v2542, %v515
        %v2595 = vmul.f32 %v2546, %v514
        %v2596 = vmul.f32 %v2546, %v515
        %v2597 = vmul.f32 %v2550, %v514
        %v2598 = vmul.f32 %v2550, %v515
        %v2599 = vmul.f32 %v2554, %v514
        %v2600 = vmul.f32 %v2554, %v515
        %v2601 = vmul.f32 %v2558, %v514
        %v2602 = vmul.f32 %v2558, %v515
        %v2603 = vmul.f32 %v2562, %v514
        %v2604 = vmul.f32 %v2562, %v515
        %v2605 = vmul.f32 %v2566, %v514
        %v2606 = vmul.f32 %v2566, %v515
        %v2607 = vmul.f32 %v2570, %v514
        %v2608 = vmul.f32 %v2570, %v515
        %v2609 = vmul.f32 %v2574, %v514
        %v2610 = vmul.f32 %v2574, %v515
        %v2611 = vmul.f32 %v2578, %v514
        %v2612 = vmul.f32 %v2578, %v515
        %v2613 = vmul.f32 %v2582, %v514
        %v2614 = vmul.f32 %v2582, %v515
        %2615 = vmatprep.subr.mxu0 0.0
        %2616 = vmatpush1.msra.mxu0 %v2583
        %2617 = vmatprep.subr.mxu0 0.0
        %2618 = vmatpush1.msra.mxu0 %v2584
        %2619 = vmatprep.subr.mxu0 0.0
        %2620 = vmatpush1.msra.mxu0 %v2585
        %2621 = vmatprep.subr.mxu0 0.0
        %2622 = vmatpush1.msra.mxu0 %v2586
        %2623 = vmatprep.subr.mxu0 0.0
        %2624 = vmatpush1.msra.mxu0 %v2587
        %2625 = vmatprep.subr.mxu0 0.0
        %2626 = vmatpush1.msra.mxu0 %v2588
        %2627 = vmatprep.subr.mxu0 0.0
        %2628 = vmatpush1.msra.mxu0 %v2589
        %2629 = vmatprep.subr.mxu0 0.0
        %2630 = vmatpush1.msra.mxu0 %v2590
        %2631 = vmatprep.subr.mxu0 0.0
        %2632 = vmatpush1.msra.mxu0 %v2591
        %2633 = vmatprep.subr.mxu0 0.0
        %2634 = vmatpush1.msra.mxu0 %v2592
        %2635 = vmatprep.subr.mxu0 0.0
        %2636 = vmatpush1.msra.mxu0 %v2593
        %2637 = vmatprep.subr.mxu0 0.0
        %2638 = vmatpush1.msra.mxu0 %v2594
        %2639 = vmatprep.subr.mxu0 0.0
        %2640 = vmatpush1.msra.mxu0 %v2595
        %2641 = vmatprep.subr.mxu0 0.0
        %2642 = vmatpush1.msra.mxu0 %v2596
        %2643 = vmatprep.subr.mxu0 0.0
        %2644 = vmatpush1.msra.mxu0 %v2597
        %2645 = vmatprep.subr.mxu0 0.0
        %2646 = vmatpush1.msra.mxu0 %v2598
        %2647 = vmatprep.subr.mxu0 0.0
        %2648 = vmatpush1.msra.mxu0 %v2599
        %2649 = vmatprep.subr.mxu0 0.0
        %2650 = vmatpush1.msra.mxu0 %v2600
        %2651 = vmatprep.subr.mxu0 0.0
        %2652 = vmatpush1.msra.mxu0 %v2601
        %2653 = vmatprep.subr.mxu0 0.0
        %2654 = vmatpush1.msra.mxu0 %v2602
        %2655 = vmatprep.subr.mxu0 0.0
        %2656 = vmatpush1.msra.mxu0 %v2603
        %2657 = vmatprep.subr.mxu0 0.0
        %2658 = vmatpush1.msra.mxu0 %v2604
        %2659 = vmatprep.subr.mxu0 0.0
        %2660 = vmatpush1.msra.mxu0 %v2605
        %2661 = vmatprep.subr.mxu0 0.0
        %2662 = vmatpush1.msra.mxu0 %v2606
        %2663 = vmatprep.subr.mxu0 0.0
        %2664 = vmatpush1.msra.mxu0 %v2607
        %2665 = vmatprep.subr.mxu0 0.0
        %2666 = vmatpush1.msra.mxu0 %v2608
        %2667 = vmatprep.subr.mxu0 0.0
        %2668 = vmatpush1.msra.mxu0 %v2609
        %2669 = vmatprep.subr.mxu0 0.0
        %2670 = vmatpush1.msra.mxu0 %v2610
        %2671 = vmatprep.subr.mxu0 0.0
        %2672 = vmatpush1.msra.mxu0 %v2611
        %2673 = vmatprep.subr.mxu0 0.0
        %2674 = vmatpush1.msra.mxu0 %v2612
        %2675 = vmatprep.subr.mxu0 0.0
        %2676 = vmatpush1.msra.mxu0 %v2613
        %2677 = vmatprep.subr.mxu0 0.0
        %2678 = vmatpush1.msra.mxu0 %v2614
        %2679 = vmatprep.mubr.f32.mxu0 %v1319
        %2680 = vmatmul.mubr.f32.gmra.mrb[0].mxu0 %v1318
        %v2681 = vpop.f32.mrb[0].mxu0
        %v2682 = vadd.f32 0.0, %v2681
        %v2683 = vpop.f32.mrb[0].mxu0
        %2684 = vmatprep.mubr.f32.mxu0 %v1321
        %2685 = vmatmul.mubr.f32.gmra.mrb[0].mxu0 %v1320
        %v2686 = vpop.f32.mrb[0].mxu0
        %v2687 = vadd.f32 0.0, %v2686
        %v2688 = vpop.f32.mrb[0].mxu0
        %2689 = vdwg.mxu0
        %v2690 = vmul.f32 %v597, %v1485
        %v2691 = vmul.f32 %v598, %v1490
        %v2692 = vmul.f32 %v599, %v1656
        %v2693 = vmul.f32 %v600, %v1661
        %v2694 = vmul.f32 %v601, %v1827
        %v2695 = vmul.f32 %v602, %v1832
        %v2696 = vmul.f32 %v603, %v1998
        %v2697 = vmul.f32 %v604, %v2003
        %v2698 = vmul.f32 %v605, %v2169
        %v2699 = vmul.f32 %v606, %v2174
        %v2700 = vmul.f32 %v607, %v2340
        %v2701 = vmul.f32 %v608, %v2345
        %v2702 = vmul.f32 %v609, %v2511
        %v2703 = vmul.f32 %v610, %v2516
        %v2704 = vmul.f32 %v611, %v2682
        %v2705 = vmul.f32 %v612, %v2687
        %v2706 = vld [vmem:[#allocation7] sm:$0xff]
        %v2707 = vld [vmem:[#allocation7 + $0x8] sm:$0xff]
        %v2708 = vld [vmem:[#allocation7 + $0x10] sm:$0xff]
        %v2709 = vld [vmem:[#allocation7 + $0x18] sm:$0xff]
        %v2710 = vld [vmem:[#allocation7 + $0x20] sm:$0xff]
        %v2711 = vld [vmem:[#allocation7 + $0x28] sm:$0xff]
        %v2712 = vld [vmem:[#allocation7 + $0x30] sm:$0xff]
        %v2713 = vld [vmem:[#allocation7 + $0x38] sm:$0xff]
        %v2714 = vld [vmem:[#allocation7 + $0x40] sm:$0xff]
        %v2715 = vld [vmem:[#allocation7 + $0x48] sm:$0xff]
        %v2716 = vld [vmem:[#allocation7 + $0x50] sm:$0xff]
        %v2717 = vld [vmem:[#allocation7 + $0x58] sm:$0xff]
        %v2718 = vld [vmem:[#allocation7 + $0x60] sm:$0xff]
        %v2719 = vld [vmem:[#allocation7 + $0x68] sm:$0xff]
        %v2720 = vld [vmem:[#allocation7 + $0x70] sm:$0xff]
        %v2721 = vld [vmem:[#allocation7 + $0x78] sm:$0xff]
        %v2722 = vld [vmem:[#allocation7 + $0x80] sm:$0xff]
        %v2723 = vld [vmem:[#allocation7 + $0x88] sm:$0xff]
        %v2724 = vld [vmem:[#allocation7 + $0x90] sm:$0xff]
        %v2725 = vld [vmem:[#allocation7 + $0x98] sm:$0xff]
        %v2726 = vld [vmem:[#allocation7 + $0xa0] sm:$0xff]
        %v2727 = vld [vmem:[#allocation7 + $0xa8] sm:$0xff]
        %v2728 = vld [vmem:[#allocation7 + $0xb0] sm:$0xff]
        %v2729 = vld [vmem:[#allocation7 + $0xb8] sm:$0xff]
        %v2730 = vld [vmem:[#allocation7 + $0xc0] sm:$0xff]
        %v2731 = vld [vmem:[#allocation7 + $0xc8] sm:$0xff]
        %v2732 = vld [vmem:[#allocation7 + $0xd0] sm:$0xff]
        %v2733 = vld [vmem:[#allocation7 + $0xd8] sm:$0xff]
        %v2734 = vld [vmem:[#allocation7 + $0xe0] sm:$0xff]
        %v2735 = vld [vmem:[#allocation7 + $0xe8] sm:$0xff]
        %v2736 = vld [vmem:[#allocation7 + $0xf0] sm:$0xff]
        %v2737 = vld [vmem:[#allocation7 + $0xf8] sm:$0xff]
        %v2738 = vld [vmem:[#allocation7 + $0x100] sm:$0xff]
        %v2739 = vld [vmem:[#allocation7 + $0x108] sm:$0xff]
        %v2740 = vld [vmem:[#allocation7 + $0x110] sm:$0xff]
        %v2741 = vld [vmem:[#allocation7 + $0x118] sm:$0xff]
        %v2742 = vld [vmem:[#allocation7 + $0x120] sm:$0xff]
        %v2743 = vld [vmem:[#allocation7 + $0x128] sm:$0xff]
        %v2744 = vld [vmem:[#allocation7 + $0x130] sm:$0xff]
        %v2745 = vld [vmem:[#allocation7 + $0x138] sm:$0xff]
        %v2746 = vld [vmem:[#allocation7 + $0x140] sm:$0xff]
        %v2747 = vld [vmem:[#allocation7 + $0x148] sm:$0xff]
        %v2748 = vld [vmem:[#allocation7 + $0x150] sm:$0xff]
        %v2749 = vld [vmem:[#allocation7 + $0x158] sm:$0xff]
        %v2750 = vld [vmem:[#allocation7 + $0x160] sm:$0xff]
        %v2751 = vld [vmem:[#allocation7 + $0x168] sm:$0xff]
        %v2752 = vld [vmem:[#allocation7 + $0x170] sm:$0xff]
        %v2753 = vld [vmem:[#allocation7 + $0x178] sm:$0xff]
        %v2754 = vld [vmem:[%s8] sm:$0x7]
        %v2756 = vlaneseq
        %v2757 = vshrl.u32 %v2756, 7
        %v2758 = vsub.s32 0, %v2757
        %v2759 = vrot.slane %v2754, %v2758
        %v2760 = vlaneseq
        %v2761 = vshrl.u32 %v2760, 7
        %v2762 = vsub.s32 1, %v2761
        %v2763 = vrot.slane %v2754, %v2762
        %v2764 = vlaneseq
        %v2765 = vshrl.u32 %v2764, 7
        %v2766 = vsub.s32 2, %v2765
        %v2767 = vrot.slane %v2754, %v2766
        %2771 = vmatprep.subr.mxu0 %v2707
        %2772 = vmatpush1.msra.mxu0 %v2706
        %2773 = vmatprep.subr.mxu0 %v2710
        %2774 = vmatpush1.msra.mxu0 %v2709
        %2775 = vmatprep.subr.mxu0 %v2713
        %2776 = vmatpush1.msra.mxu0 %v2712
        %2777 = vmatprep.subr.mxu0 %v2716
        %2778 = vmatpush1.msra.mxu0 %v2715
        %2779 = vmatprep.subr.mxu0 %v2719
        %2780 = vmatpush1.msra.mxu0 %v2718
        %2781 = vmatprep.subr.mxu0 %v2722
        %2782 = vmatpush1.msra.mxu0 %v2721
        %2783 = vmatprep.subr.mxu0 %v2725
        %2784 = vmatpush1.msra.mxu0 %v2724
        %2785 = vmatprep.subr.mxu0 %v2728
        %2786 = vmatpush1.msra.mxu0 %v2727
        %2787 = vmatprep.subr.mxu0 %v2731
        %2788 = vmatpush1.msra.mxu0 %v2730
        %2789 = vmatprep.subr.mxu0 %v2734
        %2790 = vmatpush1.msra.mxu0 %v2733
        %2791 = vmatprep.subr.mxu0 %v2737
        %2792 = vmatpush1.msra.mxu0 %v2736
        %2793 = vmatprep.subr.mxu0 %v2740
        %2794 = vmatpush1.msra.mxu0 %v2739
        %2795 = vmatprep.subr.mxu0 %v2743
        %2796 = vmatpush1.msra.mxu0 %v2742
        %2797 = vmatprep.subr.mxu0 %v2746
        %2798 = vmatpush1.msra.mxu0 %v2745
        %2799 = vmatprep.subr.mxu0 %v2749
        %2800 = vmatpush1.msra.mxu0 %v2748
        %2801 = vmatprep.subr.mxu0 %v2752
        %2802 = vmatpush1.msra.mxu0 %v2751
        %2803 = vmatprep.subr.mxu0 0.0
        %2804 = vmatpush1.msra.mxu0 0.0
        %2805 = vmatprep.subr.mxu0 0.0
        %2806 = vmatpush1.msra.mxu0 0.0
        %2807 = vmatprep.subr.mxu0 0.0
        %2808 = vmatpush1.msra.mxu0 0.0
        %2809 = vmatprep.subr.mxu0 0.0
        %2810 = vmatpush1.msra.mxu0 0.0
        %2811 = vmatprep.subr.mxu0 0.0
        %2812 = vmatpush1.msra.mxu0 0.0
        %2813 = vmatprep.subr.mxu0 0.0
        %2814 = vmatpush1.msra.mxu0 0.0
        %2815 = vmatprep.subr.mxu0 0.0
        %2816 = vmatpush1.msra.mxu0 0.0
        %2817 = vmatprep.subr.mxu0 0.0
        %2818 = vmatpush1.msra.mxu0 0.0
        %2819 = vmatprep.subr.mxu0 0.0
        %2820 = vmatpush1.msra.mxu0 0.0
        %2821 = vmatprep.subr.mxu0 0.0
        %2822 = vmatpush1.msra.mxu0 0.0
        %2823 = vmatprep.subr.mxu0 0.0
        %2824 = vmatpush1.msra.mxu0 0.0
        %2825 = vmatprep.subr.mxu0 0.0
        %2826 = vmatpush1.msra.mxu0 0.0
        %2827 = vmatprep.subr.mxu0 0.0
        %2828 = vmatpush1.msra.mxu0 0.0
        %2829 = vmatprep.subr.mxu0 0.0
        %2830 = vmatpush1.msra.mxu0 0.0
        %2831 = vmatprep.subr.mxu0 0.0
        %2832 = vmatpush1.msra.mxu0 0.0
        %2833 = vmatprep.subr.mxu0 0.0
        %2834 = vmatpush1.msra.mxu0 0.0
        %2835 = vmatprep.mubr.f32.mxu0 0.0
        %2836 = vmatmul.mubr.f32.gmra.mrb[0].mxu0 %v2690
        %v2837 = vpop.f32.mrb[0].mxu0
        %v2838 = vadd.f32 %v2759, %v2837
        %v2839 = vpop.f32.mrb[0].mxu0
        %v2840 = vadd.f32 %v2763, %v2839
        %2841 = vmatprep.mubr.f32.mxu0 0.0
        %2842 = vmatmul.mubr.f32.gmra.mrb[0].mxu0 %v2691
        %v2843 = vpop.f32.mrb[0].mxu0
        %v2844 = vadd.f32 %v2759, %v2843
        %v2845 = vpop.f32.mrb[0].mxu0
        %v2846 = vadd.f32 %v2763, %v2845
        %2847 = vmatprep.mubr.f32.mxu0 0.0
        %2848 = vmatmul.mubr.f32.gmra.mrb[0].mxu0 %v2692
        %v2849 = vpop.f32.mrb[0].mxu0
        %v2850 = vadd.f32 %v2759, %v2849
        %v2851 = vpop.f32.mrb[0].mxu0
        %v2852 = vadd.f32 %v2763, %v2851
        %2853 = vmatprep.mubr.f32.mxu0 0.0
        %2854 = vmatmul.mubr.f32.gmra.mrb[0].mxu0 %v2693
        %v2855 = vpop.f32.mrb[0].mxu0
        %v2856 = vadd.f32 %v2759, %v2855
        %v2857 = vpop.f32.mrb[0].mxu0
        %v2858 = vadd.f32 %v2763, %v2857
        %2859 = vmatprep.mubr.f32.mxu0 0.0
        %2860 = vmatmul.mubr.f32.gmra.mrb[0].mxu0 %v2694
        %v2861 = vpop.f32.mrb[0].mxu0
        %v2862 = vadd.f32 %v2759, %v2861
        %v2863 = vpop.f32.mrb[0].mxu0
        %v2864 = vadd.f32 %v2763, %v2863
        %2865 = vmatprep.mubr.f32.mxu0 0.0
        %2866 = vmatmul.mubr.f32.gmra.mrb[0].mxu0 %v2695
        %v2867 = vpop.f32.mrb[0].mxu0
        %v2868 = vadd.f32 %v2759, %v2867
        %v2869 = vpop.f32.mrb[0].mxu0
        %v2870 = vadd.f32 %v2763, %v2869
        %2871 = vmatprep.mubr.f32.mxu0 0.0
        %2872 = vmatmul.mubr.f32.gmra.mrb[0].mxu0 %v2696
        %v2873 = vpop.f32.mrb[0].mxu0
        %v2874 = vadd.f32 %v2759, %v2873
        %v2875 = vpop.f32.mrb[0].mxu0
        %v2876 = vadd.f32 %v2763, %v2875
        %2877 = vmatprep.mubr.f32.mxu0 0.0
        %2878 = vmatmul.mubr.f32.gmra.mrb[0].mxu0 %v2697
        %v2879 = vpop.f32.mrb[0].mxu0
        %v2880 = vadd.f32 %v2759, %v2879
        %v2881 = vpop.f32.mrb[0].mxu0
        %v2882 = vadd.f32 %v2763, %v2881
        %2883 = vmatprep.mubr.f32.mxu0 0.0
        %2884 = vmatmul.mubr.f32.gmra.mrb[0].mxu0 %v2698
        %v2885 = vpop.f32.mrb[0].mxu0
        %v2886 = vadd.f32 %v2759, %v2885
        %v2887 = vpop.f32.mrb[0].mxu0
        %v2888 = vadd.f32 %v2763, %v2887
        %2889 = vmatprep.mubr.f32.mxu0 0.0
        %2890 = vmatmul.mubr.f32.gmra.mrb[0].mxu0 %v2699
        %v2891 = vpop.f32.mrb[0].mxu0
        %v2892 = vadd.f32 %v2759, %v2891
        %v2893 = vpop.f32.mrb[0].mxu0
        %v2894 = vadd.f32 %v2763, %v2893
        %2895 = vmatprep.mubr.f32.mxu0 0.0
        %2896 = vmatmul.mubr.f32.gmra.mrb[0].mxu0 %v2700
        %v2897 = vpop.f32.mrb[0].mxu0
        %v2898 = vadd.f32 %v2759, %v2897
        %v2899 = vpop.f32.mrb[0].mxu0
        %v2900 = vadd.f32 %v2763, %v2899
        %2901 = vmatprep.mubr.f32.mxu0 0.0
        %2902 = vmatmul.mubr.f32.gmra.mrb[0].mxu0 %v2701
        %v2903 = vpop.f32.mrb[0].mxu0
        %v2904 = vadd.f32 %v2759, %v2903
        %v2905 = vpop.f32.mrb[0].mxu0
        %v2906 = vadd.f32 %v2763, %v2905
        %2907 = vmatprep.mubr.f32.mxu0 0.0
        %2908 = vmatmul.mubr.f32.gmra.mrb[0].mxu0 %v2702
        %v2909 = vpop.f32.mrb[0].mxu0
        %v2910 = vadd.f32 %v2759, %v2909
        %v2911 = vpop.f32.mrb[0].mxu0
        %v2912 = vadd.f32 %v2763, %v2911
        %2913 = vmatprep.mubr.f32.mxu0 0.0
        %2914 = vmatmul.mubr.f32.gmra.mrb[0].mxu0 %v2703
        %v2915 = vpop.f32.mrb[0].mxu0
        %v2916 = vadd.f32 %v2759, %v2915
        %v2917 = vpop.f32.mrb[0].mxu0
        %v2918 = vadd.f32 %v2763, %v2917
        %2919 = vmatprep.mubr.f32.mxu0 0.0
        %2920 = vmatmul.mubr.f32.gmra.mrb[0].mxu0 %v2704
        %v2921 = vpop.f32.mrb[0].mxu0
        %v2922 = vadd.f32 %v2759, %v2921
        %v2923 = vpop.f32.mrb[0].mxu0
        %v2924 = vadd.f32 %v2763, %v2923
        %2925 = vmatprep.mubr.f32.mxu0 0.0
        %2926 = vmatmul.mubr.f32.gmra.mrb[0].mxu0 %v2705
        %v2927 = vpop.f32.mrb[0].mxu0
        %v2928 = vadd.f32 %v2759, %v2927
        %v2929 = vpop.f32.mrb[0].mxu0
        %v2930 = vadd.f32 %v2763, %v2929
        %2931 = vdwg.mxu0
        %2932 = vmatprep.subr.mxu0 0.0
        %2933 = vmatpush1.msra.mxu0 %v2708
        %2934 = vmatprep.subr.mxu0 0.0
        %2935 = vmatpush1.msra.mxu0 %v2711
        %2936 = vmatprep.subr.mxu0 0.0
        %2937 = vmatpush1.msra.mxu0 %v2714
        %2938 = vmatprep.subr.mxu0 0.0
        %2939 = vmatpush1.msra.mxu0 %v2717
        %2940 = vmatprep.subr.mxu0 0.0
        %2941 = vmatpush1.msra.mxu0 %v2720
        %2942 = vmatprep.subr.mxu0 0.0
        %2943 = vmatpush1.msra.mxu0 %v2723
        %2944 = vmatprep.subr.mxu0 0.0
        %2945 = vmatpush1.msra.mxu0 %v2726
        %2946 = vmatprep.subr.mxu0 0.0
        %2947 = vmatpush1.msra.mxu0 %v2729
        %2948 = vmatprep.subr.mxu0 0.0
        %2949 = vmatpush1.msra.mxu0 %v2732
        %2950 = vmatprep.subr.mxu0 0.0
        %2951 = vmatpush1.msra.mxu0 %v2735
        %2952 = vmatprep.subr.mxu0 0.0
        %2953 = vmatpush1.msra.mxu0 %v2738
        %2954 = vmatprep.subr.mxu0 0.0
        %2955 = vmatpush1.msra.mxu0 %v2741
        %2956 = vmatprep.subr.mxu0 0.0
        %2957 = vmatpush1.msra.mxu0 %v2744
        %2958 = vmatprep.subr.mxu0 0.0
        %2959 = vmatpush1.msra.mxu0 %v2747
        %2960 = vmatprep.subr.mxu0 0.0
        %2961 = vmatpush1.msra.mxu0 %v2750
        %2962 = vmatprep.subr.mxu0 0.0
        %2963 = vmatpush1.msra.mxu0 %v2753
        %2964 = vmatprep.subr.mxu0 0.0
        %2965 = vmatpush1.msra.mxu0 0.0
        %2966 = vmatprep.subr.mxu0 0.0
        %2967 = vmatpush1.msra.mxu0 0.0
        %2968 = vmatprep.subr.mxu0 0.0
        %2969 = vmatpush1.msra.mxu0 0.0
        %2970 = vmatprep.subr.mxu0 0.0
        %2971 = vmatpush1.msra.mxu0 0.0
        %2972 = vmatprep.subr.mxu0 0.0
        %2973 = vmatpush1.msra.mxu0 0.0
        %2974 = vmatprep.subr.mxu0 0.0
        %2975 = vmatpush1.msra.mxu0 0.0
        %2976 = vmatprep.subr.mxu0 0.0
        %2977 = vmatpush1.msra.mxu0 0.0
        %2978 = vmatprep.subr.mxu0 0.0
        %2979 = vmatpush1.msra.mxu0 0.0
        %2980 = vmatprep.subr.mxu0 0.0
        %2981 = vmatpush1.msra.mxu0 0.0
        %2982 = vmatprep.subr.mxu0 0.0
        %2983 = vmatpush1.msra.mxu0 0.0
        %2984 = vmatprep.subr.mxu0 0.0
        %2985 = vmatpush1.msra.mxu0 0.0
        %2986 = vmatprep.subr.mxu0 0.0
        %2987 = vmatpush1.msra.mxu0 0.0
        %2988 = vmatprep.subr.mxu0 0.0
        %2989 = vmatpush1.msra.mxu0 0.0
        %2990 = vmatprep.subr.mxu0 0.0
        %2991 = vmatpush1.msra.mxu0 0.0
        %2992 = vmatprep.subr.mxu0 0.0
        %2993 = vmatpush1.msra.mxu0 0.0
        %2994 = vmatprep.subr.mxu0 0.0
        %2995 = vmatpush1.msra.mxu0 0.0
        %2996 = vmatprep.mubr.f32.mxu0 0.0
        %2997 = vmatmul.mubr.f32.gmra.mrb[0].mxu0 %v2690
        %v2998 = vpop.f32.mrb[0].mxu0
        %v2999 = vadd.f32 %v2767, %v2998
        %v3000 = vpop.f32.mrb[0].mxu0
        %3001 = vmatprep.mubr.f32.mxu0 0.0
        %3002 = vmatmul.mubr.f32.gmra.mrb[0].mxu0 %v2691
        %v3003 = vpop.f32.mrb[0].mxu0
        %v3004 = vadd.f32 %v2767, %v3003
        %v3005 = vpop.f32.mrb[0].mxu0
        %3006 = vmatprep.mubr.f32.mxu0 0.0
        %3007 = vmatmul.mubr.f32.gmra.mrb[0].mxu0 %v2692
        %v3008 = vpop.f32.mrb[0].mxu0
        %v3009 = vadd.f32 %v2767, %v3008
        %v3010 = vpop.f32.mrb[0].mxu0
        %3011 = vmatprep.mubr.f32.mxu0 0.0
        %3012 = vmatmul.mubr.f32.gmra.mrb[0].mxu0 %v2693
        %v3013 = vpop.f32.mrb[0].mxu0
        %v3014 = vadd.f32 %v2767, %v3013
        %v3015 = vpop.f32.mrb[0].mxu0
        %3016 = vmatprep.mubr.f32.mxu0 0.0
        %3017 = vmatmul.mubr.f32.gmra.mrb[0].mxu0 %v2694
        %v3018 = vpop.f32.mrb[0].mxu0
        %v3019 = vadd.f32 %v2767, %v3018
        %v3020 = vpop.f32.mrb[0].mxu0
        %3021 = vmatprep.mubr.f32.mxu0 0.0
        %3022 = vmatmul.mubr.f32.gmra.mrb[0].mxu0 %v2695
        %v3023 = vpop.f32.mrb[0].mxu0
        %v3024 = vadd.f32 %v2767, %v3023
        %v3025 = vpop.f32.mrb[0].mxu0
        %3026 = vmatprep.mubr.f32.mxu0 0.0
        %3027 = vmatmul.mubr.f32.gmra.mrb[0].mxu0 %v2696
        %v3028 = vpop.f32.mrb[0].mxu0
        %v3029 = vadd.f32 %v2767, %v3028
        %v3030 = vpop.f32.mrb[0].mxu0
        %3031 = vmatprep.mubr.f32.mxu0 0.0
        %3032 = vmatmul.mubr.f32.gmra.mrb[0].mxu0 %v2697
        %v3033 = vpop.f32.mrb[0].mxu0
        %v3034 = vadd.f32 %v2767, %v3033
        %v3035 = vpop.f32.mrb[0].mxu0
        %3036 = vmatprep.mubr.f32.mxu0 0.0
        %3037 = vmatmul.mubr.f32.gmra.mrb[0].mxu0 %v2698
        %v3038 = vpop.f32.mrb[0].mxu0
        %v3039 = vadd.f32 %v2767, %v3038
        %v3040 = vpop.f32.mrb[0].mxu0
        %3041 = vmatprep.mubr.f32.mxu0 0.0
        %3042 = vmatmul.mubr.f32.gmra.mrb[0].mxu0 %v2699
        %v3043 = vpop.f32.mrb[0].mxu0
        %v3044 = vadd.f32 %v2767, %v3043
        %v3045 = vpop.f32.mrb[0].mxu0
        %3046 = vmatprep.mubr.f32.mxu0 0.0
        %3047 = vmatmul.mubr.f32.gmra.mrb[0].mxu0 %v2700
        %v3048 = vpop.f32.mrb[0].mxu0
        %v3049 = vadd.f32 %v2767, %v3048
        %v3050 = vpop.f32.mrb[0].mxu0
        %3051 = vmatprep.mubr.f32.mxu0 0.0
        %3052 = vmatmul.mubr.f32.gmra.mrb[0].mxu0 %v2701
        %v3053 = vpop.f32.mrb[0].mxu0
        %v3054 = vadd.f32 %v2767, %v3053
        %v3055 = vpop.f32.mrb[0].mxu0
        %3056 = vmatprep.mubr.f32.mxu0 0.0
        %3057 = vmatmul.mubr.f32.gmra.mrb[0].mxu0 %v2702
        %v3058 = vpop.f32.mrb[0].mxu0
        %v3059 = vadd.f32 %v2767, %v3058
        %v3060 = vpop.f32.mrb[0].mxu0
        %3061 = vmatprep.mubr.f32.mxu0 0.0
        %3062 = vmatmul.mubr.f32.gmra.mrb[0].mxu0 %v2703
        %v3063 = vpop.f32.mrb[0].mxu0
        %v3064 = vadd.f32 %v2767, %v3063
        %v3065 = vpop.f32.mrb[0].mxu0
        %3066 = vmatprep.mubr.f32.mxu0 0.0
        %3067 = vmatmul.mubr.f32.gmra.mrb[0].mxu0 %v2704
        %v3068 = vpop.f32.mrb[0].mxu0
        %v3069 = vadd.f32 %v2767, %v3068
        %v3070 = vpop.f32.mrb[0].mxu0
        %3071 = vmatprep.mubr.f32.mxu0 0.0
        %3072 = vmatmul.mubr.f32.gmra.mrb[0].mxu0 %v2705
        %v3073 = vpop.f32.mrb[0].mxu0
        %v3074 = vadd.f32 %v2767, %v3073
        %v3075 = vpop.f32.mrb[0].mxu0
        %3076 = vdwg.mxu0
        %v3077 = vld [vmem:[#allocation8] sm:$0xff]
        %v3078 = vld [vmem:[#allocation8 + $0x8] sm:$0xff]
        %v3079 = vld [vmem:[#allocation8 + $0x10] sm:$0xff]
        %v3080 = vld [vmem:[#allocation8 + $0x18] sm:$0xff]
        %v3081 = vld [vmem:[#allocation8 + $0x20] sm:$0xff]
        %v3082 = vld [vmem:[#allocation8 + $0x28] sm:$0xff]
        %v3083 = vld [vmem:[#allocation8 + $0x30] sm:$0xff]
        %v3084 = vld [vmem:[#allocation8 + $0x38] sm:$0xff]
        %v3085 = vld [vmem:[#allocation8 + $0x40] sm:$0xff]
        %v3086 = vld [vmem:[#allocation8 + $0x48] sm:$0xff]
        %v3087 = vld [vmem:[#allocation8 + $0x50] sm:$0xff]
        %v3088 = vld [vmem:[#allocation8 + $0x58] sm:$0xff]
        %v3089 = vld [vmem:[#allocation8 + $0x60] sm:$0xff]
        %v3090 = vld [vmem:[#allocation8 + $0x68] sm:$0xff]
        %v3091 = vld [vmem:[#allocation8 + $0x70] sm:$0xff]
        %v3092 = vld [vmem:[#allocation8 + $0x78] sm:$0xff]
        %v3093 = vld [vmem:[#allocation8 + $0x80] sm:$0xff]
        %v3094 = vld [vmem:[#allocation8 + $0x88] sm:$0xff]
        %v3095 = vld [vmem:[#allocation8 + $0x90] sm:$0xff]
        %v3096 = vld [vmem:[#allocation8 + $0x98] sm:$0xff]
        %v3097 = vld [vmem:[#allocation8 + $0xa0] sm:$0xff]
        %v3098 = vld [vmem:[#allocation8 + $0xa8] sm:$0xff]
        %v3099 = vld [vmem:[#allocation8 + $0xb0] sm:$0xff]
        %v3100 = vld [vmem:[#allocation8 + $0xb8] sm:$0xff]
        %v3101 = vld [vmem:[#allocation8 + $0xc0] sm:$0xff]
        %v3102 = vld [vmem:[#allocation8 + $0xc8] sm:$0xff]
        %v3103 = vld [vmem:[#allocation8 + $0xd0] sm:$0xff]
        %v3104 = vld [vmem:[#allocation8 + $0xd8] sm:$0xff]
        %v3105 = vld [vmem:[#allocation8 + $0xe0] sm:$0xff]
        %v3106 = vld [vmem:[#allocation8 + $0xe8] sm:$0xff]
        %v3107 = vld [vmem:[#allocation8 + $0xf0] sm:$0xff]
        %v3108 = vld [vmem:[#allocation8 + $0xf8] sm:$0xff]
        %v3109 = vld [vmem:[#allocation8 + $0x100] sm:$0xff]
        %v3110 = vld [vmem:[#allocation8 + $0x108] sm:$0xff]
        %v3111 = vld [vmem:[#allocation8 + $0x110] sm:$0xff]
        %v3112 = vld [vmem:[#allocation8 + $0x118] sm:$0xff]
        %v3113 = vld [vmem:[#allocation8 + $0x120] sm:$0xff]
        %v3114 = vld [vmem:[#allocation8 + $0x128] sm:$0xff]
        %v3115 = vld [vmem:[#allocation8 + $0x130] sm:$0xff]
        %v3116 = vld [vmem:[#allocation8 + $0x138] sm:$0xff]
        %v3117 = vld [vmem:[#allocation8 + $0x140] sm:$0xff]
        %v3118 = vld [vmem:[#allocation8 + $0x148] sm:$0xff]
        %v3119 = vld [vmem:[#allocation8 + $0x150] sm:$0xff]
        %v3120 = vld [vmem:[#allocation8 + $0x158] sm:$0xff]
        %v3121 = vld [vmem:[#allocation8 + $0x160] sm:$0xff]
        %v3122 = vld [vmem:[#allocation8 + $0x168] sm:$0xff]
        %v3123 = vld [vmem:[#allocation8 + $0x170] sm:$0xff]
        %v3124 = vld [vmem:[#allocation8 + $0x178] sm:$0xff]
        %v3125 = vld [vmem:[%s9] sm:$0x7]
        %v3127 = vlaneseq
        %v3128 = vshrl.u32 %v3127, 7
        %v3129 = vsub.s32 0, %v3128
        %v3130 = vrot.slane %v3125, %v3129
        %v3131 = vlaneseq
        %v3132 = vshrl.u32 %v3131, 7
        %v3133 = vsub.s32 1, %v3132
        %v3134 = vrot.slane %v3125, %v3133
        %v3135 = vlaneseq
        %v3136 = vshrl.u32 %v3135, 7
        %v3137 = vsub.s32 2, %v3136
        %v3138 = vrot.slane %v3125, %v3137
        %3142 = vmatprep.subr.mxu0 %v3078
        %3143 = vmatpush1.msra.mxu0 %v3077
        %3144 = vmatprep.subr.mxu0 %v3081
        %3145 = vmatpush1.msra.mxu0 %v3080
        %3146 = vmatprep.subr.mxu0 %v3084
        %3147 = vmatpush1.msra.mxu0 %v3083
        %3148 = vmatprep.subr.mxu0 %v3087
        %3149 = vmatpush1.msra.mxu0 %v3086
        %3150 = vmatprep.subr.mxu0 %v3090
        %3151 = vmatpush1.msra.mxu0 %v3089
        %3152 = vmatprep.subr.mxu0 %v3093
        %3153 = vmatpush1.msra.mxu0 %v3092
        %3154 = vmatprep.subr.mxu0 %v3096
        %3155 = vmatpush1.msra.mxu0 %v3095
        %3156 = vmatprep.subr.mxu0 %v3099
        %3157 = vmatpush1.msra.mxu0 %v3098
        %3158 = vmatprep.subr.mxu0 %v3102
        %3159 = vmatpush1.msra.mxu0 %v3101
        %3160 = vmatprep.subr.mxu0 %v3105
        %3161 = vmatpush1.msra.mxu0 %v3104
        %3162 = vmatprep.subr.mxu0 %v3108
        %3163 = vmatpush1.msra.mxu0 %v3107
        %3164 = vmatprep.subr.mxu0 %v3111
        %3165 = vmatpush1.msra.mxu0 %v3110
        %3166 = vmatprep.subr.mxu0 %v3114
        %3167 = vmatpush1.msra.mxu0 %v3113
        %3168 = vmatprep.subr.mxu0 %v3117
        %3169 = vmatpush1.msra.mxu0 %v3116
        %3170 = vmatprep.subr.mxu0 %v3120
        %3171 = vmatpush1.msra.mxu0 %v3119
        %3172 = vmatprep.subr.mxu0 %v3123
        %3173 = vmatpush1.msra.mxu0 %v3122
        %3174 = vmatprep.subr.mxu0 0.0
        %3175 = vmatpush1.msra.mxu0 0.0
        %3176 = vmatprep.subr.mxu0 0.0
        %3177 = vmatpush1.msra.mxu0 0.0
        %3178 = vmatprep.subr.mxu0 0.0
        %3179 = vmatpush1.msra.mxu0 0.0
        %3180 = vmatprep.subr.mxu0 0.0
        %3181 = vmatpush1.msra.mxu0 0.0
        %3182 = vmatprep.subr.mxu0 0.0
        %3183 = vmatpush1.msra.mxu0 0.0
        %3184 = vmatprep.subr.mxu0 0.0
        %3185 = vmatpush1.msra.mxu0 0.0
        %3186 = vmatprep.subr.mxu0 0.0
        %3187 = vmatpush1.msra.mxu0 0.0
        %3188 = vmatprep.subr.mxu0 0.0
        %3189 = vmatpush1.msra.mxu0 0.0
        %3190 = vmatprep.subr.mxu0 0.0
        %3191 = vmatpush1.msra.mxu0 0.0
        %3192 = vmatprep.subr.mxu0 0.0
        %3193 = vmatpush1.msra.mxu0 0.0
        %3194 = vmatprep.subr.mxu0 0.0
        %3195 = vmatpush1.msra.mxu0 0.0
        %3196 = vmatprep.subr.mxu0 0.0
        %3197 = vmatpush1.msra.mxu0 0.0
        %3198 = vmatprep.subr.mxu0 0.0
        %3199 = vmatpush1.msra.mxu0 0.0
        %3200 = vmatprep.subr.mxu0 0.0
        %3201 = vmatpush1.msra.mxu0 0.0
        %3202 = vmatprep.subr.mxu0 0.0
        %3203 = vmatpush1.msra.mxu0 0.0
        %3204 = vmatprep.subr.mxu0 0.0
        %3205 = vmatpush1.msra.mxu0 0.0
        %3206 = vmatprep.mubr.f32.mxu0 0.0
        %3207 = vmatmul.mubr.f32.gmra.mrb[0].mxu0 %v484
        %v3208 = vpop.f32.mrb[0].mxu0
        %v3209 = vadd.f32 %v3130, %v3208
        %v3210 = vpop.f32.mrb[0].mxu0
        %v3211 = vadd.f32 %v3134, %v3210
        %3212 = vmatprep.mubr.f32.mxu0 0.0
        %3213 = vmatmul.mubr.f32.gmra.mrb[0].mxu0 %v485
        %v3214 = vpop.f32.mrb[0].mxu0
        %v3215 = vadd.f32 %v3130, %v3214
        %v3216 = vpop.f32.mrb[0].mxu0
        %v3217 = vadd.f32 %v3134, %v3216
        %3218 = vmatprep.mubr.f32.mxu0 0.0
        %3219 = vmatmul.mubr.f32.gmra.mrb[0].mxu0 %v486
        %v3220 = vpop.f32.mrb[0].mxu0
        %v3221 = vadd.f32 %v3130, %v3220
        %v3222 = vpop.f32.mrb[0].mxu0
        %v3223 = vadd.f32 %v3134, %v3222
        %3224 = vmatprep.mubr.f32.mxu0 0.0
        %3225 = vmatmul.mubr.f32.gmra.mrb[0].mxu0 %v487
        %v3226 = vpop.f32.mrb[0].mxu0
        %v3227 = vadd.f32 %v3130, %v3226
        %v3228 = vpop.f32.mrb[0].mxu0
        %v3229 = vadd.f32 %v3134, %v3228
        %3230 = vmatprep.mubr.f32.mxu0 0.0
        %3231 = vmatmul.mubr.f32.gmra.mrb[0].mxu0 %v488
        %v3232 = vpop.f32.mrb[0].mxu0
        %v3233 = vadd.f32 %v3130, %v3232
        %v3234 = vpop.f32.mrb[0].mxu0
        %v3235 = vadd.f32 %v3134, %v3234
        %3236 = vmatprep.mubr.f32.mxu0 0.0
        %3237 = vmatmul.mubr.f32.gmra.mrb[0].mxu0 %v489
        %v3238 = vpop.f32.mrb[0].mxu0
        %v3239 = vadd.f32 %v3130, %v3238
        %v3240 = vpop.f32.mrb[0].mxu0
        %v3241 = vadd.f32 %v3134, %v3240
        %3242 = vmatprep.mubr.f32.mxu0 0.0
        %3243 = vmatmul.mubr.f32.gmra.mrb[0].mxu0 %v490
        %v3244 = vpop.f32.mrb[0].mxu0
        %v3245 = vadd.f32 %v3130, %v3244
        %v3246 = vpop.f32.mrb[0].mxu0
        %v3247 = vadd.f32 %v3134, %v3246
        %3248 = vmatprep.mubr.f32.mxu0 0.0
        %3249 = vmatmul.mubr.f32.gmra.mrb[0].mxu0 %v491
        %v3250 = vpop.f32.mrb[0].mxu0
        %v3251 = vadd.f32 %v3130, %v3250
        %v3252 = vpop.f32.mrb[0].mxu0
        %v3253 = vadd.f32 %v3134, %v3252
        %3254 = vmatprep.mubr.f32.mxu0 0.0
        %3255 = vmatmul.mubr.f32.gmra.mrb[0].mxu0 %v492
        %v3256 = vpop.f32.mrb[0].mxu0
        %v3257 = vadd.f32 %v3130, %v3256
        %v3258 = vpop.f32.mrb[0].mxu0
        %v3259 = vadd.f32 %v3134, %v3258
        %3260 = vmatprep.mubr.f32.mxu0 0.0
        %3261 = vmatmul.mubr.f32.gmra.mrb[0].mxu0 %v493
        %v3262 = vpop.f32.mrb[0].mxu0
        %v3263 = vadd.f32 %v3130, %v3262
        %v3264 = vpop.f32.mrb[0].mxu0
        %v3265 = vadd.f32 %v3134, %v3264
        %3266 = vmatprep.mubr.f32.mxu0 0.0
        %3267 = vmatmul.mubr.f32.gmra.mrb[0].mxu0 %v494
        %v3268 = vpop.f32.mrb[0].mxu0
        %v3269 = vadd.f32 %v3130, %v3268
        %v3270 = vpop.f32.mrb[0].mxu0
        %v3271 = vadd.f32 %v3134, %v3270
        %3272 = vmatprep.mubr.f32.mxu0 0.0
        %3273 = vmatmul.mubr.f32.gmra.mrb[0].mxu0 %v495
        %v3274 = vpop.f32.mrb[0].mxu0
        %v3275 = vadd.f32 %v3130, %v3274
        %v3276 = vpop.f32.mrb[0].mxu0
        %v3277 = vadd.f32 %v3134, %v3276
        %3278 = vmatprep.mubr.f32.mxu0 0.0
        %3279 = vmatmul.mubr.f32.gmra.mrb[0].mxu0 %v496
        %v3280 = vpop.f32.mrb[0].mxu0
        %v3281 = vadd.f32 %v3130, %v3280
        %v3282 = vpop.f32.mrb[0].mxu0
        %v3283 = vadd.f32 %v3134, %v3282
        %3284 = vmatprep.mubr.f32.mxu0 0.0
        %3285 = vmatmul.mubr.f32.gmra.mrb[0].mxu0 %v497
        %v3286 = vpop.f32.mrb[0].mxu0
        %v3287 = vadd.f32 %v3130, %v3286
        %v3288 = vpop.f32.mrb[0].mxu0
        %v3289 = vadd.f32 %v3134, %v3288
        %3290 = vmatprep.mubr.f32.mxu0 0.0
        %3291 = vmatmul.mubr.f32.gmra.mrb[0].mxu0 %v498
        %v3292 = vpop.f32.mrb[0].mxu0
        %v3293 = vadd.f32 %v3130, %v3292
        %v3294 = vpop.f32.mrb[0].mxu0
        %v3295 = vadd.f32 %v3134, %v3294
        %3296 = vmatprep.mubr.f32.mxu0 0.0
        %3297 = vmatmul.mubr.f32.gmra.mrb[0].mxu0 %v499
        %v3298 = vpop.f32.mrb[0].mxu0
        %v3299 = vadd.f32 %v3130, %v3298
        %v3300 = vpop.f32.mrb[0].mxu0
        %v3301 = vadd.f32 %v3134, %v3300
        %3302 = vdwg.mxu0
        %3303 = vmatprep.subr.mxu0 0.0
        %3304 = vmatpush1.msra.mxu0 %v3079
        %3305 = vmatprep.subr.mxu0 0.0
        %3306 = vmatpush1.msra.mxu0 %v3082
        %3307 = vmatprep.subr.mxu0 0.0
        %3308 = vmatpush1.msra.mxu0 %v3085
        %3309 = vmatprep.subr.mxu0 0.0
        %3310 = vmatpush1.msra.mxu0 %v3088
        %3311 = vmatprep.subr.mxu0 0.0
        %3312 = vmatpush1.msra.mxu0 %v3091
        %3313 = vmatprep.subr.mxu0 0.0
        %3314 = vmatpush1.msra.mxu0 %v3094
        %3315 = vmatprep.subr.mxu0 0.0
        %3316 = vmatpush1.msra.mxu0 %v3097
        %3317 = vmatprep.subr.mxu0 0.0
        %3318 = vmatpush1.msra.mxu0 %v3100
        %3319 = vmatprep.subr.mxu0 0.0
        %3320 = vmatpush1.msra.mxu0 %v3103
        %3321 = vmatprep.subr.mxu0 0.0
        %3322 = vmatpush1.msra.mxu0 %v3106
        %3323 = vmatprep.subr.mxu0 0.0
        %3324 = vmatpush1.msra.mxu0 %v3109
        %3325 = vmatprep.subr.mxu0 0.0
        %3326 = vmatpush1.msra.mxu0 %v3112
        %3327 = vmatprep.subr.mxu0 0.0
        %3328 = vmatpush1.msra.mxu0 %v3115
        %3329 = vmatprep.subr.mxu0 0.0
        %3330 = vmatpush1.msra.mxu0 %v3118
        %3331 = vmatprep.subr.mxu0 0.0
        %3332 = vmatpush1.msra.mxu0 %v3121
        %3333 = vmatprep.subr.mxu0 0.0
        %3334 = vmatpush1.msra.mxu0 %v3124
        %3335 = vmatprep.subr.mxu0 0.0
        %3336 = vmatpush1.msra.mxu0 0.0
        %3337 = vmatprep.subr.mxu0 0.0
        %3338 = vmatpush1.msra.mxu0 0.0
        %3339 = vmatprep.subr.mxu0 0.0
        %3340 = vmatpush1.msra.mxu0 0.0
        %3341 = vmatprep.subr.mxu0 0.0
        %3342 = vmatpush1.msra.mxu0 0.0
        %3343 = vmatprep.subr.mxu0 0.0
        %3344 = vmatpush1.msra.mxu0 0.0
        %3345 = vmatprep.subr.mxu0 0.0
        %3346 = vmatpush1.msra.mxu0 0.0
        %3347 = vmatprep.subr.mxu0 0.0
        %3348 = vmatpush1.msra.mxu0 0.0
        %3349 = vmatprep.subr.mxu0 0.0
        %3350 = vmatpush1.msra.mxu0 0.0
        %3351 = vmatprep.subr.mxu0 0.0
        %3352 = vmatpush1.msra.mxu0 0.0
        %3353 = vmatprep.subr.mxu0 0.0
        %3354 = vmatpush1.msra.mxu0 0.0
        %3355 = vmatprep.subr.mxu0 0.0
        %3356 = vmatpush1.msra.mxu0 0.0
        %3357 = vmatprep.subr.mxu0 0.0
        %3358 = vmatpush1.msra.mxu0 0.0
        %3359 = vmatprep.subr.mxu0 0.0
        %3360 = vmatpush1.msra.mxu0 0.0
        %3361 = vmatprep.subr.mxu0 0.0
        %3362 = vmatpush1.msra.mxu0 0.0
        %3363 = vmatprep.subr.mxu0 0.0
        %3364 = vmatpush1.msra.mxu0 0.0
        %3365 = vmatprep.subr.mxu0 0.0
        %3366 = vmatpush1.msra.mxu0 0.0
        %3367 = vmatprep.mubr.f32.mxu0 0.0
        %3368 = vmatmul.mubr.f32.gmra.mrb[0].mxu0 %v484
        %v3369 = vpop.f32.mrb[0].mxu0
        %v3370 = vadd.f32 %v3138, %v3369
        %v3371 = vpop.f32.mrb[0].mxu0
        %3372 = vmatprep.mubr.f32.mxu0 0.0
        %3373 = vmatmul.mubr.f32.gmra.mrb[0].mxu0 %v485
        %v3374 = vpop.f32.mrb[0].mxu0
        %v3375 = vadd.f32 %v3138, %v3374
        %v3376 = vpop.f32.mrb[0].mxu0
        %3377 = vmatprep.mubr.f32.mxu0 0.0
        %3378 = vmatmul.mubr.f32.gmra.mrb[0].mxu0 %v486
        %v3379 = vpop.f32.mrb[0].mxu0
        %v3380 = vadd.f32 %v3138, %v3379
        %v3381 = vpop.f32.mrb[0].mxu0
        %3382 = vmatprep.mubr.f32.mxu0 0.0
        %3383 = vmatmul.mubr.f32.gmra.mrb[0].mxu0 %v487
        %v3384 = vpop.f32.mrb[0].mxu0
        %v3385 = vadd.f32 %v3138, %v3384
        %v3386 = vpop.f32.mrb[0].mxu0
        %3387 = vmatprep.mubr.f32.mxu0 0.0
        %3388 = vmatmul.mubr.f32.gmra.mrb[0].mxu0 %v488
        %v3389 = vpop.f32.mrb[0].mxu0
        %v3390 = vadd.f32 %v3138, %v3389
        %v3391 = vpop.f32.mrb[0].mxu0
        %3392 = vmatprep.mubr.f32.mxu0 0.0
        %3393 = vmatmul.mubr.f32.gmra.mrb[0].mxu0 %v489
        %v3394 = vpop.f32.mrb[0].mxu0
        %v3395 = vadd.f32 %v3138, %v3394
        %v3396 = vpop.f32.mrb[0].mxu0
        %3397 = vmatprep.mubr.f32.mxu0 0.0
        %3398 = vmatmul.mubr.f32.gmra.mrb[0].mxu0 %v490
        %v3399 = vpop.f32.mrb[0].mxu0
        %v3400 = vadd.f32 %v3138, %v3399
        %v3401 = vpop.f32.mrb[0].mxu0
        %3402 = vmatprep.mubr.f32.mxu0 0.0
        %3403 = vmatmul.mubr.f32.gmra.mrb[0].mxu0 %v491
        %v3404 = vpop.f32.mrb[0].mxu0
        %v3405 = vadd.f32 %v3138, %v3404
        %v3406 = vpop.f32.mrb[0].mxu0
        %3407 = vmatprep.mubr.f32.mxu0 0.0
        %3408 = vmatmul.mubr.f32.gmra.mrb[0].mxu0 %v492
        %v3409 = vpop.f32.mrb[0].mxu0
        %v3410 = vadd.f32 %v3138, %v3409
        %v3411 = vpop.f32.mrb[0].mxu0
        %3412 = vmatprep.mubr.f32.mxu0 0.0
        %3413 = vmatmul.mubr.f32.gmra.mrb[0].mxu0 %v493
        %v3414 = vpop.f32.mrb[0].mxu0
        %v3415 = vadd.f32 %v3138, %v3414
        %v3416 = vpop.f32.mrb[0].mxu0
        %3417 = vmatprep.mubr.f32.mxu0 0.0
        %3418 = vmatmul.mubr.f32.gmra.mrb[0].mxu0 %v494
        %v3419 = vpop.f32.mrb[0].mxu0
        %v3420 = vadd.f32 %v3138, %v3419
        %v3421 = vpop.f32.mrb[0].mxu0
        %3422 = vmatprep.mubr.f32.mxu0 0.0
        %3423 = vmatmul.mubr.f32.gmra.mrb[0].mxu0 %v495
        %v3424 = vpop.f32.mrb[0].mxu0
        %v3425 = vadd.f32 %v3138, %v3424
        %v3426 = vpop.f32.mrb[0].mxu0
        %3427 = vmatprep.mubr.f32.mxu0 0.0
        %3428 = vmatmul.mubr.f32.gmra.mrb[0].mxu0 %v496
        %v3429 = vpop.f32.mrb[0].mxu0
        %v3430 = vadd.f32 %v3138, %v3429
        %v3431 = vpop.f32.mrb[0].mxu0
        %3432 = vmatprep.mubr.f32.mxu0 0.0
        %3433 = vmatmul.mubr.f32.gmra.mrb[0].mxu0 %v497
        %v3434 = vpop.f32.mrb[0].mxu0
        %v3435 = vadd.f32 %v3138, %v3434
        %v3436 = vpop.f32.mrb[0].mxu0
        %3437 = vmatprep.mubr.f32.mxu0 0.0
        %3438 = vmatmul.mubr.f32.gmra.mrb[0].mxu0 %v498
        %v3439 = vpop.f32.mrb[0].mxu0
        %v3440 = vadd.f32 %v3138, %v3439
        %v3441 = vpop.f32.mrb[0].mxu0
        %3442 = vmatprep.mubr.f32.mxu0 0.0
        %3443 = vmatmul.mubr.f32.gmra.mrb[0].mxu0 %v499
        %v3444 = vpop.f32.mrb[0].mxu0
        %v3445 = vadd.f32 %v3138, %v3444
        %v3446 = vpop.f32.mrb[0].mxu0
        %3447 = vdwg.mxu0
        %v3448 = vadd.f32 %v2838, %v3209
        %v3449 = vadd.f32 %v2844, %v3215
        %v3450 = vadd.f32 %v2850, %v3221
        %v3451 = vadd.f32 %v2856, %v3227
        %v3452 = vadd.f32 %v2862, %v3233
        %v3453 = vadd.f32 %v2868, %v3239
        %v3454 = vadd.f32 %v2874, %v3245
        %v3455 = vadd.f32 %v2880, %v3251
        %v3456 = vadd.f32 %v2886, %v3257
        %v3457 = vadd.f32 %v2892, %v3263
        %v3458 = vadd.f32 %v2898, %v3269
        %v3459 = vadd.f32 %v2904, %v3275
        %v3460 = vadd.f32 %v2910, %v3281
        %v3461 = vadd.f32 %v2916, %v3287
        %v3462 = vadd.f32 %v2922, %v3293
        %v3463 = vadd.f32 %v2928, %v3299
        %v3464 = vxor.u32 %v3448, 2147483648
        %v3465 = vxor.u32 %v3449, 2147483648
        %v3466 = vxor.u32 %v3450, 2147483648
        %v3467 = vxor.u32 %v3451, 2147483648
        %v3468 = vxor.u32 %v3452, 2147483648
        %v3469 = vxor.u32 %v3453, 2147483648
        %v3470 = vxor.u32 %v3454, 2147483648
        %v3471 = vxor.u32 %v3455, 2147483648
        %v3472 = vxor.u32 %v3456, 2147483648
        %v3473 = vxor.u32 %v3457, 2147483648
        %v3474 = vxor.u32 %v3458, 2147483648
        %v3475 = vxor.u32 %v3459, 2147483648
        %v3476 = vxor.u32 %v3460, 2147483648
        %v3477 = vxor.u32 %v3461, 2147483648
        %v3478 = vxor.u32 %v3462, 2147483648
        %v3479 = vxor.u32 %v3463, 2147483648
        %v3480 = vmul.f32 %v3464, 1.442695
        %v3481 = vpow.pop %v3480
        %v3482 = vmul.f32 %v3465, 1.442695
        %v3483 = vpow.pop %v3482
        %v3484 = vmul.f32 %v3466, 1.442695
        %v3485 = vpow.pop %v3484
        %v3486 = vmul.f32 %v3467, 1.442695
        %v3487 = vpow.pop %v3486
        %v3488 = vmul.f32 %v3468, 1.442695
        %v3489 = vpow.pop %v3488
        %v3490 = vmul.f32 %v3469, 1.442695
        %v3491 = vpow.pop %v3490
        %v3492 = vmul.f32 %v3470, 1.442695
        %v3493 = vpow.pop %v3492
        %v3494 = vmul.f32 %v3471, 1.442695
        %v3495 = vpow.pop %v3494
        %v3496 = vmul.f32 %v3472, 1.442695
        %v3497 = vpow.pop %v3496
        %v3498 = vmul.f32 %v3473, 1.442695
        %v3499 = vpow.pop %v3498
        %v3500 = vmul.f32 %v3474, 1.442695
        %v3501 = vpow.pop %v3500
        %v3502 = vmul.f32 %v3475, 1.442695
        %v3503 = vpow.pop %v3502
        %v3504 = vmul.f32 %v3476, 1.442695
        %v3505 = vpow.pop %v3504
        %v3506 = vmul.f32 %v3477, 1.442695
        %v3507 = vpow.pop %v3506
        %v3508 = vmul.f32 %v3478, 1.442695
        %v3509 = vpow.pop %v3508
        %v3510 = vmul.f32 %v3479, 1.442695
        %v3511 = vpow.pop %v3510
        %v3512 = vadd.f32 %v3481, 1.0
        %v3513 = vadd.f32 %v3483, 1.0
        %v3514 = vadd.f32 %v3485, 1.0
        %v3515 = vadd.f32 %v3487, 1.0
        %v3516 = vadd.f32 %v3489, 1.0
        %v3517 = vadd.f32 %v3491, 1.0
        %v3518 = vadd.f32 %v3493, 1.0
        %v3519 = vadd.f32 %v3495, 1.0
        %v3520 = vadd.f32 %v3497, 1.0
        %v3521 = vadd.f32 %v3499, 1.0
        %v3522 = vadd.f32 %v3501, 1.0
        %v3523 = vadd.f32 %v3503, 1.0
        %v3524 = vadd.f32 %v3505, 1.0
        %v3525 = vadd.f32 %v3507, 1.0
        %v3526 = vadd.f32 %v3509, 1.0
        %v3527 = vadd.f32 %v3511, 1.0
        %v3528 = vrcp.pop %v3512
        %v3529 = vmul.f32 1.0, %v3528
        %v3530 = vrcp.pop %v3513
        %v3531 = vmul.f32 1.0, %v3530
        %v3532 = vrcp.pop %v3514
        %v3533 = vmul.f32 1.0, %v3532
        %v3534 = vrcp.pop %v3515
        %v3535 = vmul.f32 1.0, %v3534
        %v3536 = vrcp.pop %v3516
        %v3537 = vmul.f32 1.0, %v3536
        %v3538 = vrcp.pop %v3517
        %v3539 = vmul.f32 1.0, %v3538
        %v3540 = vrcp.pop %v3518
        %v3541 = vmul.f32 1.0, %v3540
        %v3542 = vrcp.pop %v3519
        %v3543 = vmul.f32 1.0, %v3542
        %v3544 = vrcp.pop %v3520
        %v3545 = vmul.f32 1.0, %v3544
        %v3546 = vrcp.pop %v3521
        %v3547 = vmul.f32 1.0, %v3546
        %v3548 = vrcp.pop %v3522
        %v3549 = vmul.f32 1.0, %v3548
        %v3550 = vrcp.pop %v3523
        %v3551 = vmul.f32 1.0, %v3550
        %v3552 = vrcp.pop %v3524
        %v3553 = vmul.f32 1.0, %v3552
        %v3554 = vrcp.pop %v3525
        %v3555 = vmul.f32 1.0, %v3554
        %v3556 = vrcp.pop %v3526
        %v3557 = vmul.f32 1.0, %v3556
        %v3558 = vrcp.pop %v3527
        %v3559 = vmul.f32 1.0, %v3558
        %v3560 = vadd.f32 %v2840, %v3211
        %v3561 = vadd.f32 %v2846, %v3217
        %v3562 = vadd.f32 %v2852, %v3223
        %v3563 = vadd.f32 %v2858, %v3229
        %v3564 = vadd.f32 %v2864, %v3235
        %v3565 = vadd.f32 %v2870, %v3241
        %v3566 = vadd.f32 %v2876, %v3247
        %v3567 = vadd.f32 %v2882, %v3253
        %v3568 = vadd.f32 %v2888, %v3259
        %v3569 = vadd.f32 %v2894, %v3265
        %v3570 = vadd.f32 %v2900, %v3271
        %v3571 = vadd.f32 %v2906, %v3277
        %v3572 = vadd.f32 %v2912, %v3283
        %v3573 = vadd.f32 %v2918, %v3289
        %v3574 = vadd.f32 %v2924, %v3295
        %v3575 = vadd.f32 %v2930, %v3301
        %v3576 = vxor.u32 %v3560, 2147483648
        %v3577 = vxor.u32 %v3561, 2147483648
        %v3578 = vxor.u32 %v3562, 2147483648
        %v3579 = vxor.u32 %v3563, 2147483648
        %v3580 = vxor.u32 %v3564, 2147483648
        %v3581 = vxor.u32 %v3565, 2147483648
        %v3582 = vxor.u32 %v3566, 2147483648
        %v3583 = vxor.u32 %v3567, 2147483648
        %v3584 = vxor.u32 %v3568, 2147483648
        %v3585 = vxor.u32 %v3569, 2147483648
        %v3586 = vxor.u32 %v3570, 2147483648
        %v3587 = vxor.u32 %v3571, 2147483648
        %v3588 = vxor.u32 %v3572, 2147483648
        %v3589 = vxor.u32 %v3573, 2147483648
        %v3590 = vxor.u32 %v3574, 2147483648
        %v3591 = vxor.u32 %v3575, 2147483648
        %v3592 = vmul.f32 %v3576, 1.442695
        %v3593 = vpow.pop %v3592
        %v3594 = vmul.f32 %v3577, 1.442695
        %v3595 = vpow.pop %v3594
        %v3596 = vmul.f32 %v3578, 1.442695
        %v3597 = vpow.pop %v3596
        %v3598 = vmul.f32 %v3579, 1.442695
        %v3599 = vpow.pop %v3598
        %v3600 = vmul.f32 %v3580, 1.442695
        %v3601 = vpow.pop %v3600
        %v3602 = vmul.f32 %v3581, 1.442695
        %v3603 = vpow.pop %v3602
        %v3604 = vmul.f32 %v3582, 1.442695
        %v3605 = vpow.pop %v3604
        %v3606 = vmul.f32 %v3583, 1.442695
        %v3607 = vpow.pop %v3606
        %v3608 = vmul.f32 %v3584, 1.442695
        %v3609 = vpow.pop %v3608
        %v3610 = vmul.f32 %v3585, 1.442695
        %v3611 = vpow.pop %v3610
        %v3612 = vmul.f32 %v3586, 1.442695
        %v3613 = vpow.pop %v3612
        %v3614 = vmul.f32 %v3587, 1.442695
        %v3615 = vpow.pop %v3614
        %v3616 = vmul.f32 %v3588, 1.442695
        %v3617 = vpow.pop %v3616
        %v3618 = vmul.f32 %v3589, 1.442695
        %v3619 = vpow.pop %v3618
        %v3620 = vmul.f32 %v3590, 1.442695
        %v3621 = vpow.pop %v3620
        %v3622 = vmul.f32 %v3591, 1.442695
        %v3623 = vpow.pop %v3622
        %v3624 = vadd.f32 %v3593, 1.0
        %v3625 = vadd.f32 %v3595, 1.0
        %v3626 = vadd.f32 %v3597, 1.0
        %v3627 = vadd.f32 %v3599, 1.0
        %v3628 = vadd.f32 %v3601, 1.0
        %v3629 = vadd.f32 %v3603, 1.0
        %v3630 = vadd.f32 %v3605, 1.0
        %v3631 = vadd.f32 %v3607, 1.0
        %v3632 = vadd.f32 %v3609, 1.0
        %v3633 = vadd.f32 %v3611, 1.0
        %v3634 = vadd.f32 %v3613, 1.0
        %v3635 = vadd.f32 %v3615, 1.0
        %v3636 = vadd.f32 %v3617, 1.0
        %v3637 = vadd.f32 %v3619, 1.0
        %v3638 = vadd.f32 %v3621, 1.0
        %v3639 = vadd.f32 %v3623, 1.0
        %v3640 = vrcp.pop %v3624
        %v3641 = vmul.f32 1.0, %v3640
        %v3642 = vrcp.pop %v3625
        %v3643 = vmul.f32 1.0, %v3642
        %v3644 = vrcp.pop %v3626
        %v3645 = vmul.f32 1.0, %v3644
        %v3646 = vrcp.pop %v3627
        %v3647 = vmul.f32 1.0, %v3646
        %v3648 = vrcp.pop %v3628
        %v3649 = vmul.f32 1.0, %v3648
        %v3650 = vrcp.pop %v3629
        %v3651 = vmul.f32 1.0, %v3650
        %v3652 = vrcp.pop %v3630
        %v3653 = vmul.f32 1.0, %v3652
        %v3654 = vrcp.pop %v3631
        %v3655 = vmul.f32 1.0, %v3654
        %v3656 = vrcp.pop %v3632
        %v3657 = vmul.f32 1.0, %v3656
        %v3658 = vrcp.pop %v3633
        %v3659 = vmul.f32 1.0, %v3658
        %v3660 = vrcp.pop %v3634
        %v3661 = vmul.f32 1.0, %v3660
        %v3662 = vrcp.pop %v3635
        %v3663 = vmul.f32 1.0, %v3662
        %v3664 = vrcp.pop %v3636
        %v3665 = vmul.f32 1.0, %v3664
        %v3666 = vrcp.pop %v3637
        %v3667 = vmul.f32 1.0, %v3666
        %v3668 = vrcp.pop %v3638
        %v3669 = vmul.f32 1.0, %v3668
        %v3670 = vrcp.pop %v3639
        %v3671 = vmul.f32 1.0, %v3670
        %v3672 = vmul.f32 %v3529, %v3370
        %v3673 = vmul.f32 %v3531, %v3375
        %v3674 = vmul.f32 %v3533, %v3380
        %v3675 = vmul.f32 %v3535, %v3385
        %v3676 = vmul.f32 %v3537, %v3390
        %v3677 = vmul.f32 %v3539, %v3395
        %v3678 = vmul.f32 %v3541, %v3400
        %v3679 = vmul.f32 %v3543, %v3405
        %v3680 = vmul.f32 %v3545, %v3410
        %v3681 = vmul.f32 %v3547, %v3415
        %v3682 = vmul.f32 %v3549, %v3420
        %v3683 = vmul.f32 %v3551, %v3425
        %v3684 = vmul.f32 %v3553, %v3430
        %v3685 = vmul.f32 %v3555, %v3435
        %v3686 = vmul.f32 %v3557, %v3440
        %v3687 = vmul.f32 %v3559, %v3445
        %v3688 = vadd.f32 %v2999, %v3672
        %v3689 = vadd.f32 %v3004, %v3673
        %v3690 = vadd.f32 %v3009, %v3674
        %v3691 = vadd.f32 %v3014, %v3675
        %v3692 = vadd.f32 %v3019, %v3676
        %v3693 = vadd.f32 %v3024, %v3677
        %v3694 = vadd.f32 %v3029, %v3678
        %v3695 = vadd.f32 %v3034, %v3679
        %v3696 = vadd.f32 %v3039, %v3680
        %v3697 = vadd.f32 %v3044, %v3681
        %v3698 = vadd.f32 %v3049, %v3682
        %v3699 = vadd.f32 %v3054, %v3683
        %v3700 = vadd.f32 %v3059, %v3684
        %v3701 = vadd.f32 %v3064, %v3685
        %v3702 = vadd.f32 %v3069, %v3686
        %v3703 = vadd.f32 %v3074, %v3687
        %v3704 = vtanh.pop %v3688
        %v3705 = vtanh.pop %v3689
        %v3706 = vtanh.pop %v3690
        %v3707 = vtanh.pop %v3691
        %v3708 = vtanh.pop %v3692
        %v3709 = vtanh.pop %v3693
        %v3710 = vtanh.pop %v3694
        %v3711 = vtanh.pop %v3695
        %v3712 = vtanh.pop %v3696
        %v3713 = vtanh.pop %v3697
        %v3714 = vtanh.pop %v3698
        %v3715 = vtanh.pop %v3699
        %v3716 = vtanh.pop %v3700
        %v3717 = vtanh.pop %v3701
        %v3718 = vtanh.pop %v3702
        %v3719 = vtanh.pop %v3703
        %v3720 = vsub.f32 1.0, %v3641
        %v3721 = vsub.f32 1.0, %v3643
        %v3722 = vsub.f32 1.0, %v3645
        %v3723 = vsub.f32 1.0, %v3647
        %v3724 = vsub.f32 1.0, %v3649
        %v3725 = vsub.f32 1.0, %v3651
        %v3726 = vsub.f32 1.0, %v3653
        %v3727 = vsub.f32 1.0, %v3655
        %v3728 = vsub.f32 1.0, %v3657
        %v3729 = vsub.f32 1.0, %v3659
        %v3730 = vsub.f32 1.0, %v3661
        %v3731 = vsub.f32 1.0, %v3663
        %v3732 = vsub.f32 1.0, %v3665
        %v3733 = vsub.f32 1.0, %v3667
        %v3734 = vsub.f32 1.0, %v3669
        %v3735 = vsub.f32 1.0, %v3671
        %v3736 = vmul.f32 %v3720, %v3704
        %v3737 = vmul.f32 %v3721, %v3705
        %v3738 = vmul.f32 %v3722, %v3706
        %v3739 = vmul.f32 %v3723, %v3707
        %v3740 = vmul.f32 %v3724, %v3708
        %v3741 = vmul.f32 %v3725, %v3709
        %v3742 = vmul.f32 %v3726, %v3710
        %v3743 = vmul.f32 %v3727, %v3711
        %v3744 = vmul.f32 %v3728, %v3712
        %v3745 = vmul.f32 %v3729, %v3713
        %v3746 = vmul.f32 %v3730, %v3714
        %v3747 = vmul.f32 %v3731, %v3715
        %v3748 = vmul.f32 %v3732, %v3716
        %v3749 = vmul.f32 %v3733, %v3717
        %v3750 = vmul.f32 %v3734, %v3718
        %v3751 = vmul.f32 %v3735, %v3719
        %v3752 = vmul.f32 %v3641, %v484
        %v3753 = vmul.f32 %v3643, %v485
        %v3754 = vmul.f32 %v3645, %v486
        %v3755 = vmul.f32 %v3647, %v487
        %v3756 = vmul.f32 %v3649, %v488
        %v3757 = vmul.f32 %v3651, %v489
        %v3758 = vmul.f32 %v3653, %v490
        %v3759 = vmul.f32 %v3655, %v491
        %v3760 = vmul.f32 %v3657, %v492
        %v3761 = vmul.f32 %v3659, %v493
        %v3762 = vmul.f32 %v3661, %v494
        %v3763 = vmul.f32 %v3663, %v495
        %v3764 = vmul.f32 %v3665, %v496
        %v3765 = vmul.f32 %v3667, %v497
        %v3766 = vmul.f32 %v3669, %v498
        %v3767 = vmul.f32 %v3671, %v499
        %v3768 = vadd.f32 %v3736, %v3752
        %v3769 = vadd.f32 %v3737, %v3753
        %v3770 = vadd.f32 %v3738, %v3754
        %v3771 = vadd.f32 %v3739, %v3755
        %v3772 = vadd.f32 %v3740, %v3756
        %v3773 = vadd.f32 %v3741, %v3757
        %v3774 = vadd.f32 %v3742, %v3758
        %v3775 = vadd.f32 %v3743, %v3759
        %v3776 = vadd.f32 %v3744, %v3760
        %v3777 = vadd.f32 %v3745, %v3761
        %v3778 = vadd.f32 %v3746, %v3762
        %v3779 = vadd.f32 %v3747, %v3763
        %v3780 = vadd.f32 %v3748, %v3764
        %v3781 = vadd.f32 %v3749, %v3765
        %v3782 = vadd.f32 %v3750, %v3766
        %v3783 = vadd.f32 %v3751, %v3767
        %3784 = vst [vmem:[%s453] sm:$0xff] %v3768
        %3785 = vst [vmem:[%s453 + $0x8] sm:$0xff] %v3769
        %3786 = vst [vmem:[%s453 + $0x10] sm:$0xff] %v3770
        %3787 = vst [vmem:[%s453 + $0x18] sm:$0xff] %v3771
        %3788 = vst [vmem:[%s453 + $0x20] sm:$0xff] %v3772
        %3789 = vst [vmem:[%s453 + $0x28] sm:$0xff] %v3773
        %3790 = vst [vmem:[%s453 + $0x30] sm:$0xff] %v3774
        %3791 = vst [vmem:[%s453 + $0x38] sm:$0xff] %v3775
        %3792 = vst [vmem:[%s453 + $0x40] sm:$0xff] %v3776
        %3793 = vst [vmem:[%s453 + $0x48] sm:$0xff] %v3777
        %3794 = vst [vmem:[%s453 + $0x50] sm:$0xff] %v3778
        %3795 = vst [vmem:[%s453 + $0x58] sm:$0xff] %v3779
        %3796 = vst [vmem:[%s453 + $0x60] sm:$0xff] %v3780
        %3797 = vst [vmem:[%s453 + $0x68] sm:$0xff] %v3781
        %3798 = vst [vmem:[%s453 + $0x70] sm:$0xff] %v3782
        %3799 = vst [vmem:[%s453 + $0x78] sm:$0xff] %v3783
        %s3800 = sand.u32 %s262, 1
        %s3801 = scalar_lea.sflag [#allocation4], %s3800
        %s3802 = sand.u32 %s262, 1
        %s3803 = smul.addr %s3802, 128
        %s3804 = scalar_lea.vmem [#allocation10], %s3803
        // Predicated region
        $region77: #{tpu_custom_call.1} parent=59 // pred_check
          %p3805 = pneg %p272
        $region78: #{tpu_custom_call.1} parent=59 // pred_check_branch
          %3807 = sbr.rel (%p3805) target = $region80
        $region79: #{tpu_custom_call.1} parent=59 // pred_region
          %s3808 = smul.u32 16, %s29
          %s3810 = ssub.s32 2048, 2048
          %3811 = vsyncadd %s3801, %s3810
          %s3812 = smul.addr %s3808, 128
          %s3813 = scalar_lea.hbm %s10, %s3812
          %s3814 = sshll.u32 %s3804, 4
          %s3815 = int_to_ptr.vmem [resolvable:$true] %s3814
          %3820 = dma.vmem_to_hbm [thread:$0]  %s3815, 2048, %s3813, %s3801, 128, 128, 8
        $region80: #{tpu_custom_call.1} parent=59 // pred_fallthru
          _
      $region60: #{tpu_custom_call.1} parent=5 // pred_fallthru
        _
      %p3821 = scmp.le.s32.totalorder 2, %s24
      // Predicated region
      $region81: #{tpu_custom_call.1} parent=5 // pred_check
        %p3822 = pneg %p3821
      $region82: #{tpu_custom_call.1} parent=5 // pred_check_branch
        %3824 = sbr.rel (%p3822) target = $region84
      $region83: #{tpu_custom_call.1} parent=5 // pred_region
        %s3825 = ssub.s32 %s24, 2
        // Predicated region
        $region85: #{tpu_custom_call.1} parent=83 // pred_check
          %p3826 = pneg %p278
        $region86: #{tpu_custom_call.1} parent=83 // pred_check_branch
          %3828 = sbr.rel (%p3826) target = $region88
        $region87: #{tpu_custom_call.1} parent=83 // pred_region
          %s3829 = sand.u32 %s263, 1
          %s3830 = scalar_lea.sflag [#allocation4], %s3829
          %s3831 = sand.u32 %s263, 1
          %s3832 = smul.addr %s3831, 128
          %s3833 = scalar_lea.vmem [#allocation10], %s3832
          %3834 = dma.done %s3830, 2048
        $region88: #{tpu_custom_call.1} parent=83 // pred_fallthru
          _
      $region84: #{tpu_custom_call.1} parent=5 // pred_fallthru
        _
    $region6: #{tpu_custom_call.1} parent=1 // loop_footer
      %s28 = sadd.s32 1, %s24
    $region7: #{tpu_custom_call.1} parent=1 // loop_footer_branch
      %23 = sbr.rel target = $region3
    $region8: #{tpu_custom_call.1} parent=1 // loop_exit
      _
    %3835 = vsyncpa [#allocation3], 1
    %s3836 = scalar_lea.sflag [#allocation3], 1
    %3837 = vsyncpa %s3836, 1
    %3838 = vsyncpa [#allocation6], 1
    %3839 = vsyncpa [#allocation9], 1
    %3840 = vsyncpa [#allocation4], 1
    %s3841 = scalar_lea.sflag [#allocation4], 1
    %3842 = vsyncpa %s3841, 1

</llo_original>
